<compile_context>
chip_gen: v6e
topology: v6e:2x2x1
jax: 0.10.0
libtpu: 0.0.40
codegen_flags: <defaults>
</compile_context>

<pallas_src>
import jax
import jax.numpy as jnp
import numpy as np
from jax.experimental import pallas as pl
from jax.experimental.pallas import tpu as pltpu


def _gated_prop_kernel(m_ref, xio_ref, xc_ref, w_ref, b_ref, out_ref):
    Bt, N, H = xc_ref.shape                    # batch tile, n_node, hidden
    NE = xio_ref.shape[2]                      # n_node * n_edge
    H2, H3 = 2 * H, 3 * H

    # --- per-source gate projections, hoisted in front of the adjacency
    # matmul via associativity: (M @ X) @ W == M @ (X @ W).
    # One (Bt*NE, H) @ (H, 3H) matmul per source (large M, batch-shared W).
    x_in = xio_ref[0].reshape(Bt * NE, H).astype(jnp.float32)
    x_out = xio_ref[1].reshape(Bt * NE, H).astype(jnp.float32)
    y_in = jnp.dot(x_in, w_ref[0], preferred_element_type=jnp.float32)
    y_out = jnp.dot(x_out, w_ref[1], preferred_element_type=jnp.float32)

    # --- adjacency: ONE batched matmul against the *unsplit* matrix with
    # K = 2*NE.  Rows [0:NE] of y hold the x_in projection (multiplied by
    # matrix[:, :, :NE]), rows [NE:2NE] the x_out projection.
    y = jnp.concatenate(
        [y_in.reshape(Bt, NE, H3), y_out.reshape(Bt, NE, H3)], axis=1)
    contrib = jnp.einsum('bnk,bkh->bnh',
                         m_ref[...].astype(jnp.float32), y,
                         preferred_element_type=jnp.float32)   # (Bt, N, 3H)
    contrib = contrib.reshape(Bt * N, H3)

    # --- gates: batch stacked into the MXU M dimension (weights shared).
    x_c = xc_ref[...].reshape(Bt * N, H).astype(jnp.float32)
    w_c = w_ref[2]                       # (H, 3H) = [Wz_c.T | Wr_c.T | Wt_c.T]
    b = b_ref[...]                       # (1, 3H) = [bz | br | bt]

    zr = jax.nn.sigmoid(
        contrib[:, :H2]
        + jnp.dot(x_c, w_c[:, :H2], preferred_element_type=jnp.float32)
        + b[:, :H2])                                           # (Bt*N, 2H)
    z = zr[:, :H]
    r = zr[:, H:]

    h_hat = jnp.tanh(
        contrib[:, H2:]
        + jnp.dot(r * x_c, w_c[:, H2:], preferred_element_type=jnp.float32)
        + b[:, H2:])                                           # (Bt*N, H)

    out = (1.0 - z) * x_c + z * h_hat                          # (Bt*N, H)
    # TODO(synk): a lane-dense (Bt, N*H) / (H, Bt*N) output layout would
    # replace the 16-lane masked stores, but the sublane->lane relayout it
    # needs is not reliably lowered by Mosaic at this shape; the whole output
    # tile is only Bt*N*H*4 bytes, so the masked-store epilogue is negligible.
    out_ref[...] = out.reshape(Bt, N, H).astype(out_ref.dtype)


def _default_batch_tile(batch):
    """Single grid step on 1-TensorCore chips (v5e/v6e); split the batch in
    two across the grid on 2-TensorCore (v7x-class) chips."""
    try:
        kind = jax.devices()[0].device_kind.lower()
    except Exception:
        kind = ""
    two_tensorcores = "7" in kind          # e.g. "tpu7x"
    if two_tensorcores and batch % 2 == 0 and batch >= 2:
        return batch // 2
    # NOTE: an odd batch on a 2-TC chip falls back to one grid step (one core
    # idles) — pass batch_tile explicitly if that matters.
    return batch


def gated_propagation(x_in, x_out, x_curt, matrix, params, *, hidden_dim,
                      n_node, n_edge, batch_tile=None):
    B = x_curt.shape[0]
    N, H = n_node, hidden_dim
    NE = n_node * n_edge

    if batch_tile is None:
        batch_tile = _default_batch_tile(B)
    assert B % batch_tile == 0, "batch must be divisible by batch_tile"
    Bt = batch_tile
    G = B // Bt

    wz, bz, wr, br, wt, bt = params           # each W: (H, 3H), b: (H,)

    # Per-source fused gate weights: w_all[s] = [Wz_s.T | Wr_s.T | Wt_s.T],
    # where s indexes the concat source (a_in, a_out, x_curt) of the
    # reference's 3H-wide linear inputs.  One (H, 3H) chunk per source.
    w_stack = jnp.stack([wz, wr, wt], axis=0)          # (gate, out, 3H_in)
    w_all = (w_stack.reshape(3, H, 3, H)               # (gate, out, src, in)
             .transpose(2, 3, 0, 1)                    # (src, in, gate, out)
             .reshape(3, H, 3 * H)).astype(jnp.float32)
    b_all = jnp.concatenate([bz, br, bt]).reshape(1, 3 * H).astype(jnp.float32)

    # Pack x_in / x_out into one operand (one DMA instead of two).  bf16 is an
    # HBM streaming format only; compute stays f32.  The adjacency matrix is
    # assumed to be 0/1 (as produced by the bAbI graph construction) and is
    # therefore exact in bf16 — pass f32 in `matrix` and drop the cast if a
    # weighted adjacency is ever used.
    x_io = jnp.stack([x_in, x_out], axis=0).astype(jnp.bfloat16)  # (2,B,NE,H)
    matrix16 = matrix.astype(jnp.bfloat16)                        # (B,N,2NE)
    x_curt32 = x_curt.astype(jnp.float32)                         # (B,N,H)

    out = pl.pallas_call(
        _gated_prop_kernel,
        out_shape=jax.ShapeDtypeStruct((B, N, H), x_curt.dtype),
        grid_spec=pltpu.PrefetchScalarGridSpec(
            num_scalar_prefetch=0,
            grid=(G,),
            in_specs=[
                pl.BlockSpec((Bt, N, 2 * NE), lambda g: (g, 0, 0)),    # matrix
                pl.BlockSpec((2, Bt, NE, H), lambda g: (0, g, 0, 0)),  # x_in/x_out
                pl.BlockSpec((Bt, N, H), lambda g: (g, 0, 0)),         # x_curt
                pl.BlockSpec((3, H, 3 * H), lambda g: (0, 0, 0)),      # fused W
                pl.BlockSpec((1, 3 * H), lambda g: (0, 0)),            # fused b
            ],
            out_specs=pl.BlockSpec((Bt, N, H), lambda g: (g, 0, 0)),
        ),
        compiler_params=pltpu.CompilerParams(
            dimension_semantics=("parallel",)),
    )(matrix16, x_io, x_curt32, w_all, b_all)

    return out


def _reference(x_in, x_out, x_curt, matrix, params, *, n_node, n_edge):
    """Pure-JAX f32 reference matching the PyTorch forward."""
    wz, bz, wr, br, wt, bt = params
    NE = n_node * n_edge
    m_in = matrix[:, :, :NE].astype(jnp.float32)
    m_out = matrix[:, :, NE:].astype(jnp.float32)
    a_in = jnp.einsum('bnk,bkh->bnh', m_in, x_in)
    a_out = jnp.einsum('bnk,bkh->bnh', m_out, x_out)
    a = jnp.concatenate((a_in, a_out, x_curt), axis=2)
    z = jax.nn.sigmoid(a @ wz.T + bz)
    r = jax.nn.sigmoid(a @ wr.T + br)
    joint = jnp.concatenate((a_in, a_out, r * x_curt), axis=2)
    h_hat = jnp.tanh(joint @ wt.T + bt)
    return (1.0 - z) * x_curt + z * h_hat


if __name__ == "__main__":
    hidden_dim = 16
    n_node = 8
    n_edge = 4
    B = 16
    NE = n_node * n_edge
    H = hidden_dim

    key = jax.random.PRNGKey(0)
    keys = jax.random.split(key, 10)

    x_in = jax.random.normal(keys[0], (B, NE, H), jnp.float32)
    x_out = jax.random.normal(keys[1], (B, NE, H), jnp.float32)
    x_curt = jax.random.normal(keys[2], (B, n_node, H), jnp.float32)
    # sparse 0/1 adjacency-like matrix (mirrors `.float()` in torch)
    matrix = (jax.random.uniform(keys[3], (B, n_node, 2 * NE)) < 0.2
              ).astype(jnp.float32)

    # deterministic nn.Linear-style params: W (H, 3H), b (H,)
    bound = 1.0 / np.sqrt(3 * H)
    def lin_init(kw, kb):
        w = jax.random.uniform(kw, (H, 3 * H), jnp.float32, -bound, bound)
        b = jax.random.uniform(kb, (H,), jnp.float32, -bound, bound)
        return w, b

    wr, br = lin_init(keys[4], keys[5])
    wz, bz = lin_init(keys[6], keys[7])
    wt, bt = lin_init(keys[8], keys[9])
    params = (wz, bz, wr, br, wt, bt)

    out = gated_propagation(x_in, x_out, x_curt, matrix, params,
                            hidden_dim=H, n_node=n_node, n_edge=n_edge)
    out = jax.block_until_ready(out)

    ref = _reference(x_in, x_out, x_curt, matrix, params,
                     n_node=n_node, n_edge=n_edge)
    # x_in / x_out are streamed in bf16 (all compute/accumulation in f32), so
    # a small rounding difference vs. the pure-f32 reference is expected.
    np.testing.assert_allclose(np.asarray(out), np.asarray(ref),
                               rtol=2e-2, atol=2e-2)
    print("KERNEL_OK")
</pallas_src>

<mosaic_0001>
module attributes {stable_mosaic.version = 11 : i64} {
  func.func @_gated_prop_kernel(%arg0: i32, %arg1: memref<16x8x64xbf16, #tpu.memory_space<vmem>>, %arg2: memref<2x16x32x16xbf16, #tpu.memory_space<vmem>>, %arg3: memref<16x8x16xf32, #tpu.memory_space<vmem>>, %arg4: memref<3x16x48xf32, #tpu.memory_space<vmem>>, %arg5: memref<1x48xf32, #tpu.memory_space<vmem>>, %arg6: memref<16x8x16xf32, #tpu.memory_space<vmem>>) attributes {dimension_semantics = [#tpu.dimension_semantics<parallel>], iteration_bounds = array<i64: 1>, scalar_prefetch = 0 : i64, scratch_operands = 0 : i64, tpu.core_type = #tpu.core_type<tc>, window_params = [{transform_indices = @transform_0, window_bounds = array<i64: 16, 8, 64>}, {transform_indices = @transform_1, window_bounds = array<i64: 2, 16, 32, 16>}, {transform_indices = @transform_2, window_bounds = array<i64: 16, 8, 16>}, {pipeline_mode = #tpu.pipeline_mode<synchronous>, transform_indices = @transform_3, window_bounds = array<i64: 3, 16, 48>}, {pipeline_mode = #tpu.pipeline_mode<synchronous>, transform_indices = @transform_4, window_bounds = array<i64: 1, 48>}, {transform_indices = @transform_5, window_bounds = array<i64: 16, 8, 16>}]} {
    %c0 = arith.constant 0 : index
    %c0_0 = arith.constant 0 : index
    %c0_1 = arith.constant 0 : index
    %c0_2 = arith.constant 0 : index
    %0 = vector.load %arg2[%c0, %c0_0, %c0_1, %c0_2] : memref<2x16x32x16xbf16, #tpu.memory_space<vmem>>, vector<1x16x32x16xbf16>
    %1 = vector.shape_cast %0 : vector<1x16x32x16xbf16> to vector<16x32x16xbf16>
    %2 = vector.shape_cast %1 : vector<16x32x16xbf16> to vector<512x16xbf16>
    %3 = arith.extf %2 : vector<512x16xbf16> to vector<512x16xf32>
    %c1 = arith.constant 1 : index
    %c0_3 = arith.constant 0 : index
    %c0_4 = arith.constant 0 : index
    %c0_5 = arith.constant 0 : index
    %4 = vector.load %arg2[%c1, %c0_3, %c0_4, %c0_5] : memref<2x16x32x16xbf16, #tpu.memory_space<vmem>>, vector<1x16x32x16xbf16>
    %5 = vector.shape_cast %4 : vector<1x16x32x16xbf16> to vector<16x32x16xbf16>
    %6 = vector.shape_cast %5 : vector<16x32x16xbf16> to vector<512x16xbf16>
    %7 = arith.extf %6 : vector<512x16xbf16> to vector<512x16xf32>
    %c0_6 = arith.constant 0 : index
    %c0_7 = arith.constant 0 : index
    %c0_8 = arith.constant 0 : index
    %8 = vector.load %arg4[%c0_6, %c0_7, %c0_8] : memref<3x16x48xf32, #tpu.memory_space<vmem>>, vector<1x16x48xf32>
    %9 = vector.shape_cast %8 : vector<1x16x48xf32> to vector<16x48xf32>
    %cst = arith.constant dense<0.000000e+00> : vector<512x48xf32>
    %10 = tpu.matmul %3, %9, %cst {dimension_numbers = #tpu.dot_dimension_numbers<[1], [0], [0], [1], [0, 0, 1, 1], [], []>} : vector<512x16xf32>, vector<16x48xf32>, vector<512x48xf32> -> vector<512x48xf32>
    %c1_9 = arith.constant 1 : index
    %c0_10 = arith.constant 0 : index
    %c0_11 = arith.constant 0 : index
    %11 = vector.load %arg4[%c1_9, %c0_10, %c0_11] : memref<3x16x48xf32, #tpu.memory_space<vmem>>, vector<1x16x48xf32>
    %12 = vector.shape_cast %11 : vector<1x16x48xf32> to vector<16x48xf32>
    %cst_12 = arith.constant dense<0.000000e+00> : vector<512x48xf32>
    %13 = tpu.matmul %7, %12, %cst_12 {dimension_numbers = #tpu.dot_dimension_numbers<[1], [0], [0], [1], [0, 0, 1, 1], [], []>} : vector<512x16xf32>, vector<16x48xf32>, vector<512x48xf32> -> vector<512x48xf32>
    %14 = vector.shape_cast %10 : vector<512x48xf32> to vector<16x32x48xf32>
    %15 = vector.shape_cast %13 : vector<512x48xf32> to vector<16x32x48xf32>
    %16 = tpu.concatenate %14, %15 in 1 : vector<16x32x48xf32>, vector<16x32x48xf32> -> vector<16x64x48xf32>
    %c0_13 = arith.constant 0 : index
    %c0_14 = arith.constant 0 : index
    %c0_15 = arith.constant 0 : index
    %17 = vector.load %arg1[%c0_13, %c0_14, %c0_15] : memref<16x8x64xbf16, #tpu.memory_space<vmem>>, vector<16x8x64xbf16>
    %18 = arith.extf %17 : vector<16x8x64xbf16> to vector<16x8x64xf32>
    "tpu.trace_start"() <{level = 10 : i32, message = "bnk,bkh->bnh"}> : () -> ()
    %cst_16 = arith.constant dense<0.000000e+00> : vector<16x8x48xf32>
    %19 = tpu.matmul %18, %16, %cst_16 {dimension_numbers = #tpu.dot_dimension_numbers<[2], [1], [1], [2], [0, 0, 0, 1, 1, 2], [0], [0]>} : vector<16x8x64xf32>, vector<16x64x48xf32>, vector<16x8x48xf32> -> vector<16x8x48xf32>
    "tpu.trace_stop"() : () -> ()
    %20 = vector.shape_cast %19 : vector<16x8x48xf32> to vector<128x48xf32>
    %c0_17 = arith.constant 0 : index
    %c0_18 = arith.constant 0 : index
    %c0_19 = arith.constant 0 : index
    %21 = vector.load %arg3[%c0_17, %c0_18, %c0_19] : memref<16x8x16xf32, #tpu.memory_space<vmem>>, vector<16x8x16xf32>
    %22 = vector.shape_cast %21 : vector<16x8x16xf32> to vector<128x16xf32>
    %c2 = arith.constant 2 : index
    %c0_20 = arith.constant 0 : index
    %c0_21 = arith.constant 0 : index
    %23 = vector.load %arg4[%c2, %c0_20, %c0_21] : memref<3x16x48xf32, #tpu.memory_space<vmem>>, vector<1x16x48xf32>
    %24 = vector.shape_cast %23 : vector<1x16x48xf32> to vector<16x48xf32>
    %c0_22 = arith.constant 0 : index
    %c0_23 = arith.constant 0 : index
    %25 = vector.load %arg5[%c0_22, %c0_23] : memref<1x48xf32, #tpu.memory_space<vmem>>, vector<1x48xf32>
    %26 = vector.extract_strided_slice %20 {offsets = [0, 0], sizes = [128, 32], strides = [1, 1]} : vector<128x48xf32> to vector<128x32xf32>
    %27 = vector.extract_strided_slice %24 {offsets = [0, 0], sizes = [16, 32], strides = [1, 1]} : vector<16x48xf32> to vector<16x32xf32>
    %cst_24 = arith.constant dense<0.000000e+00> : vector<128x32xf32>
    %28 = tpu.matmul %22, %27, %cst_24 {dimension_numbers = #tpu.dot_dimension_numbers<[1], [0], [0], [1], [0, 0, 1, 1], [], []>} : vector<128x16xf32>, vector<16x32xf32>, vector<128x32xf32> -> vector<128x32xf32>
    %29 = arith.addf %26, %28 : vector<128x32xf32>
    %30 = vector.extract_strided_slice %25 {offsets = [0, 0], sizes = [1, 32], strides = [1, 1]} : vector<1x48xf32> to vector<1x32xf32>
    %31 = vector.broadcast %30 : vector<1x32xf32> to vector<128x32xf32>
    %32 = arith.addf %29, %31 : vector<128x32xf32>
    %33 = arith.negf %32 : vector<128x32xf32>
    %34 = math.exp %33 : vector<128x32xf32>
    %cst_25 = arith.constant 1.000000e+00 : f32
    %35 = vector.broadcast %cst_25 : f32 to vector<128x32xf32>
    %36 = arith.addf %35, %34 : vector<128x32xf32>
    %37 = arith.divf %35, %36 : vector<128x32xf32>
    %38 = vector.extract_strided_slice %37 {offsets = [0, 0], sizes = [128, 16], strides = [1, 1]} : vector<128x32xf32> to vector<128x16xf32>
    %39 = vector.extract_strided_slice %37 {offsets = [0, 16], sizes = [128, 16], strides = [1, 1]} : vector<128x32xf32> to vector<128x16xf32>
    %40 = vector.extract_strided_slice %20 {offsets = [0, 32], sizes = [128, 16], strides = [1, 1]} : vector<128x48xf32> to vector<128x16xf32>
    %41 = arith.mulf %39, %22 : vector<128x16xf32>
    %42 = vector.extract_strided_slice %24 {offsets = [0, 32], sizes = [16, 16], strides = [1, 1]} : vector<16x48xf32> to vector<16x16xf32>
    %cst_26 = arith.constant dense<0.000000e+00> : vector<128x16xf32>
    %43 = tpu.matmul %41, %42, %cst_26 {dimension_numbers = #tpu.dot_dimension_numbers<[1], [0], [0], [1], [0, 0, 1, 1], [], []>} : vector<128x16xf32>, vector<16x16xf32>, vector<128x16xf32> -> vector<128x16xf32>
    %44 = arith.addf %40, %43 : vector<128x16xf32>
    %45 = vector.extract_strided_slice %25 {offsets = [0, 32], sizes = [1, 16], strides = [1, 1]} : vector<1x48xf32> to vector<1x16xf32>
    %46 = vector.broadcast %45 : vector<1x16xf32> to vector<128x16xf32>
    %47 = arith.addf %44, %46 : vector<128x16xf32>
    %48 = math.tanh %47 : vector<128x16xf32>
    %cst_27 = arith.constant 1.000000e+00 : f32
    %49 = vector.broadcast %cst_27 : f32 to vector<128x16xf32>
    %50 = arith.subf %49, %38 : vector<128x16xf32>
    %51 = arith.mulf %50, %22 : vector<128x16xf32>
    %52 = arith.mulf %38, %48 : vector<128x16xf32>
    %53 = arith.addf %51, %52 : vector<128x16xf32>
    %54 = vector.shape_cast %53 : vector<128x16xf32> to vector<16x8x16xf32>
    %c0_28 = arith.constant 0 : index
    %c0_29 = arith.constant 0 : index
    %c0_30 = arith.constant 0 : index
    %55 = vector.load %arg6[%c0_28, %c0_29, %c0_30] : memref<16x8x16xf32, #tpu.memory_space<vmem>>, vector<16x8x16xf32>
    tpu.vector_store %arg6[%c0_28, %c0_29, %c0_30], %54 {strides = array<i32>} : memref<16x8x16xf32, #tpu.memory_space<vmem>>, vector<16x8x16xf32>,
    return
  }
  func.func @transform_0(%arg0: i32) -> (i32, i32, i32) {
    %c0_i32 = arith.constant 0 : i32
    %c0_i32_0 = arith.constant 0 : i32
    %c0_i32_1 = arith.constant 0 : i32
    return %arg0, %c0_i32, %c0_i32_0 : i32, i32, i32
  }
  func.func @transform_1(%arg0: i32) -> (i32, i32, i32, i32) {
    %c0_i32 = arith.constant 0 : i32
    %c0_i32_0 = arith.constant 0 : i32
    %c0_i32_1 = arith.constant 0 : i32
    %c0_i32_2 = arith.constant 0 : i32
    return %c0_i32, %arg0, %c0_i32_0, %c0_i32_1 : i32, i32, i32, i32
  }
  func.func @transform_2(%arg0: i32) -> (i32, i32, i32) {
    %c0_i32 = arith.constant 0 : i32
    %c0_i32_0 = arith.constant 0 : i32
    %c0_i32_1 = arith.constant 0 : i32
    return %arg0, %c0_i32, %c0_i32_0 : i32, i32, i32
  }
  func.func @transform_3(%arg0: i32) -> (i32, i32, i32) {
    %c0_i32 = arith.constant 0 : i32
    %c0_i32_0 = arith.constant 0 : i32
    %c0_i32_1 = arith.constant 0 : i32
    %c0_i32_2 = arith.constant 0 : i32
    return %c0_i32, %c0_i32_0, %c0_i32_1 : i32, i32, i32
  }
  func.func @transform_4(%arg0: i32) -> (i32, i32) {
    %c0_i32 = arith.constant 0 : i32
    %c0_i32_0 = arith.constant 0 : i32
    %c0_i32_1 = arith.constant 0 : i32
    return %c0_i32, %c0_i32_0 : i32, i32
  }
  func.func @transform_5(%arg0: i32) -> (i32, i32, i32) {
    %c0_i32 = arith.constant 0 : i32
    %c0_i32_0 = arith.constant 0 : i32
    %c0_i32_1 = arith.constant 0 : i32
    return %arg0, %c0_i32, %c0_i32_0 : i32, i32, i32
  }
}

</mosaic_0001>

<llo_original>
// kernel: tpu_custom_call.1
$region0: #{tpu_custom_call.1}
  #allocation0 [shape = 'u32[]', space=smem, size = 0x4, offset = 0x4, fixed_abs, tag = 'smem constant byte address 0x4 - core index']
  #allocation1 [shape = 'u32[144,128]{1,0:T(1,128)}', space=vmem, size = 0x12000, scoped, tag = 'internal scratch']
  %s0 = inlined_call_operand.vmem [shape: bf16[16,8,64], index: 0, kind: input, shape index: {}]
  %s1 = inlined_call_operand.vmem [shape: bf16[2,16,32,16], index: 1, kind: input, shape index: {}]
  %s2 = inlined_call_operand.vmem [shape: f32[16,8,16], index: 2, kind: input, shape index: {}]
  %s3 = inlined_call_operand.vmem [shape: f32[3,16,48], index: 3, kind: input, shape index: {}]
  %s4 = inlined_call_operand.vmem [shape: f32[1,48], index: 4, kind: input, shape index: {}]
  %s5 = inlined_call_operand.hbm [shape: f32[16,8,16], index: 5, kind: output, shape index: {}]
  %s6 = sld [smem:[#allocation0]]
  $region30: #{tpu_custom_call.1} parent=0
    _
  %s8 = ssub.s32 1, %s6
  %s9 = scalar_select 0, %s8, %s6
  $region1: #{tpu_custom_call.1} parent=0
    #allocation2 [shape = 'u8[65536]{0}', space=vmem, size = 0x10000, scoped, tag = 'output window, operand 0, single buffered']
    #allocation3 [shape = 's32[1]{0}', space=sflag, size = 0x4, scoped, tag = 'scoped memory for tpu_custom_call.1']
    %10 = vsyncpa [#allocation3], 0
    // Predicated region
    $region2: #{tpu_custom_call.1} parent=1 // pred_check
      _
    $region3: #{tpu_custom_call.1} parent=1 // pred_check_branch
      %12 = sbr.rel (0) target = $region5
    $region4: #{tpu_custom_call.1} parent=1 // pred_region
      _
    $region5: #{tpu_custom_call.1} parent=1 // pred_fallthru
      _
    // Predicated region
    $region6: #{tpu_custom_call.1} parent=1 // pred_check
      _
    $region7: #{tpu_custom_call.1} parent=1 // pred_check_branch
      %14 = sbr.rel (0) target = $region9
    $region8: #{tpu_custom_call.1} parent=1 // pred_region
      _
    $region9: #{tpu_custom_call.1} parent=1 // pred_fallthru
      _
    // Predicated region
    $region10: #{tpu_custom_call.1} parent=1 // pred_check
      _
    $region11: #{tpu_custom_call.1} parent=1 // pred_check_branch
      %16 = sbr.rel (0) target = $region13
    $region12: #{tpu_custom_call.1} parent=1 // pred_region
      _
    $region13: #{tpu_custom_call.1} parent=1 // pred_fallthru
      _
    // Predicated region
    $region14: #{tpu_custom_call.1} parent=1 // pred_check
      _
    $region15: #{tpu_custom_call.1} parent=1 // pred_check_branch
      %18 = sbr.rel (0) target = $region17
    $region16: #{tpu_custom_call.1} parent=1 // pred_region
      _
    $region17: #{tpu_custom_call.1} parent=1 // pred_fallthru
      _
    // Predicated region
    $region18: #{tpu_custom_call.1} parent=1 // pred_check
      _
    $region19: #{tpu_custom_call.1} parent=1 // pred_check_branch
      %20 = sbr.rel (0) target = $region21
    $region20: #{tpu_custom_call.1} parent=1 // pred_region
      _
    $region21: #{tpu_custom_call.1} parent=1 // pred_fallthru
      _
    %v21 = vld [vmem:[%s1] sm:$0xf]
    %v22 = vld [vmem:[%s1 + $0x4] sm:$0xf]
    %v23 = vld [vmem:[%s1 + $0x8] sm:$0xf]
    %v24 = vld [vmem:[%s1 + $0xc] sm:$0xf]
    %v25 = vld [vmem:[%s1 + $0x10] sm:$0xf]
    %v26 = vld [vmem:[%s1 + $0x14] sm:$0xf]
    %v27 = vld [vmem:[%s1 + $0x18] sm:$0xf]
    %v28 = vld [vmem:[%s1 + $0x1c] sm:$0xf]
    %v29 = vld [vmem:[%s1 + $0x20] sm:$0xf]
    %v30 = vld [vmem:[%s1 + $0x24] sm:$0xf]
    %v31 = vld [vmem:[%s1 + $0x28] sm:$0xf]
    %v32 = vld [vmem:[%s1 + $0x2c] sm:$0xf]
    %v33 = vld [vmem:[%s1 + $0x30] sm:$0xf]
    %v34 = vld [vmem:[%s1 + $0x34] sm:$0xf]
    %v35 = vld [vmem:[%s1 + $0x38] sm:$0xf]
    %v36 = vld [vmem:[%s1 + $0x3c] sm:$0xf]
    %v37 = vld [vmem:[%s1 + $0x40] sm:$0xf]
    %v38 = vld [vmem:[%s1 + $0x44] sm:$0xf]
    %v39 = vld [vmem:[%s1 + $0x48] sm:$0xf]
    %v40 = vld [vmem:[%s1 + $0x4c] sm:$0xf]
    %v41 = vld [vmem:[%s1 + $0x50] sm:$0xf]
    %v42 = vld [vmem:[%s1 + $0x54] sm:$0xf]
    %v43 = vld [vmem:[%s1 + $0x58] sm:$0xf]
    %v44 = vld [vmem:[%s1 + $0x5c] sm:$0xf]
    %v45 = vld [vmem:[%s1 + $0x60] sm:$0xf]
    %v46 = vld [vmem:[%s1 + $0x64] sm:$0xf]
    %v47 = vld [vmem:[%s1 + $0x68] sm:$0xf]
    %v48 = vld [vmem:[%s1 + $0x6c] sm:$0xf]
    %v49 = vld [vmem:[%s1 + $0x70] sm:$0xf]
    %v50 = vld [vmem:[%s1 + $0x74] sm:$0xf]
    %v51 = vld [vmem:[%s1 + $0x78] sm:$0xf]
    %v52 = vld [vmem:[%s1 + $0x7c] sm:$0xf]
    %v53 = vld [vmem:[%s1 + $0x80] sm:$0xf]
    %v54 = vld [vmem:[%s1 + $0x84] sm:$0xf]
    %v55 = vld [vmem:[%s1 + $0x88] sm:$0xf]
    %v56 = vld [vmem:[%s1 + $0x8c] sm:$0xf]
    %v57 = vld [vmem:[%s1 + $0x90] sm:$0xf]
    %v58 = vld [vmem:[%s1 + $0x94] sm:$0xf]
    %v59 = vld [vmem:[%s1 + $0x98] sm:$0xf]
    %v60 = vld [vmem:[%s1 + $0x9c] sm:$0xf]
    %v61 = vld [vmem:[%s1 + $0xa0] sm:$0xf]
    %v62 = vld [vmem:[%s1 + $0xa4] sm:$0xf]
    %v63 = vld [vmem:[%s1 + $0xa8] sm:$0xf]
    %v64 = vld [vmem:[%s1 + $0xac] sm:$0xf]
    %v65 = vld [vmem:[%s1 + $0xb0] sm:$0xf]
    %v66 = vld [vmem:[%s1 + $0xb4] sm:$0xf]
    %v67 = vld [vmem:[%s1 + $0xb8] sm:$0xf]
    %v68 = vld [vmem:[%s1 + $0xbc] sm:$0xf]
    %v69 = vld [vmem:[%s1 + $0xc0] sm:$0xf]
    %v70 = vld [vmem:[%s1 + $0xc4] sm:$0xf]
    %v71 = vld [vmem:[%s1 + $0xc8] sm:$0xf]
    %v72 = vld [vmem:[%s1 + $0xcc] sm:$0xf]
    %v73 = vld [vmem:[%s1 + $0xd0] sm:$0xf]
    %v74 = vld [vmem:[%s1 + $0xd4] sm:$0xf]
    %v75 = vld [vmem:[%s1 + $0xd8] sm:$0xf]
    %v76 = vld [vmem:[%s1 + $0xdc] sm:$0xf]
    %v77 = vld [vmem:[%s1 + $0xe0] sm:$0xf]
    %v78 = vld [vmem:[%s1 + $0xe4] sm:$0xf]
    %v79 = vld [vmem:[%s1 + $0xe8] sm:$0xf]
    %v80 = vld [vmem:[%s1 + $0xec] sm:$0xf]
    %v81 = vld [vmem:[%s1 + $0xf0] sm:$0xf]
    %v82 = vld [vmem:[%s1 + $0xf4] sm:$0xf]
    %v83 = vld [vmem:[%s1 + $0xf8] sm:$0xf]
    %v84 = vld [vmem:[%s1 + $0xfc] sm:$0xf]
    %v85 = vunpack.c.l.bf16 %v21
    %v86 = vunpack.c.l.bf16 %v22
    %v87 = vunpack.c.l.bf16 %v23
    %v88 = vunpack.c.l.bf16 %v24
    %v89 = vunpack.c.l.bf16 %v25
    %v90 = vunpack.c.l.bf16 %v26
    %v91 = vunpack.c.l.bf16 %v27
    %v92 = vunpack.c.l.bf16 %v28
    %v93 = vunpack.c.l.bf16 %v29
    %v94 = vunpack.c.l.bf16 %v30
    %v95 = vunpack.c.l.bf16 %v31
    %v96 = vunpack.c.l.bf16 %v32
    %v97 = vunpack.c.l.bf16 %v33
    %v98 = vunpack.c.l.bf16 %v34
    %v99 = vunpack.c.l.bf16 %v35
    %v100 = vunpack.c.l.bf16 %v36
    %v101 = vunpack.c.l.bf16 %v37
    %v102 = vunpack.c.l.bf16 %v38
    %v103 = vunpack.c.l.bf16 %v39
    %v104 = vunpack.c.l.bf16 %v40
    %v105 = vunpack.c.l.bf16 %v41
    %v106 = vunpack.c.l.bf16 %v42
    %v107 = vunpack.c.l.bf16 %v43
    %v108 = vunpack.c.l.bf16 %v44
    %v109 = vunpack.c.l.bf16 %v45
    %v110 = vunpack.c.l.bf16 %v46
    %v111 = vunpack.c.l.bf16 %v47
    %v112 = vunpack.c.l.bf16 %v48
    %v113 = vunpack.c.l.bf16 %v49
    %v114 = vunpack.c.l.bf16 %v50
    %v115 = vunpack.c.l.bf16 %v51
    %v116 = vunpack.c.l.bf16 %v52
    %v117 = vunpack.c.l.bf16 %v53
    %v118 = vunpack.c.l.bf16 %v54
    %v119 = vunpack.c.l.bf16 %v55
    %v120 = vunpack.c.l.bf16 %v56
    %v121 = vunpack.c.l.bf16 %v57
    %v122 = vunpack.c.l.bf16 %v58
    %v123 = vunpack.c.l.bf16 %v59
    %v124 = vunpack.c.l.bf16 %v60
    %v125 = vunpack.c.l.bf16 %v61
    %v126 = vunpack.c.l.bf16 %v62
    %v127 = vunpack.c.l.bf16 %v63
    %v128 = vunpack.c.l.bf16 %v64
    %v129 = vunpack.c.l.bf16 %v65
    %v130 = vunpack.c.l.bf16 %v66
    %v131 = vunpack.c.l.bf16 %v67
    %v132 = vunpack.c.l.bf16 %v68
    %v133 = vunpack.c.l.bf16 %v69
    %v134 = vunpack.c.l.bf16 %v70
    %v135 = vunpack.c.l.bf16 %v71
    %v136 = vunpack.c.l.bf16 %v72
    %v137 = vunpack.c.l.bf16 %v73
    %v138 = vunpack.c.l.bf16 %v74
    %v139 = vunpack.c.l.bf16 %v75
    %v140 = vunpack.c.l.bf16 %v76
    %v141 = vunpack.c.l.bf16 %v77
    %v142 = vunpack.c.l.bf16 %v78
    %v143 = vunpack.c.l.bf16 %v79
    %v144 = vunpack.c.l.bf16 %v80
    %v145 = vunpack.c.l.bf16 %v81
    %v146 = vunpack.c.l.bf16 %v82
    %v147 = vunpack.c.l.bf16 %v83
    %v148 = vunpack.c.l.bf16 %v84
    %s149 = scalar_lea.vmem %s1, 256
    %v150 = vld [vmem:[%s149] sm:$0xf]
    %v151 = vld [vmem:[%s149 + $0x4] sm:$0xf]
    %v152 = vld [vmem:[%s149 + $0x8] sm:$0xf]
    %v153 = vld [vmem:[%s149 + $0xc] sm:$0xf]
    %v154 = vld [vmem:[%s149 + $0x10] sm:$0xf]
    %v155 = vld [vmem:[%s149 + $0x14] sm:$0xf]
    %v156 = vld [vmem:[%s149 + $0x18] sm:$0xf]
    %v157 = vld [vmem:[%s149 + $0x1c] sm:$0xf]
    %v158 = vld [vmem:[%s149 + $0x20] sm:$0xf]
    %v159 = vld [vmem:[%s149 + $0x24] sm:$0xf]
    %v160 = vld [vmem:[%s149 + $0x28] sm:$0xf]
    %v161 = vld [vmem:[%s149 + $0x2c] sm:$0xf]
    %v162 = vld [vmem:[%s149 + $0x30] sm:$0xf]
    %v163 = vld [vmem:[%s149 + $0x34] sm:$0xf]
    %v164 = vld [vmem:[%s149 + $0x38] sm:$0xf]
    %v165 = vld [vmem:[%s149 + $0x3c] sm:$0xf]
    %v166 = vld [vmem:[%s149 + $0x40] sm:$0xf]
    %v167 = vld [vmem:[%s149 + $0x44] sm:$0xf]
    %v168 = vld [vmem:[%s149 + $0x48] sm:$0xf]
    %v169 = vld [vmem:[%s149 + $0x4c] sm:$0xf]
    %v170 = vld [vmem:[%s149 + $0x50] sm:$0xf]
    %v171 = vld [vmem:[%s149 + $0x54] sm:$0xf]
    %v172 = vld [vmem:[%s149 + $0x58] sm:$0xf]
    %v173 = vld [vmem:[%s149 + $0x5c] sm:$0xf]
    %v174 = vld [vmem:[%s149 + $0x60] sm:$0xf]
    %v175 = vld [vmem:[%s149 + $0x64] sm:$0xf]
    %v176 = vld [vmem:[%s149 + $0x68] sm:$0xf]
    %v177 = vld [vmem:[%s149 + $0x6c] sm:$0xf]
    %v178 = vld [vmem:[%s149 + $0x70] sm:$0xf]
    %v179 = vld [vmem:[%s149 + $0x74] sm:$0xf]
    %v180 = vld [vmem:[%s149 + $0x78] sm:$0xf]
    %v181 = vld [vmem:[%s149 + $0x7c] sm:$0xf]
    %v182 = vld [vmem:[%s149 + $0x80] sm:$0xf]
    %v183 = vld [vmem:[%s149 + $0x84] sm:$0xf]
    %v184 = vld [vmem:[%s149 + $0x88] sm:$0xf]
    %v185 = vld [vmem:[%s149 + $0x8c] sm:$0xf]
    %v186 = vld [vmem:[%s149 + $0x90] sm:$0xf]
    %v187 = vld [vmem:[%s149 + $0x94] sm:$0xf]
    %v188 = vld [vmem:[%s149 + $0x98] sm:$0xf]
    %v189 = vld [vmem:[%s149 + $0x9c] sm:$0xf]
    %v190 = vld [vmem:[%s149 + $0xa0] sm:$0xf]
    %v191 = vld [vmem:[%s149 + $0xa4] sm:$0xf]
    %v192 = vld [vmem:[%s149 + $0xa8] sm:$0xf]
    %v193 = vld [vmem:[%s149 + $0xac] sm:$0xf]
    %v194 = vld [vmem:[%s149 + $0xb0] sm:$0xf]
    %v195 = vld [vmem:[%s149 + $0xb4] sm:$0xf]
    %v196 = vld [vmem:[%s149 + $0xb8] sm:$0xf]
    %v197 = vld [vmem:[%s149 + $0xbc] sm:$0xf]
    %v198 = vld [vmem:[%s149 + $0xc0] sm:$0xf]
    %v199 = vld [vmem:[%s149 + $0xc4] sm:$0xf]
    %v200 = vld [vmem:[%s149 + $0xc8] sm:$0xf]
    %v201 = vld [vmem:[%s149 + $0xcc] sm:$0xf]
    %v202 = vld [vmem:[%s149 + $0xd0] sm:$0xf]
    %v203 = vld [vmem:[%s149 + $0xd4] sm:$0xf]
    %v204 = vld [vmem:[%s149 + $0xd8] sm:$0xf]
    %v205 = vld [vmem:[%s149 + $0xdc] sm:$0xf]
    %v206 = vld [vmem:[%s149 + $0xe0] sm:$0xf]
    %v207 = vld [vmem:[%s149 + $0xe4] sm:$0xf]
    %v208 = vld [vmem:[%s149 + $0xe8] sm:$0xf]
    %v209 = vld [vmem:[%s149 + $0xec] sm:$0xf]
    %v210 = vld [vmem:[%s149 + $0xf0] sm:$0xf]
    %v211 = vld [vmem:[%s149 + $0xf4] sm:$0xf]
    %v212 = vld [vmem:[%s149 + $0xf8] sm:$0xf]
    %v213 = vld [vmem:[%s149 + $0xfc] sm:$0xf]
    %v214 = vunpack.c.l.bf16 %v150
    %v215 = vunpack.c.l.bf16 %v151
    %v216 = vunpack.c.l.bf16 %v152
    %v217 = vunpack.c.l.bf16 %v153
    %v218 = vunpack.c.l.bf16 %v154
    %v219 = vunpack.c.l.bf16 %v155
    %v220 = vunpack.c.l.bf16 %v156
    %v221 = vunpack.c.l.bf16 %v157
    %v222 = vunpack.c.l.bf16 %v158
    %v223 = vunpack.c.l.bf16 %v159
    %v224 = vunpack.c.l.bf16 %v160
    %v225 = vunpack.c.l.bf16 %v161
    %v226 = vunpack.c.l.bf16 %v162
    %v227 = vunpack.c.l.bf16 %v163
    %v228 = vunpack.c.l.bf16 %v164
    %v229 = vunpack.c.l.bf16 %v165
    %v230 = vunpack.c.l.bf16 %v166
    %v231 = vunpack.c.l.bf16 %v167
    %v232 = vunpack.c.l.bf16 %v168
    %v233 = vunpack.c.l.bf16 %v169
    %v234 = vunpack.c.l.bf16 %v170
    %v235 = vunpack.c.l.bf16 %v171
    %v236 = vunpack.c.l.bf16 %v172
    %v237 = vunpack.c.l.bf16 %v173
    %v238 = vunpack.c.l.bf16 %v174
    %v239 = vunpack.c.l.bf16 %v175
    %v240 = vunpack.c.l.bf16 %v176
    %v241 = vunpack.c.l.bf16 %v177
    %v242 = vunpack.c.l.bf16 %v178
    %v243 = vunpack.c.l.bf16 %v179
    %v244 = vunpack.c.l.bf16 %v180
    %v245 = vunpack.c.l.bf16 %v181
    %v246 = vunpack.c.l.bf16 %v182
    %v247 = vunpack.c.l.bf16 %v183
    %v248 = vunpack.c.l.bf16 %v184
    %v249 = vunpack.c.l.bf16 %v185
    %v250 = vunpack.c.l.bf16 %v186
    %v251 = vunpack.c.l.bf16 %v187
    %v252 = vunpack.c.l.bf16 %v188
    %v253 = vunpack.c.l.bf16 %v189
    %v254 = vunpack.c.l.bf16 %v190
    %v255 = vunpack.c.l.bf16 %v191
    %v256 = vunpack.c.l.bf16 %v192
    %v257 = vunpack.c.l.bf16 %v193
    %v258 = vunpack.c.l.bf16 %v194
    %v259 = vunpack.c.l.bf16 %v195
    %v260 = vunpack.c.l.bf16 %v196
    %v261 = vunpack.c.l.bf16 %v197
    %v262 = vunpack.c.l.bf16 %v198
    %v263 = vunpack.c.l.bf16 %v199
    %v264 = vunpack.c.l.bf16 %v200
    %v265 = vunpack.c.l.bf16 %v201
    %v266 = vunpack.c.l.bf16 %v202
    %v267 = vunpack.c.l.bf16 %v203
    %v268 = vunpack.c.l.bf16 %v204
    %v269 = vunpack.c.l.bf16 %v205
    %v270 = vunpack.c.l.bf16 %v206
    %v271 = vunpack.c.l.bf16 %v207
    %v272 = vunpack.c.l.bf16 %v208
    %v273 = vunpack.c.l.bf16 %v209
    %v274 = vunpack.c.l.bf16 %v210
    %v275 = vunpack.c.l.bf16 %v211
    %v276 = vunpack.c.l.bf16 %v212
    %v277 = vunpack.c.l.bf16 %v213
    %v278 = vld [vmem:[%s3] sm:$0xff]
    %v279 = vld [vmem:[%s3 + $0x8] sm:$0xff]
    %vm280 = vcmask 130048
    %v282 = vsel %vm280, %v85, 0
    %v285 = vsel %vm280, %v86, 0
    %v288 = vsel %vm280, %v87, 0
    %v291 = vsel %vm280, %v88, 0
    %v294 = vsel %vm280, %v89, 0
    %v297 = vsel %vm280, %v90, 0
    %v300 = vsel %vm280, %v91, 0
    %v303 = vsel %vm280, %v92, 0
    %v306 = vsel %vm280, %v93, 0
    %v309 = vsel %vm280, %v94, 0
    %v312 = vsel %vm280, %v95, 0
    %v315 = vsel %vm280, %v96, 0
    %v318 = vsel %vm280, %v97, 0
    %v321 = vsel %vm280, %v98, 0
    %v324 = vsel %vm280, %v99, 0
    %v327 = vsel %vm280, %v100, 0
    %v330 = vsel %vm280, %v101, 0
    %v333 = vsel %vm280, %v102, 0
    %v336 = vsel %vm280, %v103, 0
    %v339 = vsel %vm280, %v104, 0
    %v342 = vsel %vm280, %v105, 0
    %v345 = vsel %vm280, %v106, 0
    %v348 = vsel %vm280, %v107, 0
    %v351 = vsel %vm280, %v108, 0
    %v354 = vsel %vm280, %v109, 0
    %v357 = vsel %vm280, %v110, 0
    %v360 = vsel %vm280, %v111, 0
    %v363 = vsel %vm280, %v112, 0
    %v366 = vsel %vm280, %v113, 0
    %v369 = vsel %vm280, %v114, 0
    %v372 = vsel %vm280, %v115, 0
    %v375 = vsel %vm280, %v116, 0
    %v378 = vsel %vm280, %v117, 0
    %v381 = vsel %vm280, %v118, 0
    %v384 = vsel %vm280, %v119, 0
    %v387 = vsel %vm280, %v120, 0
    %v390 = vsel %vm280, %v121, 0
    %v393 = vsel %vm280, %v122, 0
    %v396 = vsel %vm280, %v123, 0
    %v399 = vsel %vm280, %v124, 0
    %v402 = vsel %vm280, %v125, 0
    %v405 = vsel %vm280, %v126, 0
    %v408 = vsel %vm280, %v127, 0
    %v411 = vsel %vm280, %v128, 0
    %v414 = vsel %vm280, %v129, 0
    %v417 = vsel %vm280, %v130, 0
    %v420 = vsel %vm280, %v131, 0
    %v423 = vsel %vm280, %v132, 0
    %v426 = vsel %vm280, %v133, 0
    %v429 = vsel %vm280, %v134, 0
    %v432 = vsel %vm280, %v135, 0
    %v435 = vsel %vm280, %v136, 0
    %v438 = vsel %vm280, %v137, 0
    %v441 = vsel %vm280, %v138, 0
    %v444 = vsel %vm280, %v139, 0
    %v447 = vsel %vm280, %v140, 0
    %v450 = vsel %vm280, %v141, 0
    %v453 = vsel %vm280, %v142, 0
    %v456 = vsel %vm280, %v143, 0
    %v459 = vsel %vm280, %v144, 0
    %v462 = vsel %vm280, %v145, 0
    %v465 = vsel %vm280, %v146, 0
    %v468 = vsel %vm280, %v147, 0
    %v471 = vsel %vm280, %v148, 0
    %473 = vmatprep.subr.mxu0 0.0
    %474 = vmatpush1.msra.mxu0 0.0
    %475 = vmatprep.subr.mxu0 0.0
    %476 = vmatpush1.msra.mxu0 0.0
    %477 = vmatprep.subr.mxu0 0.0
    %478 = vmatpush1.msra.mxu0 0.0
    %479 = vmatprep.subr.mxu0 0.0
    %480 = vmatpush1.msra.mxu0 0.0
    %481 = vmatprep.subr.mxu0 0.0
    %482 = vmatpush1.msra.mxu0 0.0
    %483 = vmatprep.subr.mxu0 0.0
    %484 = vmatpush1.msra.mxu0 0.0
    %485 = vmatprep.subr.mxu0 0.0
    %486 = vmatpush1.msra.mxu0 0.0
    %487 = vmatprep.subr.mxu0 0.0
    %488 = vmatpush1.msra.mxu0 0.0
    %489 = vmatprep.subr.mxu0 0.0
    %490 = vmatpush1.msra.mxu0 0.0
    %491 = vmatprep.subr.mxu0 0.0
    %492 = vmatpush1.msra.mxu0 0.0
    %493 = vmatprep.subr.mxu0 0.0
    %494 = vmatpush1.msra.mxu0 0.0
    %495 = vmatprep.subr.mxu0 0.0
    %496 = vmatpush1.msra.mxu0 0.0
    %497 = vmatprep.subr.mxu0 0.0
    %498 = vmatpush1.msra.mxu0 0.0
    %499 = vmatprep.subr.mxu0 0.0
    %500 = vmatpush1.msra.mxu0 0.0
    %501 = vmatprep.subr.mxu0 0.0
    %502 = vmatpush1.msra.mxu0 %v279
    %503 = vmatprep.subr.mxu0 0.0
    %504 = vmatpush1.msra.mxu0 %v278
    %505 = vmatprep.subr.mxu0 0.0
    %506 = vmatpush2.msra.mxu0 0.0
    %507 = vmatprep.subr.mxu0 0.0
    %508 = vmatpush2.msra.mxu0 0.0
    %509 = vmatprep.subr.mxu0 0.0
    %510 = vmatpush2.msra.mxu0 0.0
    %511 = vmatprep.subr.mxu0 0.0
    %512 = vmatpush2.msra.mxu0 0.0
    %513 = vmatprep.subr.mxu0 0.0
    %514 = vmatpush2.msra.mxu0 0.0
    %515 = vmatprep.subr.mxu0 0.0
    %516 = vmatpush2.msra.mxu0 0.0
    %517 = vmatprep.subr.mxu0 0.0
    %518 = vmatpush2.msra.mxu0 0.0
    %519 = vmatprep.subr.mxu0 0.0
    %520 = vmatpush2.msra.mxu0 0.0
    %521 = vmatprep.subr.mxu0 0.0
    %522 = vmatpush2.msra.mxu0 0.0
    %523 = vmatprep.subr.mxu0 0.0
    %524 = vmatpush2.msra.mxu0 0.0
    %525 = vmatprep.subr.mxu0 0.0
    %526 = vmatpush2.msra.mxu0 0.0
    %527 = vmatprep.subr.mxu0 0.0
    %528 = vmatpush2.msra.mxu0 0.0
    %529 = vmatprep.subr.mxu0 0.0
    %530 = vmatpush2.msra.mxu0 0.0
    %531 = vmatprep.subr.mxu0 0.0
    %532 = vmatpush2.msra.mxu0 0.0
    %533 = vmatprep.subr.mxu0 0.0
    %534 = vmatpush2.msra.mxu0 0.0
    %535 = vmatprep.subr.mxu0 0.0
    %536 = vmatpush2.msra.mxu0 0.0
    %537 = vmatprep.mubr.f32.mxu0 0.0
    %538 = vmatmul.mubr.f32.gmra.mxu0 %v282
    %v539 = vpop.f32.mrf.mxu0
    %v540 = vadd.f32 0.0, %v539
    %v541 = vpop.f32.mrf.mxu0
    %542 = vmatprep.mubr.f32.mxu0 0.0
    %543 = vmatmul.mubr.f32.gmra.mxu0 %v285
    %v544 = vpop.f32.mrf.mxu0
    %v545 = vadd.f32 0.0, %v544
    %v546 = vpop.f32.mrf.mxu0
    %547 = vmatprep.mubr.f32.mxu0 0.0
    %548 = vmatmul.mubr.f32.gmra.mxu0 %v288
    %v549 = vpop.f32.mrf.mxu0
    %v550 = vadd.f32 0.0, %v549
    %v551 = vpop.f32.mrf.mxu0
    %552 = vmatprep.mubr.f32.mxu0 0.0
    %553 = vmatmul.mubr.f32.gmra.mxu0 %v291
    %v554 = vpop.f32.mrf.mxu0
    %v555 = vadd.f32 0.0, %v554
    %v556 = vpop.f32.mrf.mxu0
    %557 = vmatprep.mubr.f32.mxu0 0.0
    %558 = vmatmul.mubr.f32.gmra.mxu0 %v294
    %v559 = vpop.f32.mrf.mxu0
    %v560 = vadd.f32 0.0, %v559
    %v561 = vpop.f32.mrf.mxu0
    %562 = vmatprep.mubr.f32.mxu0 0.0
    %563 = vmatmul.mubr.f32.gmra.mxu0 %v297
    %v564 = vpop.f32.mrf.mxu0
    %v565 = vadd.f32 0.0, %v564
    %v566 = vpop.f32.mrf.mxu0
    %567 = vmatprep.mubr.f32.mxu0 0.0
    %568 = vmatmul.mubr.f32.gmra.mxu0 %v300
    %v569 = vpop.f32.mrf.mxu0
    %v570 = vadd.f32 0.0, %v569
    %v571 = vpop.f32.mrf.mxu0
    %572 = vmatprep.mubr.f32.mxu0 0.0
    %573 = vmatmul.mubr.f32.gmra.mxu0 %v303
    %v574 = vpop.f32.mrf.mxu0
    %v575 = vadd.f32 0.0, %v574
    %v576 = vpop.f32.mrf.mxu0
    %577 = vmatprep.mubr.f32.mxu0 0.0
    %578 = vmatmul.mubr.f32.gmra.mxu0 %v306
    %v579 = vpop.f32.mrf.mxu0
    %v580 = vadd.f32 0.0, %v579
    %v581 = vpop.f32.mrf.mxu0
    %582 = vmatprep.mubr.f32.mxu0 0.0
    %583 = vmatmul.mubr.f32.gmra.mxu0 %v309
    %v584 = vpop.f32.mrf.mxu0
    %v585 = vadd.f32 0.0, %v584
    %v586 = vpop.f32.mrf.mxu0
    %587 = vmatprep.mubr.f32.mxu0 0.0
    %588 = vmatmul.mubr.f32.gmra.mxu0 %v312
    %v589 = vpop.f32.mrf.mxu0
    %v590 = vadd.f32 0.0, %v589
    %v591 = vpop.f32.mrf.mxu0
    %592 = vmatprep.mubr.f32.mxu0 0.0
    %593 = vmatmul.mubr.f32.gmra.mxu0 %v315
    %v594 = vpop.f32.mrf.mxu0
    %v595 = vadd.f32 0.0, %v594
    %v596 = vpop.f32.mrf.mxu0
    %597 = vmatprep.mubr.f32.mxu0 0.0
    %598 = vmatmul.mubr.f32.gmra.mxu0 %v318
    %v599 = vpop.f32.mrf.mxu0
    %v600 = vadd.f32 0.0, %v599
    %v601 = vpop.f32.mrf.mxu0
    %602 = vmatprep.mubr.f32.mxu0 0.0
    %603 = vmatmul.mubr.f32.gmra.mxu0 %v321
    %v604 = vpop.f32.mrf.mxu0
    %v605 = vadd.f32 0.0, %v604
    %v606 = vpop.f32.mrf.mxu0
    %607 = vmatprep.mubr.f32.mxu0 0.0
    %608 = vmatmul.mubr.f32.gmra.mxu0 %v324
    %v609 = vpop.f32.mrf.mxu0
    %v610 = vadd.f32 0.0, %v609
    %v611 = vpop.f32.mrf.mxu0
    %612 = vmatprep.mubr.f32.mxu0 0.0
    %613 = vmatmul.mubr.f32.gmra.mxu0 %v327
    %v614 = vpop.f32.mrf.mxu0
    %v615 = vadd.f32 0.0, %v614
    %v616 = vpop.f32.mrf.mxu0
    %617 = vmatprep.mubr.f32.mxu0 0.0
    %618 = vmatmul.mubr.f32.gmra.mxu0 %v330
    %v619 = vpop.f32.mrf.mxu0
    %v620 = vadd.f32 0.0, %v619
    %v621 = vpop.f32.mrf.mxu0
    %622 = vmatprep.mubr.f32.mxu0 0.0
    %623 = vmatmul.mubr.f32.gmra.mxu0 %v333
    %v624 = vpop.f32.mrf.mxu0
    %v625 = vadd.f32 0.0, %v624
    %v626 = vpop.f32.mrf.mxu0
    %627 = vmatprep.mubr.f32.mxu0 0.0
    %628 = vmatmul.mubr.f32.gmra.mxu0 %v336
    %v629 = vpop.f32.mrf.mxu0
    %v630 = vadd.f32 0.0, %v629
    %v631 = vpop.f32.mrf.mxu0
    %632 = vmatprep.mubr.f32.mxu0 0.0
    %633 = vmatmul.mubr.f32.gmra.mxu0 %v339
    %v634 = vpop.f32.mrf.mxu0
    %v635 = vadd.f32 0.0, %v634
    %v636 = vpop.f32.mrf.mxu0
    %637 = vmatprep.mubr.f32.mxu0 0.0
    %638 = vmatmul.mubr.f32.gmra.mxu0 %v342
    %v639 = vpop.f32.mrf.mxu0
    %v640 = vadd.f32 0.0, %v639
    %v641 = vpop.f32.mrf.mxu0
    %642 = vmatprep.mubr.f32.mxu0 0.0
    %643 = vmatmul.mubr.f32.gmra.mxu0 %v345
    %v644 = vpop.f32.mrf.mxu0
    %v645 = vadd.f32 0.0, %v644
    %v646 = vpop.f32.mrf.mxu0
    %647 = vmatprep.mubr.f32.mxu0 0.0
    %648 = vmatmul.mubr.f32.gmra.mxu0 %v348
    %v649 = vpop.f32.mrf.mxu0
    %v650 = vadd.f32 0.0, %v649
    %v651 = vpop.f32.mrf.mxu0
    %652 = vmatprep.mubr.f32.mxu0 0.0
    %653 = vmatmul.mubr.f32.gmra.mxu0 %v351
    %v654 = vpop.f32.mrf.mxu0
    %v655 = vadd.f32 0.0, %v654
    %v656 = vpop.f32.mrf.mxu0
    %657 = vmatprep.mubr.f32.mxu0 0.0
    %658 = vmatmul.mubr.f32.gmra.mxu0 %v354
    %v659 = vpop.f32.mrf.mxu0
    %v660 = vadd.f32 0.0, %v659
    %v661 = vpop.f32.mrf.mxu0
    %662 = vmatprep.mubr.f32.mxu0 0.0
    %663 = vmatmul.mubr.f32.gmra.mxu0 %v357
    %v664 = vpop.f32.mrf.mxu0
    %v665 = vadd.f32 0.0, %v664
    %v666 = vpop.f32.mrf.mxu0
    %667 = vmatprep.mubr.f32.mxu0 0.0
    %668 = vmatmul.mubr.f32.gmra.mxu0 %v360
    %v669 = vpop.f32.mrf.mxu0
    %v670 = vadd.f32 0.0, %v669
    %v671 = vpop.f32.mrf.mxu0
    %672 = vmatprep.mubr.f32.mxu0 0.0
    %673 = vmatmul.mubr.f32.gmra.mxu0 %v363
    %v674 = vpop.f32.mrf.mxu0
    %v675 = vadd.f32 0.0, %v674
    %v676 = vpop.f32.mrf.mxu0
    %677 = vmatprep.mubr.f32.mxu0 0.0
    %678 = vmatmul.mubr.f32.gmra.mxu0 %v366
    %v679 = vpop.f32.mrf.mxu0
    %v680 = vadd.f32 0.0, %v679
    %v681 = vpop.f32.mrf.mxu0
    %682 = vmatprep.mubr.f32.mxu0 0.0
    %683 = vmatmul.mubr.f32.gmra.mxu0 %v369
    %v684 = vpop.f32.mrf.mxu0
    %v685 = vadd.f32 0.0, %v684
    %v686 = vpop.f32.mrf.mxu0
    %687 = vmatprep.mubr.f32.mxu0 0.0
    %688 = vmatmul.mubr.f32.gmra.mxu0 %v372
    %v689 = vpop.f32.mrf.mxu0
    %v690 = vadd.f32 0.0, %v689
    %v691 = vpop.f32.mrf.mxu0
    %692 = vmatprep.mubr.f32.mxu0 0.0
    %693 = vmatmul.mubr.f32.gmra.mxu0 %v375
    %v694 = vpop.f32.mrf.mxu0
    %v695 = vadd.f32 0.0, %v694
    %v696 = vpop.f32.mrf.mxu0
    %697 = vmatprep.mubr.f32.mxu0 0.0
    %698 = vmatmul.mubr.f32.gmra.mxu0 %v378
    %v699 = vpop.f32.mrf.mxu0
    %v700 = vadd.f32 0.0, %v699
    %v701 = vpop.f32.mrf.mxu0
    %702 = vmatprep.mubr.f32.mxu0 0.0
    %703 = vmatmul.mubr.f32.gmra.mxu0 %v381
    %v704 = vpop.f32.mrf.mxu0
    %v705 = vadd.f32 0.0, %v704
    %v706 = vpop.f32.mrf.mxu0
    %707 = vmatprep.mubr.f32.mxu0 0.0
    %708 = vmatmul.mubr.f32.gmra.mxu0 %v384
    %v709 = vpop.f32.mrf.mxu0
    %v710 = vadd.f32 0.0, %v709
    %v711 = vpop.f32.mrf.mxu0
    %712 = vmatprep.mubr.f32.mxu0 0.0
    %713 = vmatmul.mubr.f32.gmra.mxu0 %v387
    %v714 = vpop.f32.mrf.mxu0
    %v715 = vadd.f32 0.0, %v714
    %v716 = vpop.f32.mrf.mxu0
    %717 = vmatprep.mubr.f32.mxu0 0.0
    %718 = vmatmul.mubr.f32.gmra.mxu0 %v390
    %v719 = vpop.f32.mrf.mxu0
    %v720 = vadd.f32 0.0, %v719
    %v721 = vpop.f32.mrf.mxu0
    %722 = vmatprep.mubr.f32.mxu0 0.0
    %723 = vmatmul.mubr.f32.gmra.mxu0 %v393
    %v724 = vpop.f32.mrf.mxu0
    %v725 = vadd.f32 0.0, %v724
    %v726 = vpop.f32.mrf.mxu0
    %727 = vmatprep.mubr.f32.mxu0 0.0
    %728 = vmatmul.mubr.f32.gmra.mxu0 %v396
    %v729 = vpop.f32.mrf.mxu0
    %v730 = vadd.f32 0.0, %v729
    %v731 = vpop.f32.mrf.mxu0
    %732 = vmatprep.mubr.f32.mxu0 0.0
    %733 = vmatmul.mubr.f32.gmra.mxu0 %v399
    %v734 = vpop.f32.mrf.mxu0
    %v735 = vadd.f32 0.0, %v734
    %v736 = vpop.f32.mrf.mxu0
    %737 = vmatprep.mubr.f32.mxu0 0.0
    %738 = vmatmul.mubr.f32.gmra.mxu0 %v402
    %v739 = vpop.f32.mrf.mxu0
    %v740 = vadd.f32 0.0, %v739
    %v741 = vpop.f32.mrf.mxu0
    %742 = vmatprep.mubr.f32.mxu0 0.0
    %743 = vmatmul.mubr.f32.gmra.mxu0 %v405
    %v744 = vpop.f32.mrf.mxu0
    %v745 = vadd.f32 0.0, %v744
    %v746 = vpop.f32.mrf.mxu0
    %747 = vmatprep.mubr.f32.mxu0 0.0
    %748 = vmatmul.mubr.f32.gmra.mxu0 %v408
    %v749 = vpop.f32.mrf.mxu0
    %v750 = vadd.f32 0.0, %v749
    %v751 = vpop.f32.mrf.mxu0
    %752 = vmatprep.mubr.f32.mxu0 0.0
    %753 = vmatmul.mubr.f32.gmra.mxu0 %v411
    %v754 = vpop.f32.mrf.mxu0
    %v755 = vadd.f32 0.0, %v754
    %v756 = vpop.f32.mrf.mxu0
    %757 = vmatprep.mubr.f32.mxu0 0.0
    %758 = vmatmul.mubr.f32.gmra.mxu0 %v414
    %v759 = vpop.f32.mrf.mxu0
    %v760 = vadd.f32 0.0, %v759
    %v761 = vpop.f32.mrf.mxu0
    %762 = vmatprep.mubr.f32.mxu0 0.0
    %763 = vmatmul.mubr.f32.gmra.mxu0 %v417
    %v764 = vpop.f32.mrf.mxu0
    %v765 = vadd.f32 0.0, %v764
    %v766 = vpop.f32.mrf.mxu0
    %767 = vmatprep.mubr.f32.mxu0 0.0
    %768 = vmatmul.mubr.f32.gmra.mxu0 %v420
    %v769 = vpop.f32.mrf.mxu0
    %v770 = vadd.f32 0.0, %v769
    %v771 = vpop.f32.mrf.mxu0
    %772 = vmatprep.mubr.f32.mxu0 0.0
    %773 = vmatmul.mubr.f32.gmra.mxu0 %v423
    %v774 = vpop.f32.mrf.mxu0
    %v775 = vadd.f32 0.0, %v774
    %v776 = vpop.f32.mrf.mxu0
    %777 = vmatprep.mubr.f32.mxu0 0.0
    %778 = vmatmul.mubr.f32.gmra.mxu0 %v426
    %v779 = vpop.f32.mrf.mxu0
    %v780 = vadd.f32 0.0, %v779
    %v781 = vpop.f32.mrf.mxu0
    %782 = vmatprep.mubr.f32.mxu0 0.0
    %783 = vmatmul.mubr.f32.gmra.mxu0 %v429
    %v784 = vpop.f32.mrf.mxu0
    %v785 = vadd.f32 0.0, %v784
    %v786 = vpop.f32.mrf.mxu0
    %787 = vmatprep.mubr.f32.mxu0 0.0
    %788 = vmatmul.mubr.f32.gmra.mxu0 %v432
    %v789 = vpop.f32.mrf.mxu0
    %v790 = vadd.f32 0.0, %v789
    %v791 = vpop.f32.mrf.mxu0
    %792 = vmatprep.mubr.f32.mxu0 0.0
    %793 = vmatmul.mubr.f32.gmra.mxu0 %v435
    %v794 = vpop.f32.mrf.mxu0
    %v795 = vadd.f32 0.0, %v794
    %v796 = vpop.f32.mrf.mxu0
    %797 = vmatprep.mubr.f32.mxu0 0.0
    %798 = vmatmul.mubr.f32.gmra.mxu0 %v438
    %v799 = vpop.f32.mrf.mxu0
    %v800 = vadd.f32 0.0, %v799
    %v801 = vpop.f32.mrf.mxu0
    %802 = vmatprep.mubr.f32.mxu0 0.0
    %803 = vmatmul.mubr.f32.gmra.mxu0 %v441
    %v804 = vpop.f32.mrf.mxu0
    %v805 = vadd.f32 0.0, %v804
    %v806 = vpop.f32.mrf.mxu0
    %807 = vmatprep.mubr.f32.mxu0 0.0
    %808 = vmatmul.mubr.f32.gmra.mxu0 %v444
    %v809 = vpop.f32.mrf.mxu0
    %v810 = vadd.f32 0.0, %v809
    %v811 = vpop.f32.mrf.mxu0
    %812 = vmatprep.mubr.f32.mxu0 0.0
    %813 = vmatmul.mubr.f32.gmra.mxu0 %v447
    %v814 = vpop.f32.mrf.mxu0
    %v815 = vadd.f32 0.0, %v814
    %v816 = vpop.f32.mrf.mxu0
    %817 = vmatprep.mubr.f32.mxu0 0.0
    %818 = vmatmul.mubr.f32.gmra.mxu0 %v450
    %v819 = vpop.f32.mrf.mxu0
    %v820 = vadd.f32 0.0, %v819
    %v821 = vpop.f32.mrf.mxu0
    %822 = vmatprep.mubr.f32.mxu0 0.0
    %823 = vmatmul.mubr.f32.gmra.mxu0 %v453
    %v824 = vpop.f32.mrf.mxu0
    %v825 = vadd.f32 0.0, %v824
    %v826 = vpop.f32.mrf.mxu0
    %827 = vmatprep.mubr.f32.mxu0 0.0
    %828 = vmatmul.mubr.f32.gmra.mxu0 %v456
    %v829 = vpop.f32.mrf.mxu0
    %v830 = vadd.f32 0.0, %v829
    %v831 = vpop.f32.mrf.mxu0
    %832 = vmatprep.mubr.f32.mxu0 0.0
    %833 = vmatmul.mubr.f32.gmra.mxu0 %v459
    %v834 = vpop.f32.mrf.mxu0
    %v835 = vadd.f32 0.0, %v834
    %v836 = vpop.f32.mrf.mxu0
    %837 = vmatprep.mubr.f32.mxu0 0.0
    %838 = vmatmul.mubr.f32.gmra.mxu0 %v462
    %v839 = vpop.f32.mrf.mxu0
    %v840 = vadd.f32 0.0, %v839
    %v841 = vpop.f32.mrf.mxu0
    %842 = vmatprep.mubr.f32.mxu0 0.0
    %843 = vmatmul.mubr.f32.gmra.mxu0 %v465
    %v844 = vpop.f32.mrf.mxu0
    %v845 = vadd.f32 0.0, %v844
    %v846 = vpop.f32.mrf.mxu0
    %847 = vmatprep.mubr.f32.mxu0 0.0
    %848 = vmatmul.mubr.f32.gmra.mxu0 %v468
    %v849 = vpop.f32.mrf.mxu0
    %v850 = vadd.f32 0.0, %v849
    %v851 = vpop.f32.mrf.mxu0
    %852 = vmatprep.mubr.f32.mxu0 0.0
    %853 = vmatmul.mubr.f32.gmra.mxu0 %v471
    %v854 = vpop.f32.mrf.mxu0
    %v855 = vadd.f32 0.0, %v854
    %v856 = vpop.f32.mrf.mxu0
    %857 = vdwg.mxu0
    %s858 = scalar_lea.vmem %s3, 16
    %v859 = vld [vmem:[%s858] sm:$0xff]
    %v860 = vld [vmem:[%s858 + $0x8] sm:$0xff]
    %v862 = vsel %vm280, %v214, 0
    %v865 = vsel %vm280, %v215, 0
    %v868 = vsel %vm280, %v216, 0
    %v871 = vsel %vm280, %v217, 0
    %v874 = vsel %vm280, %v218, 0
    %v877 = vsel %vm280, %v219, 0
    %v880 = vsel %vm280, %v220, 0
    %v883 = vsel %vm280, %v221, 0
    %v886 = vsel %vm280, %v222, 0
    %v889 = vsel %vm280, %v223, 0
    %v892 = vsel %vm280, %v224, 0
    %v895 = vsel %vm280, %v225, 0
    %v898 = vsel %vm280, %v226, 0
    %v901 = vsel %vm280, %v227, 0
    %v904 = vsel %vm280, %v228, 0
    %v907 = vsel %vm280, %v229, 0
    %v910 = vsel %vm280, %v230, 0
    %v913 = vsel %vm280, %v231, 0
    %v916 = vsel %vm280, %v232, 0
    %v919 = vsel %vm280, %v233, 0
    %v922 = vsel %vm280, %v234, 0
    %v925 = vsel %vm280, %v235, 0
    %v928 = vsel %vm280, %v236, 0
    %v931 = vsel %vm280, %v237, 0
    %v934 = vsel %vm280, %v238, 0
    %v937 = vsel %vm280, %v239, 0
    %v940 = vsel %vm280, %v240, 0
    %v943 = vsel %vm280, %v241, 0
    %v946 = vsel %vm280, %v242, 0
    %v949 = vsel %vm280, %v243, 0
    %v952 = vsel %vm280, %v244, 0
    %v955 = vsel %vm280, %v245, 0
    %v958 = vsel %vm280, %v246, 0
    %v961 = vsel %vm280, %v247, 0
    %v964 = vsel %vm280, %v248, 0
    %v967 = vsel %vm280, %v249, 0
    %v970 = vsel %vm280, %v250, 0
    %v973 = vsel %vm280, %v251, 0
    %v976 = vsel %vm280, %v252, 0
    %v979 = vsel %vm280, %v253, 0
    %v982 = vsel %vm280, %v254, 0
    %v985 = vsel %vm280, %v255, 0
    %v988 = vsel %vm280, %v256, 0
    %v991 = vsel %vm280, %v257, 0
    %v994 = vsel %vm280, %v258, 0
    %v997 = vsel %vm280, %v259, 0
    %v1000 = vsel %vm280, %v260, 0
    %v1003 = vsel %vm280, %v261, 0
    %v1006 = vsel %vm280, %v262, 0
    %v1009 = vsel %vm280, %v263, 0
    %v1012 = vsel %vm280, %v264, 0
    %v1015 = vsel %vm280, %v265, 0
    %v1018 = vsel %vm280, %v266, 0
    %v1021 = vsel %vm280, %v267, 0
    %v1024 = vsel %vm280, %v268, 0
    %v1027 = vsel %vm280, %v269, 0
    %v1030 = vsel %vm280, %v270, 0
    %v1033 = vsel %vm280, %v271, 0
    %v1036 = vsel %vm280, %v272, 0
    %v1039 = vsel %vm280, %v273, 0
    %v1042 = vsel %vm280, %v274, 0
    %v1045 = vsel %vm280, %v275, 0
    %v1048 = vsel %vm280, %v276, 0
    %v1051 = vsel %vm280, %v277, 0
    %1053 = vmatprep.subr.mxu0 0.0
    %1054 = vmatpush1.msra.mxu0 0.0
    %1055 = vmatprep.subr.mxu0 0.0
    %1056 = vmatpush1.msra.mxu0 0.0
    %1057 = vmatprep.subr.mxu0 0.0
    %1058 = vmatpush1.msra.mxu0 0.0
    %1059 = vmatprep.subr.mxu0 0.0
    %1060 = vmatpush1.msra.mxu0 0.0
    %1061 = vmatprep.subr.mxu0 0.0
    %1062 = vmatpush1.msra.mxu0 0.0
    %1063 = vmatprep.subr.mxu0 0.0
    %1064 = vmatpush1.msra.mxu0 0.0
    %1065 = vmatprep.subr.mxu0 0.0
    %1066 = vmatpush1.msra.mxu0 0.0
    %1067 = vmatprep.subr.mxu0 0.0
    %1068 = vmatpush1.msra.mxu0 0.0
    %1069 = vmatprep.subr.mxu0 0.0
    %1070 = vmatpush1.msra.mxu0 0.0
    %1071 = vmatprep.subr.mxu0 0.0
    %1072 = vmatpush1.msra.mxu0 0.0
    %1073 = vmatprep.subr.mxu0 0.0
    %1074 = vmatpush1.msra.mxu0 0.0
    %1075 = vmatprep.subr.mxu0 0.0
    %1076 = vmatpush1.msra.mxu0 0.0
    %1077 = vmatprep.subr.mxu0 0.0
    %1078 = vmatpush1.msra.mxu0 0.0
    %1079 = vmatprep.subr.mxu0 0.0
    %1080 = vmatpush1.msra.mxu0 0.0
    %1081 = vmatprep.subr.mxu0 0.0
    %1082 = vmatpush1.msra.mxu0 %v860
    %1083 = vmatprep.subr.mxu0 0.0
    %1084 = vmatpush1.msra.mxu0 %v859
    %1085 = vmatprep.subr.mxu0 0.0
    %1086 = vmatpush2.msra.mxu0 0.0
    %1087 = vmatprep.subr.mxu0 0.0
    %1088 = vmatpush2.msra.mxu0 0.0
    %1089 = vmatprep.subr.mxu0 0.0
    %1090 = vmatpush2.msra.mxu0 0.0
    %1091 = vmatprep.subr.mxu0 0.0
    %1092 = vmatpush2.msra.mxu0 0.0
    %1093 = vmatprep.subr.mxu0 0.0
    %1094 = vmatpush2.msra.mxu0 0.0
    %1095 = vmatprep.subr.mxu0 0.0
    %1096 = vmatpush2.msra.mxu0 0.0
    %1097 = vmatprep.subr.mxu0 0.0
    %1098 = vmatpush2.msra.mxu0 0.0
    %1099 = vmatprep.subr.mxu0 0.0
    %1100 = vmatpush2.msra.mxu0 0.0
    %1101 = vmatprep.subr.mxu0 0.0
    %1102 = vmatpush2.msra.mxu0 0.0
    %1103 = vmatprep.subr.mxu0 0.0
    %1104 = vmatpush2.msra.mxu0 0.0
    %1105 = vmatprep.subr.mxu0 0.0
    %1106 = vmatpush2.msra.mxu0 0.0
    %1107 = vmatprep.subr.mxu0 0.0
    %1108 = vmatpush2.msra.mxu0 0.0
    %1109 = vmatprep.subr.mxu0 0.0
    %1110 = vmatpush2.msra.mxu0 0.0
    %1111 = vmatprep.subr.mxu0 0.0
    %1112 = vmatpush2.msra.mxu0 0.0
    %1113 = vmatprep.subr.mxu0 0.0
    %1114 = vmatpush2.msra.mxu0 0.0
    %1115 = vmatprep.subr.mxu0 0.0
    %1116 = vmatpush2.msra.mxu0 0.0
    %1117 = vmatprep.mubr.f32.mxu0 0.0
    %1118 = vmatmul.mubr.f32.gmra.mxu0 %v862
    %v1119 = vpop.f32.mrf.mxu0
    %v1120 = vadd.f32 0.0, %v1119
    %v1121 = vpop.f32.mrf.mxu0
    %1122 = vmatprep.mubr.f32.mxu0 0.0
    %1123 = vmatmul.mubr.f32.gmra.mxu0 %v865
    %v1124 = vpop.f32.mrf.mxu0
    %v1125 = vadd.f32 0.0, %v1124
    %v1126 = vpop.f32.mrf.mxu0
    %1127 = vmatprep.mubr.f32.mxu0 0.0
    %1128 = vmatmul.mubr.f32.gmra.mxu0 %v868
    %v1129 = vpop.f32.mrf.mxu0
    %v1130 = vadd.f32 0.0, %v1129
    %v1131 = vpop.f32.mrf.mxu0
    %1132 = vmatprep.mubr.f32.mxu0 0.0
    %1133 = vmatmul.mubr.f32.gmra.mxu0 %v871
    %v1134 = vpop.f32.mrf.mxu0
    %v1135 = vadd.f32 0.0, %v1134
    %v1136 = vpop.f32.mrf.mxu0
    %1137 = vmatprep.mubr.f32.mxu0 0.0
    %1138 = vmatmul.mubr.f32.gmra.mxu0 %v874
    %v1139 = vpop.f32.mrf.mxu0
    %v1140 = vadd.f32 0.0, %v1139
    %v1141 = vpop.f32.mrf.mxu0
    %1142 = vmatprep.mubr.f32.mxu0 0.0
    %1143 = vmatmul.mubr.f32.gmra.mxu0 %v877
    %v1144 = vpop.f32.mrf.mxu0
    %v1145 = vadd.f32 0.0, %v1144
    %v1146 = vpop.f32.mrf.mxu0
    %1147 = vmatprep.mubr.f32.mxu0 0.0
    %1148 = vmatmul.mubr.f32.gmra.mxu0 %v880
    %v1149 = vpop.f32.mrf.mxu0
    %v1150 = vadd.f32 0.0, %v1149
    %v1151 = vpop.f32.mrf.mxu0
    %1152 = vmatprep.mubr.f32.mxu0 0.0
    %1153 = vmatmul.mubr.f32.gmra.mxu0 %v883
    %v1154 = vpop.f32.mrf.mxu0
    %v1155 = vadd.f32 0.0, %v1154
    %v1156 = vpop.f32.mrf.mxu0
    %1157 = vmatprep.mubr.f32.mxu0 0.0
    %1158 = vmatmul.mubr.f32.gmra.mxu0 %v886
    %v1159 = vpop.f32.mrf.mxu0
    %v1160 = vadd.f32 0.0, %v1159
    %v1161 = vpop.f32.mrf.mxu0
    %1162 = vmatprep.mubr.f32.mxu0 0.0
    %1163 = vmatmul.mubr.f32.gmra.mxu0 %v889
    %v1164 = vpop.f32.mrf.mxu0
    %v1165 = vadd.f32 0.0, %v1164
    %v1166 = vpop.f32.mrf.mxu0
    %1167 = vmatprep.mubr.f32.mxu0 0.0
    %1168 = vmatmul.mubr.f32.gmra.mxu0 %v892
    %v1169 = vpop.f32.mrf.mxu0
    %v1170 = vadd.f32 0.0, %v1169
    %v1171 = vpop.f32.mrf.mxu0
    %1172 = vmatprep.mubr.f32.mxu0 0.0
    %1173 = vmatmul.mubr.f32.gmra.mxu0 %v895
    %v1174 = vpop.f32.mrf.mxu0
    %v1175 = vadd.f32 0.0, %v1174
    %v1176 = vpop.f32.mrf.mxu0
    %1177 = vmatprep.mubr.f32.mxu0 0.0
    %1178 = vmatmul.mubr.f32.gmra.mxu0 %v898
    %v1179 = vpop.f32.mrf.mxu0
    %v1180 = vadd.f32 0.0, %v1179
    %v1181 = vpop.f32.mrf.mxu0
    %1182 = vmatprep.mubr.f32.mxu0 0.0
    %1183 = vmatmul.mubr.f32.gmra.mxu0 %v901
    %v1184 = vpop.f32.mrf.mxu0
    %v1185 = vadd.f32 0.0, %v1184
    %v1186 = vpop.f32.mrf.mxu0
    %1187 = vmatprep.mubr.f32.mxu0 0.0
    %1188 = vmatmul.mubr.f32.gmra.mxu0 %v904
    %v1189 = vpop.f32.mrf.mxu0
    %v1190 = vadd.f32 0.0, %v1189
    %v1191 = vpop.f32.mrf.mxu0
    %1192 = vmatprep.mubr.f32.mxu0 0.0
    %1193 = vmatmul.mubr.f32.gmra.mxu0 %v907
    %v1194 = vpop.f32.mrf.mxu0
    %v1195 = vadd.f32 0.0, %v1194
    %v1196 = vpop.f32.mrf.mxu0
    %1197 = vmatprep.mubr.f32.mxu0 0.0
    %1198 = vmatmul.mubr.f32.gmra.mxu0 %v910
    %v1199 = vpop.f32.mrf.mxu0
    %v1200 = vadd.f32 0.0, %v1199
    %v1201 = vpop.f32.mrf.mxu0
    %1202 = vmatprep.mubr.f32.mxu0 0.0
    %1203 = vmatmul.mubr.f32.gmra.mxu0 %v913
    %v1204 = vpop.f32.mrf.mxu0
    %v1205 = vadd.f32 0.0, %v1204
    %v1206 = vpop.f32.mrf.mxu0
    %1207 = vmatprep.mubr.f32.mxu0 0.0
    %1208 = vmatmul.mubr.f32.gmra.mxu0 %v916
    %v1209 = vpop.f32.mrf.mxu0
    %v1210 = vadd.f32 0.0, %v1209
    %v1211 = vpop.f32.mrf.mxu0
    %1212 = vmatprep.mubr.f32.mxu0 0.0
    %1213 = vmatmul.mubr.f32.gmra.mxu0 %v919
    %v1214 = vpop.f32.mrf.mxu0
    %v1215 = vadd.f32 0.0, %v1214
    %v1216 = vpop.f32.mrf.mxu0
    %1217 = vmatprep.mubr.f32.mxu0 0.0
    %1218 = vmatmul.mubr.f32.gmra.mxu0 %v922
    %v1219 = vpop.f32.mrf.mxu0
    %v1220 = vadd.f32 0.0, %v1219
    %v1221 = vpop.f32.mrf.mxu0
    %1222 = vmatprep.mubr.f32.mxu0 0.0
    %1223 = vmatmul.mubr.f32.gmra.mxu0 %v925
    %v1224 = vpop.f32.mrf.mxu0
    %v1225 = vadd.f32 0.0, %v1224
    %v1226 = vpop.f32.mrf.mxu0
    %1227 = vmatprep.mubr.f32.mxu0 0.0
    %1228 = vmatmul.mubr.f32.gmra.mxu0 %v928
    %v1229 = vpop.f32.mrf.mxu0
    %v1230 = vadd.f32 0.0, %v1229
    %v1231 = vpop.f32.mrf.mxu0
    %1232 = vmatprep.mubr.f32.mxu0 0.0
    %1233 = vmatmul.mubr.f32.gmra.mxu0 %v931
    %v1234 = vpop.f32.mrf.mxu0
    %v1235 = vadd.f32 0.0, %v1234
    %v1236 = vpop.f32.mrf.mxu0
    %1237 = vmatprep.mubr.f32.mxu0 0.0
    %1238 = vmatmul.mubr.f32.gmra.mxu0 %v934
    %v1239 = vpop.f32.mrf.mxu0
    %v1240 = vadd.f32 0.0, %v1239
    %v1241 = vpop.f32.mrf.mxu0
    %1242 = vmatprep.mubr.f32.mxu0 0.0
    %1243 = vmatmul.mubr.f32.gmra.mxu0 %v937
    %v1244 = vpop.f32.mrf.mxu0
    %v1245 = vadd.f32 0.0, %v1244
    %v1246 = vpop.f32.mrf.mxu0
    %1247 = vmatprep.mubr.f32.mxu0 0.0
    %1248 = vmatmul.mubr.f32.gmra.mxu0 %v940
    %v1249 = vpop.f32.mrf.mxu0
    %v1250 = vadd.f32 0.0, %v1249
    %v1251 = vpop.f32.mrf.mxu0
    %1252 = vmatprep.mubr.f32.mxu0 0.0
    %1253 = vmatmul.mubr.f32.gmra.mxu0 %v943
    %v1254 = vpop.f32.mrf.mxu0
    %v1255 = vadd.f32 0.0, %v1254
    %v1256 = vpop.f32.mrf.mxu0
    %1257 = vmatprep.mubr.f32.mxu0 0.0
    %1258 = vmatmul.mubr.f32.gmra.mxu0 %v946
    %v1259 = vpop.f32.mrf.mxu0
    %v1260 = vadd.f32 0.0, %v1259
    %v1261 = vpop.f32.mrf.mxu0
    %1262 = vmatprep.mubr.f32.mxu0 0.0
    %1263 = vmatmul.mubr.f32.gmra.mxu0 %v949
    %v1264 = vpop.f32.mrf.mxu0
    %v1265 = vadd.f32 0.0, %v1264
    %v1266 = vpop.f32.mrf.mxu0
    %1267 = vmatprep.mubr.f32.mxu0 0.0
    %1268 = vmatmul.mubr.f32.gmra.mxu0 %v952
    %v1269 = vpop.f32.mrf.mxu0
    %v1270 = vadd.f32 0.0, %v1269
    %v1271 = vpop.f32.mrf.mxu0
    %1272 = vmatprep.mubr.f32.mxu0 0.0
    %1273 = vmatmul.mubr.f32.gmra.mxu0 %v955
    %v1274 = vpop.f32.mrf.mxu0
    %v1275 = vadd.f32 0.0, %v1274
    %v1276 = vpop.f32.mrf.mxu0
    %1277 = vmatprep.mubr.f32.mxu0 0.0
    %1278 = vmatmul.mubr.f32.gmra.mxu0 %v958
    %v1279 = vpop.f32.mrf.mxu0
    %v1280 = vadd.f32 0.0, %v1279
    %v1281 = vpop.f32.mrf.mxu0
    %1282 = vmatprep.mubr.f32.mxu0 0.0
    %1283 = vmatmul.mubr.f32.gmra.mxu0 %v961
    %v1284 = vpop.f32.mrf.mxu0
    %v1285 = vadd.f32 0.0, %v1284
    %v1286 = vpop.f32.mrf.mxu0
    %1287 = vmatprep.mubr.f32.mxu0 0.0
    %1288 = vmatmul.mubr.f32.gmra.mxu0 %v964
    %v1289 = vpop.f32.mrf.mxu0
    %v1290 = vadd.f32 0.0, %v1289
    %v1291 = vpop.f32.mrf.mxu0
    %1292 = vmatprep.mubr.f32.mxu0 0.0
    %1293 = vmatmul.mubr.f32.gmra.mxu0 %v967
    %v1294 = vpop.f32.mrf.mxu0
    %v1295 = vadd.f32 0.0, %v1294
    %v1296 = vpop.f32.mrf.mxu0
    %1297 = vmatprep.mubr.f32.mxu0 0.0
    %1298 = vmatmul.mubr.f32.gmra.mxu0 %v970
    %v1299 = vpop.f32.mrf.mxu0
    %v1300 = vadd.f32 0.0, %v1299
    %v1301 = vpop.f32.mrf.mxu0
    %1302 = vmatprep.mubr.f32.mxu0 0.0
    %1303 = vmatmul.mubr.f32.gmra.mxu0 %v973
    %v1304 = vpop.f32.mrf.mxu0
    %v1305 = vadd.f32 0.0, %v1304
    %v1306 = vpop.f32.mrf.mxu0
    %1307 = vmatprep.mubr.f32.mxu0 0.0
    %1308 = vmatmul.mubr.f32.gmra.mxu0 %v976
    %v1309 = vpop.f32.mrf.mxu0
    %v1310 = vadd.f32 0.0, %v1309
    %v1311 = vpop.f32.mrf.mxu0
    %1312 = vmatprep.mubr.f32.mxu0 0.0
    %1313 = vmatmul.mubr.f32.gmra.mxu0 %v979
    %v1314 = vpop.f32.mrf.mxu0
    %v1315 = vadd.f32 0.0, %v1314
    %v1316 = vpop.f32.mrf.mxu0
    %1317 = vmatprep.mubr.f32.mxu0 0.0
    %1318 = vmatmul.mubr.f32.gmra.mxu0 %v982
    %v1319 = vpop.f32.mrf.mxu0
    %v1320 = vadd.f32 0.0, %v1319
    %v1321 = vpop.f32.mrf.mxu0
    %1322 = vmatprep.mubr.f32.mxu0 0.0
    %1323 = vmatmul.mubr.f32.gmra.mxu0 %v985
    %v1324 = vpop.f32.mrf.mxu0
    %v1325 = vadd.f32 0.0, %v1324
    %v1326 = vpop.f32.mrf.mxu0
    %1327 = vmatprep.mubr.f32.mxu0 0.0
    %1328 = vmatmul.mubr.f32.gmra.mxu0 %v988
    %v1329 = vpop.f32.mrf.mxu0
    %v1330 = vadd.f32 0.0, %v1329
    %v1331 = vpop.f32.mrf.mxu0
    %1332 = vmatprep.mubr.f32.mxu0 0.0
    %1333 = vmatmul.mubr.f32.gmra.mxu0 %v991
    %v1334 = vpop.f32.mrf.mxu0
    %v1335 = vadd.f32 0.0, %v1334
    %v1336 = vpop.f32.mrf.mxu0
    %1337 = vmatprep.mubr.f32.mxu0 0.0
    %1338 = vmatmul.mubr.f32.gmra.mxu0 %v994
    %v1339 = vpop.f32.mrf.mxu0
    %v1340 = vadd.f32 0.0, %v1339
    %v1341 = vpop.f32.mrf.mxu0
    %1342 = vmatprep.mubr.f32.mxu0 0.0
    %1343 = vmatmul.mubr.f32.gmra.mxu0 %v997
    %v1344 = vpop.f32.mrf.mxu0
    %v1345 = vadd.f32 0.0, %v1344
    %v1346 = vpop.f32.mrf.mxu0
    %1347 = vmatprep.mubr.f32.mxu0 0.0
    %1348 = vmatmul.mubr.f32.gmra.mxu0 %v1000
    %v1349 = vpop.f32.mrf.mxu0
    %v1350 = vadd.f32 0.0, %v1349
    %v1351 = vpop.f32.mrf.mxu0
    %1352 = vmatprep.mubr.f32.mxu0 0.0
    %1353 = vmatmul.mubr.f32.gmra.mxu0 %v1003
    %v1354 = vpop.f32.mrf.mxu0
    %v1355 = vadd.f32 0.0, %v1354
    %v1356 = vpop.f32.mrf.mxu0
    %1357 = vmatprep.mubr.f32.mxu0 0.0
    %1358 = vmatmul.mubr.f32.gmra.mxu0 %v1006
    %v1359 = vpop.f32.mrf.mxu0
    %v1360 = vadd.f32 0.0, %v1359
    %v1361 = vpop.f32.mrf.mxu0
    %1362 = vmatprep.mubr.f32.mxu0 0.0
    %1363 = vmatmul.mubr.f32.gmra.mxu0 %v1009
    %v1364 = vpop.f32.mrf.mxu0
    %v1365 = vadd.f32 0.0, %v1364
    %v1366 = vpop.f32.mrf.mxu0
    %1367 = vmatprep.mubr.f32.mxu0 0.0
    %1368 = vmatmul.mubr.f32.gmra.mxu0 %v1012
    %v1369 = vpop.f32.mrf.mxu0
    %v1370 = vadd.f32 0.0, %v1369
    %v1371 = vpop.f32.mrf.mxu0
    %1372 = vmatprep.mubr.f32.mxu0 0.0
    %1373 = vmatmul.mubr.f32.gmra.mxu0 %v1015
    %v1374 = vpop.f32.mrf.mxu0
    %v1375 = vadd.f32 0.0, %v1374
    %v1376 = vpop.f32.mrf.mxu0
    %1377 = vmatprep.mubr.f32.mxu0 0.0
    %1378 = vmatmul.mubr.f32.gmra.mxu0 %v1018
    %v1379 = vpop.f32.mrf.mxu0
    %v1380 = vadd.f32 0.0, %v1379
    %v1381 = vpop.f32.mrf.mxu0
    %1382 = vmatprep.mubr.f32.mxu0 0.0
    %1383 = vmatmul.mubr.f32.gmra.mxu0 %v1021
    %v1384 = vpop.f32.mrf.mxu0
    %v1385 = vadd.f32 0.0, %v1384
    %v1386 = vpop.f32.mrf.mxu0
    %1387 = vmatprep.mubr.f32.mxu0 0.0
    %1388 = vmatmul.mubr.f32.gmra.mxu0 %v1024
    %v1389 = vpop.f32.mrf.mxu0
    %v1390 = vadd.f32 0.0, %v1389
    %v1391 = vpop.f32.mrf.mxu0
    %1392 = vmatprep.mubr.f32.mxu0 0.0
    %1393 = vmatmul.mubr.f32.gmra.mxu0 %v1027
    %v1394 = vpop.f32.mrf.mxu0
    %v1395 = vadd.f32 0.0, %v1394
    %v1396 = vpop.f32.mrf.mxu0
    %1397 = vmatprep.mubr.f32.mxu0 0.0
    %1398 = vmatmul.mubr.f32.gmra.mxu0 %v1030
    %v1399 = vpop.f32.mrf.mxu0
    %v1400 = vadd.f32 0.0, %v1399
    %v1401 = vpop.f32.mrf.mxu0
    %1402 = vmatprep.mubr.f32.mxu0 0.0
    %1403 = vmatmul.mubr.f32.gmra.mxu0 %v1033
    %v1404 = vpop.f32.mrf.mxu0
    %v1405 = vadd.f32 0.0, %v1404
    %v1406 = vpop.f32.mrf.mxu0
    %1407 = vmatprep.mubr.f32.mxu0 0.0
    %1408 = vmatmul.mubr.f32.gmra.mxu0 %v1036
    %v1409 = vpop.f32.mrf.mxu0
    %v1410 = vadd.f32 0.0, %v1409
    %v1411 = vpop.f32.mrf.mxu0
    %1412 = vmatprep.mubr.f32.mxu0 0.0
    %1413 = vmatmul.mubr.f32.gmra.mxu0 %v1039
    %v1414 = vpop.f32.mrf.mxu0
    %v1415 = vadd.f32 0.0, %v1414
    %v1416 = vpop.f32.mrf.mxu0
    %1417 = vmatprep.mubr.f32.mxu0 0.0
    %1418 = vmatmul.mubr.f32.gmra.mxu0 %v1042
    %v1419 = vpop.f32.mrf.mxu0
    %v1420 = vadd.f32 0.0, %v1419
    %v1421 = vpop.f32.mrf.mxu0
    %1422 = vmatprep.mubr.f32.mxu0 0.0
    %1423 = vmatmul.mubr.f32.gmra.mxu0 %v1045
    %v1424 = vpop.f32.mrf.mxu0
    %v1425 = vadd.f32 0.0, %v1424
    %v1426 = vpop.f32.mrf.mxu0
    %1427 = vmatprep.mubr.f32.mxu0 0.0
    %1428 = vmatmul.mubr.f32.gmra.mxu0 %v1048
    %v1429 = vpop.f32.mrf.mxu0
    %v1430 = vadd.f32 0.0, %v1429
    %v1431 = vpop.f32.mrf.mxu0
    %1432 = vmatprep.mubr.f32.mxu0 0.0
    %1433 = vmatmul.mubr.f32.gmra.mxu0 %v1051
    %v1434 = vpop.f32.mrf.mxu0
    %v1435 = vadd.f32 0.0, %v1434
    %v1436 = vpop.f32.mrf.mxu0
    %1437 = vdwg.mxu0
    %v1438 = vld [vmem:[%s0] sm:$0xf]
    %v1439 = vld [vmem:[%s0 + $0x4] sm:$0xf]
    %v1440 = vld [vmem:[%s0 + $0x8] sm:$0xf]
    %v1441 = vld [vmem:[%s0 + $0xc] sm:$0xf]
    %v1442 = vld [vmem:[%s0 + $0x10] sm:$0xf]
    %v1443 = vld [vmem:[%s0 + $0x14] sm:$0xf]
    %v1444 = vld [vmem:[%s0 + $0x18] sm:$0xf]
    %v1445 = vld [vmem:[%s0 + $0x1c] sm:$0xf]
    %v1446 = vld [vmem:[%s0 + $0x20] sm:$0xf]
    %v1447 = vld [vmem:[%s0 + $0x24] sm:$0xf]
    %v1448 = vld [vmem:[%s0 + $0x28] sm:$0xf]
    %v1449 = vld [vmem:[%s0 + $0x2c] sm:$0xf]
    %v1450 = vld [vmem:[%s0 + $0x30] sm:$0xf]
    %v1451 = vld [vmem:[%s0 + $0x34] sm:$0xf]
    %v1452 = vld [vmem:[%s0 + $0x38] sm:$0xf]
    %v1453 = vld [vmem:[%s0 + $0x3c] sm:$0xf]
    %v1454 = vunpack.c.l.bf16 %v1438
    %v1455 = vunpack.c.l.bf16 %v1439
    %v1456 = vunpack.c.l.bf16 %v1440
    %v1457 = vunpack.c.l.bf16 %v1441
    %v1458 = vunpack.c.l.bf16 %v1442
    %v1459 = vunpack.c.l.bf16 %v1443
    %v1460 = vunpack.c.l.bf16 %v1444
    %v1461 = vunpack.c.l.bf16 %v1445
    %v1462 = vunpack.c.l.bf16 %v1446
    %v1463 = vunpack.c.l.bf16 %v1447
    %v1464 = vunpack.c.l.bf16 %v1448
    %v1465 = vunpack.c.l.bf16 %v1449
    %v1466 = vunpack.c.l.bf16 %v1450
    %v1467 = vunpack.c.l.bf16 %v1451
    %v1468 = vunpack.c.l.bf16 %v1452
    %v1469 = vunpack.c.l.bf16 %v1453
    %vm1470 = vcmask 523264
    %v1472 = vsel %vm1470, %v1454, 0
    %1474 = vmatprep.subr.mxu0 0.0
    %1475 = vmatpush1.msra.mxu0 0.0
    %1476 = vmatprep.subr.mxu0 0.0
    %1477 = vmatpush1.msra.mxu0 0.0
    %1478 = vmatprep.subr.mxu0 0.0
    %1479 = vmatpush1.msra.mxu0 0.0
    %1480 = vmatprep.subr.mxu0 0.0
    %1481 = vmatpush1.msra.mxu0 0.0
    %1482 = vmatprep.subr.mxu0 0.0
    %1483 = vmatpush1.msra.mxu0 0.0
    %1484 = vmatprep.subr.mxu0 0.0
    %1485 = vmatpush1.msra.mxu0 0.0
    %1486 = vmatprep.subr.mxu0 0.0
    %1487 = vmatpush1.msra.mxu0 0.0
    %1488 = vmatprep.subr.mxu0 0.0
    %1489 = vmatpush1.msra.mxu0 0.0
    %1490 = vmatprep.subr.mxu0 0.0
    %1491 = vmatpush1.msra.mxu0 %v1135
    %1492 = vmatprep.subr.mxu0 0.0
    %1493 = vmatpush1.msra.mxu0 %v1130
    %1494 = vmatprep.subr.mxu0 0.0
    %1495 = vmatpush1.msra.mxu0 %v1125
    %1496 = vmatprep.subr.mxu0 0.0
    %1497 = vmatpush1.msra.mxu0 %v1120
    %1498 = vmatprep.subr.mxu0 0.0
    %1499 = vmatpush1.msra.mxu0 %v555
    %1500 = vmatprep.subr.mxu0 0.0
    %1501 = vmatpush1.msra.mxu0 %v550
    %1502 = vmatprep.subr.mxu0 0.0
    %1503 = vmatpush1.msra.mxu0 %v545
    %1504 = vmatprep.subr.mxu0 0.0
    %1505 = vmatpush1.msra.mxu0 %v540
    %1506 = vmatprep.subr.mxu0 0.0
    %1507 = vmatpush2.msra.mxu0 0.0
    %1508 = vmatprep.subr.mxu0 0.0
    %1509 = vmatpush2.msra.mxu0 0.0
    %1510 = vmatprep.subr.mxu0 0.0
    %1511 = vmatpush2.msra.mxu0 0.0
    %1512 = vmatprep.subr.mxu0 0.0
    %1513 = vmatpush2.msra.mxu0 0.0
    %1514 = vmatprep.subr.mxu0 0.0
    %1515 = vmatpush2.msra.mxu0 0.0
    %1516 = vmatprep.subr.mxu0 0.0
    %1517 = vmatpush2.msra.mxu0 0.0
    %1518 = vmatprep.subr.mxu0 0.0
    %1519 = vmatpush2.msra.mxu0 0.0
    %1520 = vmatprep.subr.mxu0 0.0
    %1521 = vmatpush2.msra.mxu0 0.0
    %1522 = vmatprep.subr.mxu0 0.0
    %1523 = vmatpush2.msra.mxu0 0.0
    %1524 = vmatprep.subr.mxu0 0.0
    %1525 = vmatpush2.msra.mxu0 0.0
    %1526 = vmatprep.subr.mxu0 0.0
    %1527 = vmatpush2.msra.mxu0 0.0
    %1528 = vmatprep.subr.mxu0 0.0
    %1529 = vmatpush2.msra.mxu0 0.0
    %1530 = vmatprep.subr.mxu0 0.0
    %1531 = vmatpush2.msra.mxu0 0.0
    %1532 = vmatprep.subr.mxu0 0.0
    %1533 = vmatpush2.msra.mxu0 0.0
    %1534 = vmatprep.subr.mxu0 0.0
    %1535 = vmatpush2.msra.mxu0 0.0
    %1536 = vmatprep.subr.mxu0 0.0
    %1537 = vmatpush2.msra.mxu0 0.0
    %1538 = vmatprep.mubr.f32.mxu0 0.0
    %1539 = vmatmul.mubr.f32.gmra.mxu0 %v1472
    %v1540 = vpop.f32.mrf.mxu0
    %v1541 = vadd.f32 0.0, %v1540
    %v1542 = vpop.f32.mrf.mxu0
    %1543 = vdwg.mxu0
    %v1545 = vsel %vm1470, %v1455, 0
    %1547 = vmatprep.subr.mxu0 0.0
    %1548 = vmatpush1.msra.mxu0 0.0
    %1549 = vmatprep.subr.mxu0 0.0
    %1550 = vmatpush1.msra.mxu0 0.0
    %1551 = vmatprep.subr.mxu0 0.0
    %1552 = vmatpush1.msra.mxu0 0.0
    %1553 = vmatprep.subr.mxu0 0.0
    %1554 = vmatpush1.msra.mxu0 0.0
    %1555 = vmatprep.subr.mxu0 0.0
    %1556 = vmatpush1.msra.mxu0 0.0
    %1557 = vmatprep.subr.mxu0 0.0
    %1558 = vmatpush1.msra.mxu0 0.0
    %1559 = vmatprep.subr.mxu0 0.0
    %1560 = vmatpush1.msra.mxu0 0.0
    %1561 = vmatprep.subr.mxu0 0.0
    %1562 = vmatpush1.msra.mxu0 0.0
    %1563 = vmatprep.subr.mxu0 0.0
    %1564 = vmatpush1.msra.mxu0 %v1155
    %1565 = vmatprep.subr.mxu0 0.0
    %1566 = vmatpush1.msra.mxu0 %v1150
    %1567 = vmatprep.subr.mxu0 0.0
    %1568 = vmatpush1.msra.mxu0 %v1145
    %1569 = vmatprep.subr.mxu0 0.0
    %1570 = vmatpush1.msra.mxu0 %v1140
    %1571 = vmatprep.subr.mxu0 0.0
    %1572 = vmatpush1.msra.mxu0 %v575
    %1573 = vmatprep.subr.mxu0 0.0
    %1574 = vmatpush1.msra.mxu0 %v570
    %1575 = vmatprep.subr.mxu0 0.0
    %1576 = vmatpush1.msra.mxu0 %v565
    %1577 = vmatprep.subr.mxu0 0.0
    %1578 = vmatpush1.msra.mxu0 %v560
    %1579 = vmatprep.subr.mxu0 0.0
    %1580 = vmatpush2.msra.mxu0 0.0
    %1581 = vmatprep.subr.mxu0 0.0
    %1582 = vmatpush2.msra.mxu0 0.0
    %1583 = vmatprep.subr.mxu0 0.0
    %1584 = vmatpush2.msra.mxu0 0.0
    %1585 = vmatprep.subr.mxu0 0.0
    %1586 = vmatpush2.msra.mxu0 0.0
    %1587 = vmatprep.subr.mxu0 0.0
    %1588 = vmatpush2.msra.mxu0 0.0
    %1589 = vmatprep.subr.mxu0 0.0
    %1590 = vmatpush2.msra.mxu0 0.0
    %1591 = vmatprep.subr.mxu0 0.0
    %1592 = vmatpush2.msra.mxu0 0.0
    %1593 = vmatprep.subr.mxu0 0.0
    %1594 = vmatpush2.msra.mxu0 0.0
    %1595 = vmatprep.subr.mxu0 0.0
    %1596 = vmatpush2.msra.mxu0 0.0
    %1597 = vmatprep.subr.mxu0 0.0
    %1598 = vmatpush2.msra.mxu0 0.0
    %1599 = vmatprep.subr.mxu0 0.0
    %1600 = vmatpush2.msra.mxu0 0.0
    %1601 = vmatprep.subr.mxu0 0.0
    %1602 = vmatpush2.msra.mxu0 0.0
    %1603 = vmatprep.subr.mxu0 0.0
    %1604 = vmatpush2.msra.mxu0 0.0
    %1605 = vmatprep.subr.mxu0 0.0
    %1606 = vmatpush2.msra.mxu0 0.0
    %1607 = vmatprep.subr.mxu0 0.0
    %1608 = vmatpush2.msra.mxu0 0.0
    %1609 = vmatprep.subr.mxu0 0.0
    %1610 = vmatpush2.msra.mxu0 0.0
    %1611 = vmatprep.mubr.f32.mxu0 0.0
    %1612 = vmatmul.mubr.f32.gmra.mxu0 %v1545
    %v1613 = vpop.f32.mrf.mxu0
    %v1614 = vadd.f32 0.0, %v1613
    %v1615 = vpop.f32.mrf.mxu0
    %1616 = vdwg.mxu0
    %v1618 = vsel %vm1470, %v1456, 0
    %1620 = vmatprep.subr.mxu0 0.0
    %1621 = vmatpush1.msra.mxu0 0.0
    %1622 = vmatprep.subr.mxu0 0.0
    %1623 = vmatpush1.msra.mxu0 0.0
    %1624 = vmatprep.subr.mxu0 0.0
    %1625 = vmatpush1.msra.mxu0 0.0
    %1626 = vmatprep.subr.mxu0 0.0
    %1627 = vmatpush1.msra.mxu0 0.0
    %1628 = vmatprep.subr.mxu0 0.0
    %1629 = vmatpush1.msra.mxu0 0.0
    %1630 = vmatprep.subr.mxu0 0.0
    %1631 = vmatpush1.msra.mxu0 0.0
    %1632 = vmatprep.subr.mxu0 0.0
    %1633 = vmatpush1.msra.mxu0 0.0
    %1634 = vmatprep.subr.mxu0 0.0
    %1635 = vmatpush1.msra.mxu0 0.0
    %1636 = vmatprep.subr.mxu0 0.0
    %1637 = vmatpush1.msra.mxu0 %v1175
    %1638 = vmatprep.subr.mxu0 0.0
    %1639 = vmatpush1.msra.mxu0 %v1170
    %1640 = vmatprep.subr.mxu0 0.0
    %1641 = vmatpush1.msra.mxu0 %v1165
    %1642 = vmatprep.subr.mxu0 0.0
    %1643 = vmatpush1.msra.mxu0 %v1160
    %1644 = vmatprep.subr.mxu0 0.0
    %1645 = vmatpush1.msra.mxu0 %v595
    %1646 = vmatprep.subr.mxu0 0.0
    %1647 = vmatpush1.msra.mxu0 %v590
    %1648 = vmatprep.subr.mxu0 0.0
    %1649 = vmatpush1.msra.mxu0 %v585
    %1650 = vmatprep.subr.mxu0 0.0
    %1651 = vmatpush1.msra.mxu0 %v580
    %1652 = vmatprep.subr.mxu0 0.0
    %1653 = vmatpush2.msra.mxu0 0.0
    %1654 = vmatprep.subr.mxu0 0.0
    %1655 = vmatpush2.msra.mxu0 0.0
    %1656 = vmatprep.subr.mxu0 0.0
    %1657 = vmatpush2.msra.mxu0 0.0
    %1658 = vmatprep.subr.mxu0 0.0
    %1659 = vmatpush2.msra.mxu0 0.0
    %1660 = vmatprep.subr.mxu0 0.0
    %1661 = vmatpush2.msra.mxu0 0.0
    %1662 = vmatprep.subr.mxu0 0.0
    %1663 = vmatpush2.msra.mxu0 0.0
    %1664 = vmatprep.subr.mxu0 0.0
    %1665 = vmatpush2.msra.mxu0 0.0
    %1666 = vmatprep.subr.mxu0 0.0
    %1667 = vmatpush2.msra.mxu0 0.0
    %1668 = vmatprep.subr.mxu0 0.0
    %1669 = vmatpush2.msra.mxu0 0.0
    %1670 = vmatprep.subr.mxu0 0.0
    %1671 = vmatpush2.msra.mxu0 0.0
    %1672 = vmatprep.subr.mxu0 0.0
    %1673 = vmatpush2.msra.mxu0 0.0
    %1674 = vmatprep.subr.mxu0 0.0
    %1675 = vmatpush2.msra.mxu0 0.0
    %1676 = vmatprep.subr.mxu0 0.0
    %1677 = vmatpush2.msra.mxu0 0.0
    %1678 = vmatprep.subr.mxu0 0.0
    %1679 = vmatpush2.msra.mxu0 0.0
    %1680 = vmatprep.subr.mxu0 0.0
    %1681 = vmatpush2.msra.mxu0 0.0
    %1682 = vmatprep.subr.mxu0 0.0
    %1683 = vmatpush2.msra.mxu0 0.0
    %1684 = vmatprep.mubr.f32.mxu0 0.0
    %1685 = vmatmul.mubr.f32.gmra.mxu0 %v1618
    %v1686 = vpop.f32.mrf.mxu0
    %v1687 = vadd.f32 0.0, %v1686
    %v1688 = vpop.f32.mrf.mxu0
    %1689 = vdwg.mxu0
    %v1691 = vsel %vm1470, %v1457, 0
    %1693 = vmatprep.subr.mxu0 0.0
    %1694 = vmatpush1.msra.mxu0 0.0
    %1695 = vmatprep.subr.mxu0 0.0
    %1696 = vmatpush1.msra.mxu0 0.0
    %1697 = vmatprep.subr.mxu0 0.0
    %1698 = vmatpush1.msra.mxu0 0.0
    %1699 = vmatprep.subr.mxu0 0.0
    %1700 = vmatpush1.msra.mxu0 0.0
    %1701 = vmatprep.subr.mxu0 0.0
    %1702 = vmatpush1.msra.mxu0 0.0
    %1703 = vmatprep.subr.mxu0 0.0
    %1704 = vmatpush1.msra.mxu0 0.0
    %1705 = vmatprep.subr.mxu0 0.0
    %1706 = vmatpush1.msra.mxu0 0.0
    %1707 = vmatprep.subr.mxu0 0.0
    %1708 = vmatpush1.msra.mxu0 0.0
    %1709 = vmatprep.subr.mxu0 0.0
    %1710 = vmatpush1.msra.mxu0 %v1195
    %1711 = vmatprep.subr.mxu0 0.0
    %1712 = vmatpush1.msra.mxu0 %v1190
    %1713 = vmatprep.subr.mxu0 0.0
    %1714 = vmatpush1.msra.mxu0 %v1185
    %1715 = vmatprep.subr.mxu0 0.0
    %1716 = vmatpush1.msra.mxu0 %v1180
    %1717 = vmatprep.subr.mxu0 0.0
    %1718 = vmatpush1.msra.mxu0 %v615
    %1719 = vmatprep.subr.mxu0 0.0
    %1720 = vmatpush1.msra.mxu0 %v610
    %1721 = vmatprep.subr.mxu0 0.0
    %1722 = vmatpush1.msra.mxu0 %v605
    %1723 = vmatprep.subr.mxu0 0.0
    %1724 = vmatpush1.msra.mxu0 %v600
    %1725 = vmatprep.subr.mxu0 0.0
    %1726 = vmatpush2.msra.mxu0 0.0
    %1727 = vmatprep.subr.mxu0 0.0
    %1728 = vmatpush2.msra.mxu0 0.0
    %1729 = vmatprep.subr.mxu0 0.0
    %1730 = vmatpush2.msra.mxu0 0.0
    %1731 = vmatprep.subr.mxu0 0.0
    %1732 = vmatpush2.msra.mxu0 0.0
    %1733 = vmatprep.subr.mxu0 0.0
    %1734 = vmatpush2.msra.mxu0 0.0
    %1735 = vmatprep.subr.mxu0 0.0
    %1736 = vmatpush2.msra.mxu0 0.0
    %1737 = vmatprep.subr.mxu0 0.0
    %1738 = vmatpush2.msra.mxu0 0.0
    %1739 = vmatprep.subr.mxu0 0.0
    %1740 = vmatpush2.msra.mxu0 0.0
    %1741 = vmatprep.subr.mxu0 0.0
    %1742 = vmatpush2.msra.mxu0 0.0
    %1743 = vmatprep.subr.mxu0 0.0
    %1744 = vmatpush2.msra.mxu0 0.0
    %1745 = vmatprep.subr.mxu0 0.0
    %1746 = vmatpush2.msra.mxu0 0.0
    %1747 = vmatprep.subr.mxu0 0.0
    %1748 = vmatpush2.msra.mxu0 0.0
    %1749 = vmatprep.subr.mxu0 0.0
    %1750 = vmatpush2.msra.mxu0 0.0
    %1751 = vmatprep.subr.mxu0 0.0
    %1752 = vmatpush2.msra.mxu0 0.0
    %1753 = vmatprep.subr.mxu0 0.0
    %1754 = vmatpush2.msra.mxu0 0.0
    %1755 = vmatprep.subr.mxu0 0.0
    %1756 = vmatpush2.msra.mxu0 0.0
    %1757 = vmatprep.mubr.f32.mxu0 0.0
    %1758 = vmatmul.mubr.f32.gmra.mxu0 %v1691
    %v1759 = vpop.f32.mrf.mxu0
    %v1760 = vadd.f32 0.0, %v1759
    %v1761 = vpop.f32.mrf.mxu0
    %1762 = vdwg.mxu0
    %v1764 = vsel %vm1470, %v1458, 0
    %1766 = vmatprep.subr.mxu0 0.0
    %1767 = vmatpush1.msra.mxu0 0.0
    %1768 = vmatprep.subr.mxu0 0.0
    %1769 = vmatpush1.msra.mxu0 0.0
    %1770 = vmatprep.subr.mxu0 0.0
    %1771 = vmatpush1.msra.mxu0 0.0
    %1772 = vmatprep.subr.mxu0 0.0
    %1773 = vmatpush1.msra.mxu0 0.0
    %1774 = vmatprep.subr.mxu0 0.0
    %1775 = vmatpush1.msra.mxu0 0.0
    %1776 = vmatprep.subr.mxu0 0.0
    %1777 = vmatpush1.msra.mxu0 0.0
    %1778 = vmatprep.subr.mxu0 0.0
    %1779 = vmatpush1.msra.mxu0 0.0
    %1780 = vmatprep.subr.mxu0 0.0
    %1781 = vmatpush1.msra.mxu0 0.0
    %1782 = vmatprep.subr.mxu0 0.0
    %1783 = vmatpush1.msra.mxu0 %v1215
    %1784 = vmatprep.subr.mxu0 0.0
    %1785 = vmatpush1.msra.mxu0 %v1210
    %1786 = vmatprep.subr.mxu0 0.0
    %1787 = vmatpush1.msra.mxu0 %v1205
    %1788 = vmatprep.subr.mxu0 0.0
    %1789 = vmatpush1.msra.mxu0 %v1200
    %1790 = vmatprep.subr.mxu0 0.0
    %1791 = vmatpush1.msra.mxu0 %v635
    %1792 = vmatprep.subr.mxu0 0.0
    %1793 = vmatpush1.msra.mxu0 %v630
    %1794 = vmatprep.subr.mxu0 0.0
    %1795 = vmatpush1.msra.mxu0 %v625
    %1796 = vmatprep.subr.mxu0 0.0
    %1797 = vmatpush1.msra.mxu0 %v620
    %1798 = vmatprep.subr.mxu0 0.0
    %1799 = vmatpush2.msra.mxu0 0.0
    %1800 = vmatprep.subr.mxu0 0.0
    %1801 = vmatpush2.msra.mxu0 0.0
    %1802 = vmatprep.subr.mxu0 0.0
    %1803 = vmatpush2.msra.mxu0 0.0
    %1804 = vmatprep.subr.mxu0 0.0
    %1805 = vmatpush2.msra.mxu0 0.0
    %1806 = vmatprep.subr.mxu0 0.0
    %1807 = vmatpush2.msra.mxu0 0.0
    %1808 = vmatprep.subr.mxu0 0.0
    %1809 = vmatpush2.msra.mxu0 0.0
    %1810 = vmatprep.subr.mxu0 0.0
    %1811 = vmatpush2.msra.mxu0 0.0
    %1812 = vmatprep.subr.mxu0 0.0
    %1813 = vmatpush2.msra.mxu0 0.0
    %1814 = vmatprep.subr.mxu0 0.0
    %1815 = vmatpush2.msra.mxu0 0.0
    %1816 = vmatprep.subr.mxu0 0.0
    %1817 = vmatpush2.msra.mxu0 0.0
    %1818 = vmatprep.subr.mxu0 0.0
    %1819 = vmatpush2.msra.mxu0 0.0
    %1820 = vmatprep.subr.mxu0 0.0
    %1821 = vmatpush2.msra.mxu0 0.0
    %1822 = vmatprep.subr.mxu0 0.0
    %1823 = vmatpush2.msra.mxu0 0.0
    %1824 = vmatprep.subr.mxu0 0.0
    %1825 = vmatpush2.msra.mxu0 0.0
    %1826 = vmatprep.subr.mxu0 0.0
    %1827 = vmatpush2.msra.mxu0 0.0
    %1828 = vmatprep.subr.mxu0 0.0
    %1829 = vmatpush2.msra.mxu0 0.0
    %1830 = vmatprep.mubr.f32.mxu0 0.0
    %1831 = vmatmul.mubr.f32.gmra.mxu0 %v1764
    %v1832 = vpop.f32.mrf.mxu0
    %v1833 = vadd.f32 0.0, %v1832
    %v1834 = vpop.f32.mrf.mxu0
    %1835 = vdwg.mxu0
    %v1837 = vsel %vm1470, %v1459, 0
    %1839 = vmatprep.subr.mxu0 0.0
    %1840 = vmatpush1.msra.mxu0 0.0
    %1841 = vmatprep.subr.mxu0 0.0
    %1842 = vmatpush1.msra.mxu0 0.0
    %1843 = vmatprep.subr.mxu0 0.0
    %1844 = vmatpush1.msra.mxu0 0.0
    %1845 = vmatprep.subr.mxu0 0.0
    %1846 = vmatpush1.msra.mxu0 0.0
    %1847 = vmatprep.subr.mxu0 0.0
    %1848 = vmatpush1.msra.mxu0 0.0
    %1849 = vmatprep.subr.mxu0 0.0
    %1850 = vmatpush1.msra.mxu0 0.0
    %1851 = vmatprep.subr.mxu0 0.0
    %1852 = vmatpush1.msra.mxu0 0.0
    %1853 = vmatprep.subr.mxu0 0.0
    %1854 = vmatpush1.msra.mxu0 0.0
    %1855 = vmatprep.subr.mxu0 0.0
    %1856 = vmatpush1.msra.mxu0 %v1235
    %1857 = vmatprep.subr.mxu0 0.0
    %1858 = vmatpush1.msra.mxu0 %v1230
    %1859 = vmatprep.subr.mxu0 0.0
    %1860 = vmatpush1.msra.mxu0 %v1225
    %1861 = vmatprep.subr.mxu0 0.0
    %1862 = vmatpush1.msra.mxu0 %v1220
    %1863 = vmatprep.subr.mxu0 0.0
    %1864 = vmatpush1.msra.mxu0 %v655
    %1865 = vmatprep.subr.mxu0 0.0
    %1866 = vmatpush1.msra.mxu0 %v650
    %1867 = vmatprep.subr.mxu0 0.0
    %1868 = vmatpush1.msra.mxu0 %v645
    %1869 = vmatprep.subr.mxu0 0.0
    %1870 = vmatpush1.msra.mxu0 %v640
    %1871 = vmatprep.subr.mxu0 0.0
    %1872 = vmatpush2.msra.mxu0 0.0
    %1873 = vmatprep.subr.mxu0 0.0
    %1874 = vmatpush2.msra.mxu0 0.0
    %1875 = vmatprep.subr.mxu0 0.0
    %1876 = vmatpush2.msra.mxu0 0.0
    %1877 = vmatprep.subr.mxu0 0.0
    %1878 = vmatpush2.msra.mxu0 0.0
    %1879 = vmatprep.subr.mxu0 0.0
    %1880 = vmatpush2.msra.mxu0 0.0
    %1881 = vmatprep.subr.mxu0 0.0
    %1882 = vmatpush2.msra.mxu0 0.0
    %1883 = vmatprep.subr.mxu0 0.0
    %1884 = vmatpush2.msra.mxu0 0.0
    %1885 = vmatprep.subr.mxu0 0.0
    %1886 = vmatpush2.msra.mxu0 0.0
    %1887 = vmatprep.subr.mxu0 0.0
    %1888 = vmatpush2.msra.mxu0 0.0
    %1889 = vmatprep.subr.mxu0 0.0
    %1890 = vmatpush2.msra.mxu0 0.0
    %1891 = vmatprep.subr.mxu0 0.0
    %1892 = vmatpush2.msra.mxu0 0.0
    %1893 = vmatprep.subr.mxu0 0.0
    %1894 = vmatpush2.msra.mxu0 0.0
    %1895 = vmatprep.subr.mxu0 0.0
    %1896 = vmatpush2.msra.mxu0 0.0
    %1897 = vmatprep.subr.mxu0 0.0
    %1898 = vmatpush2.msra.mxu0 0.0
    %1899 = vmatprep.subr.mxu0 0.0
    %1900 = vmatpush2.msra.mxu0 0.0
    %1901 = vmatprep.subr.mxu0 0.0
    %1902 = vmatpush2.msra.mxu0 0.0
    %1903 = vmatprep.mubr.f32.mxu0 0.0
    %1904 = vmatmul.mubr.f32.gmra.mxu0 %v1837
    %v1905 = vpop.f32.mrf.mxu0
    %v1906 = vadd.f32 0.0, %v1905
    %v1907 = vpop.f32.mrf.mxu0
    %1908 = vdwg.mxu0
    %v1910 = vsel %vm1470, %v1460, 0
    %1912 = vmatprep.subr.mxu0 0.0
    %1913 = vmatpush1.msra.mxu0 0.0
    %1914 = vmatprep.subr.mxu0 0.0
    %1915 = vmatpush1.msra.mxu0 0.0
    %1916 = vmatprep.subr.mxu0 0.0
    %1917 = vmatpush1.msra.mxu0 0.0
    %1918 = vmatprep.subr.mxu0 0.0
    %1919 = vmatpush1.msra.mxu0 0.0
    %1920 = vmatprep.subr.mxu0 0.0
    %1921 = vmatpush1.msra.mxu0 0.0
    %1922 = vmatprep.subr.mxu0 0.0
    %1923 = vmatpush1.msra.mxu0 0.0
    %1924 = vmatprep.subr.mxu0 0.0
    %1925 = vmatpush1.msra.mxu0 0.0
    %1926 = vmatprep.subr.mxu0 0.0
    %1927 = vmatpush1.msra.mxu0 0.0
    %1928 = vmatprep.subr.mxu0 0.0
    %1929 = vmatpush1.msra.mxu0 %v1255
    %1930 = vmatprep.subr.mxu0 0.0
    %1931 = vmatpush1.msra.mxu0 %v1250
    %1932 = vmatprep.subr.mxu0 0.0
    %1933 = vmatpush1.msra.mxu0 %v1245
    %1934 = vmatprep.subr.mxu0 0.0
    %1935 = vmatpush1.msra.mxu0 %v1240
    %1936 = vmatprep.subr.mxu0 0.0
    %1937 = vmatpush1.msra.mxu0 %v675
    %1938 = vmatprep.subr.mxu0 0.0
    %1939 = vmatpush1.msra.mxu0 %v670
    %1940 = vmatprep.subr.mxu0 0.0
    %1941 = vmatpush1.msra.mxu0 %v665
    %1942 = vmatprep.subr.mxu0 0.0
    %1943 = vmatpush1.msra.mxu0 %v660
    %1944 = vmatprep.subr.mxu0 0.0
    %1945 = vmatpush2.msra.mxu0 0.0
    %1946 = vmatprep.subr.mxu0 0.0
    %1947 = vmatpush2.msra.mxu0 0.0
    %1948 = vmatprep.subr.mxu0 0.0
    %1949 = vmatpush2.msra.mxu0 0.0
    %1950 = vmatprep.subr.mxu0 0.0
    %1951 = vmatpush2.msra.mxu0 0.0
    %1952 = vmatprep.subr.mxu0 0.0
    %1953 = vmatpush2.msra.mxu0 0.0
    %1954 = vmatprep.subr.mxu0 0.0
    %1955 = vmatpush2.msra.mxu0 0.0
    %1956 = vmatprep.subr.mxu0 0.0
    %1957 = vmatpush2.msra.mxu0 0.0
    %1958 = vmatprep.subr.mxu0 0.0
    %1959 = vmatpush2.msra.mxu0 0.0
    %1960 = vmatprep.subr.mxu0 0.0
    %1961 = vmatpush2.msra.mxu0 0.0
    %1962 = vmatprep.subr.mxu0 0.0
    %1963 = vmatpush2.msra.mxu0 0.0
    %1964 = vmatprep.subr.mxu0 0.0
    %1965 = vmatpush2.msra.mxu0 0.0
    %1966 = vmatprep.subr.mxu0 0.0
    %1967 = vmatpush2.msra.mxu0 0.0
    %1968 = vmatprep.subr.mxu0 0.0
    %1969 = vmatpush2.msra.mxu0 0.0
    %1970 = vmatprep.subr.mxu0 0.0
    %1971 = vmatpush2.msra.mxu0 0.0
    %1972 = vmatprep.subr.mxu0 0.0
    %1973 = vmatpush2.msra.mxu0 0.0
    %1974 = vmatprep.subr.mxu0 0.0
    %1975 = vmatpush2.msra.mxu0 0.0
    %1976 = vmatprep.mubr.f32.mxu0 0.0
    %1977 = vmatmul.mubr.f32.gmra.mxu0 %v1910
    %v1978 = vpop.f32.mrf.mxu0
    %v1979 = vadd.f32 0.0, %v1978
    %v1980 = vpop.f32.mrf.mxu0
    %1981 = vdwg.mxu0
    %v1983 = vsel %vm1470, %v1461, 0
    %1985 = vmatprep.subr.mxu0 0.0
    %1986 = vmatpush1.msra.mxu0 0.0
    %1987 = vmatprep.subr.mxu0 0.0
    %1988 = vmatpush1.msra.mxu0 0.0
    %1989 = vmatprep.subr.mxu0 0.0
    %1990 = vmatpush1.msra.mxu0 0.0
    %1991 = vmatprep.subr.mxu0 0.0
    %1992 = vmatpush1.msra.mxu0 0.0
    %1993 = vmatprep.subr.mxu0 0.0
    %1994 = vmatpush1.msra.mxu0 0.0
    %1995 = vmatprep.subr.mxu0 0.0
    %1996 = vmatpush1.msra.mxu0 0.0
    %1997 = vmatprep.subr.mxu0 0.0
    %1998 = vmatpush1.msra.mxu0 0.0
    %1999 = vmatprep.subr.mxu0 0.0
    %2000 = vmatpush1.msra.mxu0 0.0
    %2001 = vmatprep.subr.mxu0 0.0
    %2002 = vmatpush1.msra.mxu0 %v1275
    %2003 = vmatprep.subr.mxu0 0.0
    %2004 = vmatpush1.msra.mxu0 %v1270
    %2005 = vmatprep.subr.mxu0 0.0
    %2006 = vmatpush1.msra.mxu0 %v1265
    %2007 = vmatprep.subr.mxu0 0.0
    %2008 = vmatpush1.msra.mxu0 %v1260
    %2009 = vmatprep.subr.mxu0 0.0
    %2010 = vmatpush1.msra.mxu0 %v695
    %2011 = vmatprep.subr.mxu0 0.0
    %2012 = vmatpush1.msra.mxu0 %v690
    %2013 = vmatprep.subr.mxu0 0.0
    %2014 = vmatpush1.msra.mxu0 %v685
    %2015 = vmatprep.subr.mxu0 0.0
    %2016 = vmatpush1.msra.mxu0 %v680
    %2017 = vmatprep.subr.mxu0 0.0
    %2018 = vmatpush2.msra.mxu0 0.0
    %2019 = vmatprep.subr.mxu0 0.0
    %2020 = vmatpush2.msra.mxu0 0.0
    %2021 = vmatprep.subr.mxu0 0.0
    %2022 = vmatpush2.msra.mxu0 0.0
    %2023 = vmatprep.subr.mxu0 0.0
    %2024 = vmatpush2.msra.mxu0 0.0
    %2025 = vmatprep.subr.mxu0 0.0
    %2026 = vmatpush2.msra.mxu0 0.0
    %2027 = vmatprep.subr.mxu0 0.0
    %2028 = vmatpush2.msra.mxu0 0.0
    %2029 = vmatprep.subr.mxu0 0.0
    %2030 = vmatpush2.msra.mxu0 0.0
    %2031 = vmatprep.subr.mxu0 0.0
    %2032 = vmatpush2.msra.mxu0 0.0
    %2033 = vmatprep.subr.mxu0 0.0
    %2034 = vmatpush2.msra.mxu0 0.0
    %2035 = vmatprep.subr.mxu0 0.0
    %2036 = vmatpush2.msra.mxu0 0.0
    %2037 = vmatprep.subr.mxu0 0.0
    %2038 = vmatpush2.msra.mxu0 0.0
    %2039 = vmatprep.subr.mxu0 0.0
    %2040 = vmatpush2.msra.mxu0 0.0
    %2041 = vmatprep.subr.mxu0 0.0
    %2042 = vmatpush2.msra.mxu0 0.0
    %2043 = vmatprep.subr.mxu0 0.0
    %2044 = vmatpush2.msra.mxu0 0.0
    %2045 = vmatprep.subr.mxu0 0.0
    %2046 = vmatpush2.msra.mxu0 0.0
    %2047 = vmatprep.subr.mxu0 0.0
    %2048 = vmatpush2.msra.mxu0 0.0
    %2049 = vmatprep.mubr.f32.mxu0 0.0
    %2050 = vmatmul.mubr.f32.gmra.mxu0 %v1983
    %v2051 = vpop.f32.mrf.mxu0
    %v2052 = vadd.f32 0.0, %v2051
    %v2053 = vpop.f32.mrf.mxu0
    %2054 = vdwg.mxu0
    %v2056 = vsel %vm1470, %v1462, 0
    %2058 = vmatprep.subr.mxu0 0.0
    %2059 = vmatpush1.msra.mxu0 0.0
    %2060 = vmatprep.subr.mxu0 0.0
    %2061 = vmatpush1.msra.mxu0 0.0
    %2062 = vmatprep.subr.mxu0 0.0
    %2063 = vmatpush1.msra.mxu0 0.0
    %2064 = vmatprep.subr.mxu0 0.0
    %2065 = vmatpush1.msra.mxu0 0.0
    %2066 = vmatprep.subr.mxu0 0.0
    %2067 = vmatpush1.msra.mxu0 0.0
    %2068 = vmatprep.subr.mxu0 0.0
    %2069 = vmatpush1.msra.mxu0 0.0
    %2070 = vmatprep.subr.mxu0 0.0
    %2071 = vmatpush1.msra.mxu0 0.0
    %2072 = vmatprep.subr.mxu0 0.0
    %2073 = vmatpush1.msra.mxu0 0.0
    %2074 = vmatprep.subr.mxu0 0.0
    %2075 = vmatpush1.msra.mxu0 %v1295
    %2076 = vmatprep.subr.mxu0 0.0
    %2077 = vmatpush1.msra.mxu0 %v1290
    %2078 = vmatprep.subr.mxu0 0.0
    %2079 = vmatpush1.msra.mxu0 %v1285
    %2080 = vmatprep.subr.mxu0 0.0
    %2081 = vmatpush1.msra.mxu0 %v1280
    %2082 = vmatprep.subr.mxu0 0.0
    %2083 = vmatpush1.msra.mxu0 %v715
    %2084 = vmatprep.subr.mxu0 0.0
    %2085 = vmatpush1.msra.mxu0 %v710
    %2086 = vmatprep.subr.mxu0 0.0
    %2087 = vmatpush1.msra.mxu0 %v705
    %2088 = vmatprep.subr.mxu0 0.0
    %2089 = vmatpush1.msra.mxu0 %v700
    %2090 = vmatprep.subr.mxu0 0.0
    %2091 = vmatpush2.msra.mxu0 0.0
    %2092 = vmatprep.subr.mxu0 0.0
    %2093 = vmatpush2.msra.mxu0 0.0
    %2094 = vmatprep.subr.mxu0 0.0
    %2095 = vmatpush2.msra.mxu0 0.0
    %2096 = vmatprep.subr.mxu0 0.0
    %2097 = vmatpush2.msra.mxu0 0.0
    %2098 = vmatprep.subr.mxu0 0.0
    %2099 = vmatpush2.msra.mxu0 0.0
    %2100 = vmatprep.subr.mxu0 0.0
    %2101 = vmatpush2.msra.mxu0 0.0
    %2102 = vmatprep.subr.mxu0 0.0
    %2103 = vmatpush2.msra.mxu0 0.0
    %2104 = vmatprep.subr.mxu0 0.0
    %2105 = vmatpush2.msra.mxu0 0.0
    %2106 = vmatprep.subr.mxu0 0.0
    %2107 = vmatpush2.msra.mxu0 0.0
    %2108 = vmatprep.subr.mxu0 0.0
    %2109 = vmatpush2.msra.mxu0 0.0
    %2110 = vmatprep.subr.mxu0 0.0
    %2111 = vmatpush2.msra.mxu0 0.0
    %2112 = vmatprep.subr.mxu0 0.0
    %2113 = vmatpush2.msra.mxu0 0.0
    %2114 = vmatprep.subr.mxu0 0.0
    %2115 = vmatpush2.msra.mxu0 0.0
    %2116 = vmatprep.subr.mxu0 0.0
    %2117 = vmatpush2.msra.mxu0 0.0
    %2118 = vmatprep.subr.mxu0 0.0
    %2119 = vmatpush2.msra.mxu0 0.0
    %2120 = vmatprep.subr.mxu0 0.0
    %2121 = vmatpush2.msra.mxu0 0.0
    %2122 = vmatprep.mubr.f32.mxu0 0.0
    %2123 = vmatmul.mubr.f32.gmra.mxu0 %v2056
    %v2124 = vpop.f32.mrf.mxu0
    %v2125 = vadd.f32 0.0, %v2124
    %v2126 = vpop.f32.mrf.mxu0
    %2127 = vdwg.mxu0
    %v2129 = vsel %vm1470, %v1463, 0
    %2131 = vmatprep.subr.mxu0 0.0
    %2132 = vmatpush1.msra.mxu0 0.0
    %2133 = vmatprep.subr.mxu0 0.0
    %2134 = vmatpush1.msra.mxu0 0.0
    %2135 = vmatprep.subr.mxu0 0.0
    %2136 = vmatpush1.msra.mxu0 0.0
    %2137 = vmatprep.subr.mxu0 0.0
    %2138 = vmatpush1.msra.mxu0 0.0
    %2139 = vmatprep.subr.mxu0 0.0
    %2140 = vmatpush1.msra.mxu0 0.0
    %2141 = vmatprep.subr.mxu0 0.0
    %2142 = vmatpush1.msra.mxu0 0.0
    %2143 = vmatprep.subr.mxu0 0.0
    %2144 = vmatpush1.msra.mxu0 0.0
    %2145 = vmatprep.subr.mxu0 0.0
    %2146 = vmatpush1.msra.mxu0 0.0
    %2147 = vmatprep.subr.mxu0 0.0
    %2148 = vmatpush1.msra.mxu0 %v1315
    %2149 = vmatprep.subr.mxu0 0.0
    %2150 = vmatpush1.msra.mxu0 %v1310
    %2151 = vmatprep.subr.mxu0 0.0
    %2152 = vmatpush1.msra.mxu0 %v1305
    %2153 = vmatprep.subr.mxu0 0.0
    %2154 = vmatpush1.msra.mxu0 %v1300
    %2155 = vmatprep.subr.mxu0 0.0
    %2156 = vmatpush1.msra.mxu0 %v735
    %2157 = vmatprep.subr.mxu0 0.0
    %2158 = vmatpush1.msra.mxu0 %v730
    %2159 = vmatprep.subr.mxu0 0.0
    %2160 = vmatpush1.msra.mxu0 %v725
    %2161 = vmatprep.subr.mxu0 0.0
    %2162 = vmatpush1.msra.mxu0 %v720
    %2163 = vmatprep.subr.mxu0 0.0
    %2164 = vmatpush2.msra.mxu0 0.0
    %2165 = vmatprep.subr.mxu0 0.0
    %2166 = vmatpush2.msra.mxu0 0.0
    %2167 = vmatprep.subr.mxu0 0.0
    %2168 = vmatpush2.msra.mxu0 0.0
    %2169 = vmatprep.subr.mxu0 0.0
    %2170 = vmatpush2.msra.mxu0 0.0
    %2171 = vmatprep.subr.mxu0 0.0
    %2172 = vmatpush2.msra.mxu0 0.0
    %2173 = vmatprep.subr.mxu0 0.0
    %2174 = vmatpush2.msra.mxu0 0.0
    %2175 = vmatprep.subr.mxu0 0.0
    %2176 = vmatpush2.msra.mxu0 0.0
    %2177 = vmatprep.subr.mxu0 0.0
    %2178 = vmatpush2.msra.mxu0 0.0
    %2179 = vmatprep.subr.mxu0 0.0
    %2180 = vmatpush2.msra.mxu0 0.0
    %2181 = vmatprep.subr.mxu0 0.0
    %2182 = vmatpush2.msra.mxu0 0.0
    %2183 = vmatprep.subr.mxu0 0.0
    %2184 = vmatpush2.msra.mxu0 0.0
    %2185 = vmatprep.subr.mxu0 0.0
    %2186 = vmatpush2.msra.mxu0 0.0
    %2187 = vmatprep.subr.mxu0 0.0
    %2188 = vmatpush2.msra.mxu0 0.0
    %2189 = vmatprep.subr.mxu0 0.0
    %2190 = vmatpush2.msra.mxu0 0.0
    %2191 = vmatprep.subr.mxu0 0.0
    %2192 = vmatpush2.msra.mxu0 0.0
    %2193 = vmatprep.subr.mxu0 0.0
    %2194 = vmatpush2.msra.mxu0 0.0
    %2195 = vmatprep.mubr.f32.mxu0 0.0
    %2196 = vmatmul.mubr.f32.gmra.mxu0 %v2129
    %v2197 = vpop.f32.mrf.mxu0
    %v2198 = vadd.f32 0.0, %v2197
    %v2199 = vpop.f32.mrf.mxu0
    %2200 = vdwg.mxu0
    %v2202 = vsel %vm1470, %v1464, 0
    %2204 = vmatprep.subr.mxu0 0.0
    %2205 = vmatpush1.msra.mxu0 0.0
    %2206 = vmatprep.subr.mxu0 0.0
    %2207 = vmatpush1.msra.mxu0 0.0
    %2208 = vmatprep.subr.mxu0 0.0
    %2209 = vmatpush1.msra.mxu0 0.0
    %2210 = vmatprep.subr.mxu0 0.0
    %2211 = vmatpush1.msra.mxu0 0.0
    %2212 = vmatprep.subr.mxu0 0.0
    %2213 = vmatpush1.msra.mxu0 0.0
    %2214 = vmatprep.subr.mxu0 0.0
    %2215 = vmatpush1.msra.mxu0 0.0
    %2216 = vmatprep.subr.mxu0 0.0
    %2217 = vmatpush1.msra.mxu0 0.0
    %2218 = vmatprep.subr.mxu0 0.0
    %2219 = vmatpush1.msra.mxu0 0.0
    %2220 = vmatprep.subr.mxu0 0.0
    %2221 = vmatpush1.msra.mxu0 %v1335
    %2222 = vmatprep.subr.mxu0 0.0
    %2223 = vmatpush1.msra.mxu0 %v1330
    %2224 = vmatprep.subr.mxu0 0.0
    %2225 = vmatpush1.msra.mxu0 %v1325
    %2226 = vmatprep.subr.mxu0 0.0
    %2227 = vmatpush1.msra.mxu0 %v1320
    %2228 = vmatprep.subr.mxu0 0.0
    %2229 = vmatpush1.msra.mxu0 %v755
    %2230 = vmatprep.subr.mxu0 0.0
    %2231 = vmatpush1.msra.mxu0 %v750
    %2232 = vmatprep.subr.mxu0 0.0
    %2233 = vmatpush1.msra.mxu0 %v745
    %2234 = vmatprep.subr.mxu0 0.0
    %2235 = vmatpush1.msra.mxu0 %v740
    %2236 = vmatprep.subr.mxu0 0.0
    %2237 = vmatpush2.msra.mxu0 0.0
    %2238 = vmatprep.subr.mxu0 0.0
    %2239 = vmatpush2.msra.mxu0 0.0
    %2240 = vmatprep.subr.mxu0 0.0
    %2241 = vmatpush2.msra.mxu0 0.0
    %2242 = vmatprep.subr.mxu0 0.0
    %2243 = vmatpush2.msra.mxu0 0.0
    %2244 = vmatprep.subr.mxu0 0.0
    %2245 = vmatpush2.msra.mxu0 0.0
    %2246 = vmatprep.subr.mxu0 0.0
    %2247 = vmatpush2.msra.mxu0 0.0
    %2248 = vmatprep.subr.mxu0 0.0
    %2249 = vmatpush2.msra.mxu0 0.0
    %2250 = vmatprep.subr.mxu0 0.0
    %2251 = vmatpush2.msra.mxu0 0.0
    %2252 = vmatprep.subr.mxu0 0.0
    %2253 = vmatpush2.msra.mxu0 0.0
    %2254 = vmatprep.subr.mxu0 0.0
    %2255 = vmatpush2.msra.mxu0 0.0
    %2256 = vmatprep.subr.mxu0 0.0
    %2257 = vmatpush2.msra.mxu0 0.0
    %2258 = vmatprep.subr.mxu0 0.0
    %2259 = vmatpush2.msra.mxu0 0.0
    %2260 = vmatprep.subr.mxu0 0.0
    %2261 = vmatpush2.msra.mxu0 0.0
    %2262 = vmatprep.subr.mxu0 0.0
    %2263 = vmatpush2.msra.mxu0 0.0
    %2264 = vmatprep.subr.mxu0 0.0
    %2265 = vmatpush2.msra.mxu0 0.0
    %2266 = vmatprep.subr.mxu0 0.0
    %2267 = vmatpush2.msra.mxu0 0.0
    %2268 = vmatprep.mubr.f32.mxu0 0.0
    %2269 = vmatmul.mubr.f32.gmra.mxu0 %v2202
    %v2270 = vpop.f32.mrf.mxu0
    %v2271 = vadd.f32 0.0, %v2270
    %v2272 = vpop.f32.mrf.mxu0
    %2273 = vdwg.mxu0
    %v2275 = vsel %vm1470, %v1465, 0
    %2277 = vmatprep.subr.mxu0 0.0
    %2278 = vmatpush1.msra.mxu0 0.0
    %2279 = vmatprep.subr.mxu0 0.0
    %2280 = vmatpush1.msra.mxu0 0.0
    %2281 = vmatprep.subr.mxu0 0.0
    %2282 = vmatpush1.msra.mxu0 0.0
    %2283 = vmatprep.subr.mxu0 0.0
    %2284 = vmatpush1.msra.mxu0 0.0
    %2285 = vmatprep.subr.mxu0 0.0
    %2286 = vmatpush1.msra.mxu0 0.0
    %2287 = vmatprep.subr.mxu0 0.0
    %2288 = vmatpush1.msra.mxu0 0.0
    %2289 = vmatprep.subr.mxu0 0.0
    %2290 = vmatpush1.msra.mxu0 0.0
    %2291 = vmatprep.subr.mxu0 0.0
    %2292 = vmatpush1.msra.mxu0 0.0
    %2293 = vmatprep.subr.mxu0 0.0
    %2294 = vmatpush1.msra.mxu0 %v1355
    %2295 = vmatprep.subr.mxu0 0.0
    %2296 = vmatpush1.msra.mxu0 %v1350
    %2297 = vmatprep.subr.mxu0 0.0
    %2298 = vmatpush1.msra.mxu0 %v1345
    %2299 = vmatprep.subr.mxu0 0.0
    %2300 = vmatpush1.msra.mxu0 %v1340
    %2301 = vmatprep.subr.mxu0 0.0
    %2302 = vmatpush1.msra.mxu0 %v775
    %2303 = vmatprep.subr.mxu0 0.0
    %2304 = vmatpush1.msra.mxu0 %v770
    %2305 = vmatprep.subr.mxu0 0.0
    %2306 = vmatpush1.msra.mxu0 %v765
    %2307 = vmatprep.subr.mxu0 0.0
    %2308 = vmatpush1.msra.mxu0 %v760
    %2309 = vmatprep.subr.mxu0 0.0
    %2310 = vmatpush2.msra.mxu0 0.0
    %2311 = vmatprep.subr.mxu0 0.0
    %2312 = vmatpush2.msra.mxu0 0.0
    %2313 = vmatprep.subr.mxu0 0.0
    %2314 = vmatpush2.msra.mxu0 0.0
    %2315 = vmatprep.subr.mxu0 0.0
    %2316 = vmatpush2.msra.mxu0 0.0
    %2317 = vmatprep.subr.mxu0 0.0
    %2318 = vmatpush2.msra.mxu0 0.0
    %2319 = vmatprep.subr.mxu0 0.0
    %2320 = vmatpush2.msra.mxu0 0.0
    %2321 = vmatprep.subr.mxu0 0.0
    %2322 = vmatpush2.msra.mxu0 0.0
    %2323 = vmatprep.subr.mxu0 0.0
    %2324 = vmatpush2.msra.mxu0 0.0
    %2325 = vmatprep.subr.mxu0 0.0
    %2326 = vmatpush2.msra.mxu0 0.0
    %2327 = vmatprep.subr.mxu0 0.0
    %2328 = vmatpush2.msra.mxu0 0.0
    %2329 = vmatprep.subr.mxu0 0.0
    %2330 = vmatpush2.msra.mxu0 0.0
    %2331 = vmatprep.subr.mxu0 0.0
    %2332 = vmatpush2.msra.mxu0 0.0
    %2333 = vmatprep.subr.mxu0 0.0
    %2334 = vmatpush2.msra.mxu0 0.0
    %2335 = vmatprep.subr.mxu0 0.0
    %2336 = vmatpush2.msra.mxu0 0.0
    %2337 = vmatprep.subr.mxu0 0.0
    %2338 = vmatpush2.msra.mxu0 0.0
    %2339 = vmatprep.subr.mxu0 0.0
    %2340 = vmatpush2.msra.mxu0 0.0
    %2341 = vmatprep.mubr.f32.mxu0 0.0
    %2342 = vmatmul.mubr.f32.gmra.mxu0 %v2275
    %v2343 = vpop.f32.mrf.mxu0
    %v2344 = vadd.f32 0.0, %v2343
    %v2345 = vpop.f32.mrf.mxu0
    %2346 = vdwg.mxu0
    %v2348 = vsel %vm1470, %v1466, 0
    %2350 = vmatprep.subr.mxu0 0.0
    %2351 = vmatpush1.msra.mxu0 0.0
    %2352 = vmatprep.subr.mxu0 0.0
    %2353 = vmatpush1.msra.mxu0 0.0
    %2354 = vmatprep.subr.mxu0 0.0
    %2355 = vmatpush1.msra.mxu0 0.0
    %2356 = vmatprep.subr.mxu0 0.0
    %2357 = vmatpush1.msra.mxu0 0.0
    %2358 = vmatprep.subr.mxu0 0.0
    %2359 = vmatpush1.msra.mxu0 0.0
    %2360 = vmatprep.subr.mxu0 0.0
    %2361 = vmatpush1.msra.mxu0 0.0
    %2362 = vmatprep.subr.mxu0 0.0
    %2363 = vmatpush1.msra.mxu0 0.0
    %2364 = vmatprep.subr.mxu0 0.0
    %2365 = vmatpush1.msra.mxu0 0.0
    %2366 = vmatprep.subr.mxu0 0.0
    %2367 = vmatpush1.msra.mxu0 %v1375
    %2368 = vmatprep.subr.mxu0 0.0
    %2369 = vmatpush1.msra.mxu0 %v1370
    %2370 = vmatprep.subr.mxu0 0.0
    %2371 = vmatpush1.msra.mxu0 %v1365
    %2372 = vmatprep.subr.mxu0 0.0
    %2373 = vmatpush1.msra.mxu0 %v1360
    %2374 = vmatprep.subr.mxu0 0.0
    %2375 = vmatpush1.msra.mxu0 %v795
    %2376 = vmatprep.subr.mxu0 0.0
    %2377 = vmatpush1.msra.mxu0 %v790
    %2378 = vmatprep.subr.mxu0 0.0
    %2379 = vmatpush1.msra.mxu0 %v785
    %2380 = vmatprep.subr.mxu0 0.0
    %2381 = vmatpush1.msra.mxu0 %v780
    %2382 = vmatprep.subr.mxu0 0.0
    %2383 = vmatpush2.msra.mxu0 0.0
    %2384 = vmatprep.subr.mxu0 0.0
    %2385 = vmatpush2.msra.mxu0 0.0
    %2386 = vmatprep.subr.mxu0 0.0
    %2387 = vmatpush2.msra.mxu0 0.0
    %2388 = vmatprep.subr.mxu0 0.0
    %2389 = vmatpush2.msra.mxu0 0.0
    %2390 = vmatprep.subr.mxu0 0.0
    %2391 = vmatpush2.msra.mxu0 0.0
    %2392 = vmatprep.subr.mxu0 0.0
    %2393 = vmatpush2.msra.mxu0 0.0
    %2394 = vmatprep.subr.mxu0 0.0
    %2395 = vmatpush2.msra.mxu0 0.0
    %2396 = vmatprep.subr.mxu0 0.0
    %2397 = vmatpush2.msra.mxu0 0.0
    %2398 = vmatprep.subr.mxu0 0.0
    %2399 = vmatpush2.msra.mxu0 0.0
    %2400 = vmatprep.subr.mxu0 0.0
    %2401 = vmatpush2.msra.mxu0 0.0
    %2402 = vmatprep.subr.mxu0 0.0
    %2403 = vmatpush2.msra.mxu0 0.0
    %2404 = vmatprep.subr.mxu0 0.0
    %2405 = vmatpush2.msra.mxu0 0.0
    %2406 = vmatprep.subr.mxu0 0.0
    %2407 = vmatpush2.msra.mxu0 0.0
    %2408 = vmatprep.subr.mxu0 0.0
    %2409 = vmatpush2.msra.mxu0 0.0
    %2410 = vmatprep.subr.mxu0 0.0
    %2411 = vmatpush2.msra.mxu0 0.0
    %2412 = vmatprep.subr.mxu0 0.0
    %2413 = vmatpush2.msra.mxu0 0.0
    %2414 = vmatprep.mubr.f32.mxu0 0.0
    %2415 = vmatmul.mubr.f32.gmra.mxu0 %v2348
    %v2416 = vpop.f32.mrf.mxu0
    %v2417 = vadd.f32 0.0, %v2416
    %v2418 = vpop.f32.mrf.mxu0
    %2419 = vdwg.mxu0
    %v2421 = vsel %vm1470, %v1467, 0
    %2423 = vmatprep.subr.mxu0 0.0
    %2424 = vmatpush1.msra.mxu0 0.0
    %2425 = vmatprep.subr.mxu0 0.0
    %2426 = vmatpush1.msra.mxu0 0.0
    %2427 = vmatprep.subr.mxu0 0.0
    %2428 = vmatpush1.msra.mxu0 0.0
    %2429 = vmatprep.subr.mxu0 0.0
    %2430 = vmatpush1.msra.mxu0 0.0
    %2431 = vmatprep.subr.mxu0 0.0
    %2432 = vmatpush1.msra.mxu0 0.0
    %2433 = vmatprep.subr.mxu0 0.0
    %2434 = vmatpush1.msra.mxu0 0.0
    %2435 = vmatprep.subr.mxu0 0.0
    %2436 = vmatpush1.msra.mxu0 0.0
    %2437 = vmatprep.subr.mxu0 0.0
    %2438 = vmatpush1.msra.mxu0 0.0
    %2439 = vmatprep.subr.mxu0 0.0
    %2440 = vmatpush1.msra.mxu0 %v1395
    %2441 = vmatprep.subr.mxu0 0.0
    %2442 = vmatpush1.msra.mxu0 %v1390
    %2443 = vmatprep.subr.mxu0 0.0
    %2444 = vmatpush1.msra.mxu0 %v1385
    %2445 = vmatprep.subr.mxu0 0.0
    %2446 = vmatpush1.msra.mxu0 %v1380
    %2447 = vmatprep.subr.mxu0 0.0
    %2448 = vmatpush1.msra.mxu0 %v815
    %2449 = vmatprep.subr.mxu0 0.0
    %2450 = vmatpush1.msra.mxu0 %v810
    %2451 = vmatprep.subr.mxu0 0.0
    %2452 = vmatpush1.msra.mxu0 %v805
    %2453 = vmatprep.subr.mxu0 0.0
    %2454 = vmatpush1.msra.mxu0 %v800
    %2455 = vmatprep.subr.mxu0 0.0
    %2456 = vmatpush2.msra.mxu0 0.0
    %2457 = vmatprep.subr.mxu0 0.0
    %2458 = vmatpush2.msra.mxu0 0.0
    %2459 = vmatprep.subr.mxu0 0.0
    %2460 = vmatpush2.msra.mxu0 0.0
    %2461 = vmatprep.subr.mxu0 0.0
    %2462 = vmatpush2.msra.mxu0 0.0
    %2463 = vmatprep.subr.mxu0 0.0
    %2464 = vmatpush2.msra.mxu0 0.0
    %2465 = vmatprep.subr.mxu0 0.0
    %2466 = vmatpush2.msra.mxu0 0.0
    %2467 = vmatprep.subr.mxu0 0.0
    %2468 = vmatpush2.msra.mxu0 0.0
    %2469 = vmatprep.subr.mxu0 0.0
    %2470 = vmatpush2.msra.mxu0 0.0
    %2471 = vmatprep.subr.mxu0 0.0
    %2472 = vmatpush2.msra.mxu0 0.0
    %2473 = vmatprep.subr.mxu0 0.0
    %2474 = vmatpush2.msra.mxu0 0.0
    %2475 = vmatprep.subr.mxu0 0.0
    %2476 = vmatpush2.msra.mxu0 0.0
    %2477 = vmatprep.subr.mxu0 0.0
    %2478 = vmatpush2.msra.mxu0 0.0
    %2479 = vmatprep.subr.mxu0 0.0
    %2480 = vmatpush2.msra.mxu0 0.0
    %2481 = vmatprep.subr.mxu0 0.0
    %2482 = vmatpush2.msra.mxu0 0.0
    %2483 = vmatprep.subr.mxu0 0.0
    %2484 = vmatpush2.msra.mxu0 0.0
    %2485 = vmatprep.subr.mxu0 0.0
    %2486 = vmatpush2.msra.mxu0 0.0
    %2487 = vmatprep.mubr.f32.mxu0 0.0
    %2488 = vmatmul.mubr.f32.gmra.mxu0 %v2421
    %v2489 = vpop.f32.mrf.mxu0
    %v2490 = vadd.f32 0.0, %v2489
    %v2491 = vpop.f32.mrf.mxu0
    %2492 = vdwg.mxu0
    %v2494 = vsel %vm1470, %v1468, 0
    %2496 = vmatprep.subr.mxu0 0.0
    %2497 = vmatpush1.msra.mxu0 0.0
    %2498 = vmatprep.subr.mxu0 0.0
    %2499 = vmatpush1.msra.mxu0 0.0
    %2500 = vmatprep.subr.mxu0 0.0
    %2501 = vmatpush1.msra.mxu0 0.0
    %2502 = vmatprep.subr.mxu0 0.0
    %2503 = vmatpush1.msra.mxu0 0.0
    %2504 = vmatprep.subr.mxu0 0.0
    %2505 = vmatpush1.msra.mxu0 0.0
    %2506 = vmatprep.subr.mxu0 0.0
    %2507 = vmatpush1.msra.mxu0 0.0
    %2508 = vmatprep.subr.mxu0 0.0
    %2509 = vmatpush1.msra.mxu0 0.0
    %2510 = vmatprep.subr.mxu0 0.0
    %2511 = vmatpush1.msra.mxu0 0.0
    %2512 = vmatprep.subr.mxu0 0.0
    %2513 = vmatpush1.msra.mxu0 %v1415
    %2514 = vmatprep.subr.mxu0 0.0
    %2515 = vmatpush1.msra.mxu0 %v1410
    %2516 = vmatprep.subr.mxu0 0.0
    %2517 = vmatpush1.msra.mxu0 %v1405
    %2518 = vmatprep.subr.mxu0 0.0
    %2519 = vmatpush1.msra.mxu0 %v1400
    %2520 = vmatprep.subr.mxu0 0.0
    %2521 = vmatpush1.msra.mxu0 %v835
    %2522 = vmatprep.subr.mxu0 0.0
    %2523 = vmatpush1.msra.mxu0 %v830
    %2524 = vmatprep.subr.mxu0 0.0
    %2525 = vmatpush1.msra.mxu0 %v825
    %2526 = vmatprep.subr.mxu0 0.0
    %2527 = vmatpush1.msra.mxu0 %v820
    %2528 = vmatprep.subr.mxu0 0.0
    %2529 = vmatpush2.msra.mxu0 0.0
    %2530 = vmatprep.subr.mxu0 0.0
    %2531 = vmatpush2.msra.mxu0 0.0
    %2532 = vmatprep.subr.mxu0 0.0
    %2533 = vmatpush2.msra.mxu0 0.0
    %2534 = vmatprep.subr.mxu0 0.0
    %2535 = vmatpush2.msra.mxu0 0.0
    %2536 = vmatprep.subr.mxu0 0.0
    %2537 = vmatpush2.msra.mxu0 0.0
    %2538 = vmatprep.subr.mxu0 0.0
    %2539 = vmatpush2.msra.mxu0 0.0
    %2540 = vmatprep.subr.mxu0 0.0
    %2541 = vmatpush2.msra.mxu0 0.0
    %2542 = vmatprep.subr.mxu0 0.0
    %2543 = vmatpush2.msra.mxu0 0.0
    %2544 = vmatprep.subr.mxu0 0.0
    %2545 = vmatpush2.msra.mxu0 0.0
    %2546 = vmatprep.subr.mxu0 0.0
    %2547 = vmatpush2.msra.mxu0 0.0
    %2548 = vmatprep.subr.mxu0 0.0
    %2549 = vmatpush2.msra.mxu0 0.0
    %2550 = vmatprep.subr.mxu0 0.0
    %2551 = vmatpush2.msra.mxu0 0.0
    %2552 = vmatprep.subr.mxu0 0.0
    %2553 = vmatpush2.msra.mxu0 0.0
    %2554 = vmatprep.subr.mxu0 0.0
    %2555 = vmatpush2.msra.mxu0 0.0
    %2556 = vmatprep.subr.mxu0 0.0
    %2557 = vmatpush2.msra.mxu0 0.0
    %2558 = vmatprep.subr.mxu0 0.0
    %2559 = vmatpush2.msra.mxu0 0.0
    %2560 = vmatprep.mubr.f32.mxu0 0.0
    %2561 = vmatmul.mubr.f32.gmra.mxu0 %v2494
    %v2562 = vpop.f32.mrf.mxu0
    %v2563 = vadd.f32 0.0, %v2562
    %v2564 = vpop.f32.mrf.mxu0
    %2565 = vdwg.mxu0
    %v2567 = vsel %vm1470, %v1469, 0
    %2569 = vmatprep.subr.mxu0 0.0
    %2570 = vmatpush1.msra.mxu0 0.0
    %2571 = vmatprep.subr.mxu0 0.0
    %2572 = vmatpush1.msra.mxu0 0.0
    %2573 = vmatprep.subr.mxu0 0.0
    %2574 = vmatpush1.msra.mxu0 0.0
    %2575 = vmatprep.subr.mxu0 0.0
    %2576 = vmatpush1.msra.mxu0 0.0
    %2577 = vmatprep.subr.mxu0 0.0
    %2578 = vmatpush1.msra.mxu0 0.0
    %2579 = vmatprep.subr.mxu0 0.0
    %2580 = vmatpush1.msra.mxu0 0.0
    %2581 = vmatprep.subr.mxu0 0.0
    %2582 = vmatpush1.msra.mxu0 0.0
    %2583 = vmatprep.subr.mxu0 0.0
    %2584 = vmatpush1.msra.mxu0 0.0
    %2585 = vmatprep.subr.mxu0 0.0
    %2586 = vmatpush1.msra.mxu0 %v1435
    %2587 = vmatprep.subr.mxu0 0.0
    %2588 = vmatpush1.msra.mxu0 %v1430
    %2589 = vmatprep.subr.mxu0 0.0
    %2590 = vmatpush1.msra.mxu0 %v1425
    %2591 = vmatprep.subr.mxu0 0.0
    %2592 = vmatpush1.msra.mxu0 %v1420
    %2593 = vmatprep.subr.mxu0 0.0
    %2594 = vmatpush1.msra.mxu0 %v855
    %2595 = vmatprep.subr.mxu0 0.0
    %2596 = vmatpush1.msra.mxu0 %v850
    %2597 = vmatprep.subr.mxu0 0.0
    %2598 = vmatpush1.msra.mxu0 %v845
    %2599 = vmatprep.subr.mxu0 0.0
    %2600 = vmatpush1.msra.mxu0 %v840
    %2601 = vmatprep.subr.mxu0 0.0
    %2602 = vmatpush2.msra.mxu0 0.0
    %2603 = vmatprep.subr.mxu0 0.0
    %2604 = vmatpush2.msra.mxu0 0.0
    %2605 = vmatprep.subr.mxu0 0.0
    %2606 = vmatpush2.msra.mxu0 0.0
    %2607 = vmatprep.subr.mxu0 0.0
    %2608 = vmatpush2.msra.mxu0 0.0
    %2609 = vmatprep.subr.mxu0 0.0
    %2610 = vmatpush2.msra.mxu0 0.0
    %2611 = vmatprep.subr.mxu0 0.0
    %2612 = vmatpush2.msra.mxu0 0.0
    %2613 = vmatprep.subr.mxu0 0.0
    %2614 = vmatpush2.msra.mxu0 0.0
    %2615 = vmatprep.subr.mxu0 0.0
    %2616 = vmatpush2.msra.mxu0 0.0
    %2617 = vmatprep.subr.mxu0 0.0
    %2618 = vmatpush2.msra.mxu0 0.0
    %2619 = vmatprep.subr.mxu0 0.0
    %2620 = vmatpush2.msra.mxu0 0.0
    %2621 = vmatprep.subr.mxu0 0.0
    %2622 = vmatpush2.msra.mxu0 0.0
    %2623 = vmatprep.subr.mxu0 0.0
    %2624 = vmatpush2.msra.mxu0 0.0
    %2625 = vmatprep.subr.mxu0 0.0
    %2626 = vmatpush2.msra.mxu0 0.0
    %2627 = vmatprep.subr.mxu0 0.0
    %2628 = vmatpush2.msra.mxu0 0.0
    %2629 = vmatprep.subr.mxu0 0.0
    %2630 = vmatpush2.msra.mxu0 0.0
    %2631 = vmatprep.subr.mxu0 0.0
    %2632 = vmatpush2.msra.mxu0 0.0
    %2633 = vmatprep.mubr.f32.mxu0 0.0
    %2634 = vmatmul.mubr.f32.gmra.mxu0 %v2567
    %v2635 = vpop.f32.mrf.mxu0
    %v2636 = vadd.f32 0.0, %v2635
    %v2637 = vpop.f32.mrf.mxu0
    %2638 = vdwg.mxu0
    %v2639 = vld [vmem:[%s2] sm:$0xff]
    %v2640 = vld [vmem:[%s2 + $0x8] sm:$0xff]
    %v2641 = vld [vmem:[%s2 + $0x10] sm:$0xff]
    %v2642 = vld [vmem:[%s2 + $0x18] sm:$0xff]
    %v2643 = vld [vmem:[%s2 + $0x20] sm:$0xff]
    %v2644 = vld [vmem:[%s2 + $0x28] sm:$0xff]
    %v2645 = vld [vmem:[%s2 + $0x30] sm:$0xff]
    %v2646 = vld [vmem:[%s2 + $0x38] sm:$0xff]
    %v2647 = vld [vmem:[%s2 + $0x40] sm:$0xff]
    %v2648 = vld [vmem:[%s2 + $0x48] sm:$0xff]
    %v2649 = vld [vmem:[%s2 + $0x50] sm:$0xff]
    %v2650 = vld [vmem:[%s2 + $0x58] sm:$0xff]
    %v2651 = vld [vmem:[%s2 + $0x60] sm:$0xff]
    %v2652 = vld [vmem:[%s2 + $0x68] sm:$0xff]
    %v2653 = vld [vmem:[%s2 + $0x70] sm:$0xff]
    %v2654 = vld [vmem:[%s2 + $0x78] sm:$0xff]
    %s2655 = scalar_lea.vmem %s3, 32
    %v2656 = vld [vmem:[%s2655] sm:$0xff]
    %v2657 = vld [vmem:[%s2655 + $0x8] sm:$0xff]
    %v2658 = vld [vmem:[%s4] sm:$0x1]
    %v2660 = vsel %vm280, %v2639, 0
    %v2663 = vsel %vm280, %v2640, 0
    %v2666 = vsel %vm280, %v2641, 0
    %v2669 = vsel %vm280, %v2642, 0
    %v2672 = vsel %vm280, %v2643, 0
    %v2675 = vsel %vm280, %v2644, 0
    %v2678 = vsel %vm280, %v2645, 0
    %v2681 = vsel %vm280, %v2646, 0
    %v2684 = vsel %vm280, %v2647, 0
    %v2687 = vsel %vm280, %v2648, 0
    %v2690 = vsel %vm280, %v2649, 0
    %v2693 = vsel %vm280, %v2650, 0
    %v2696 = vsel %vm280, %v2651, 0
    %v2699 = vsel %vm280, %v2652, 0
    %v2702 = vsel %vm280, %v2653, 0
    %v2705 = vsel %vm280, %v2654, 0
    %2707 = vmatprep.subr.mxu0 0.0
    %2708 = vmatpush1.msra.mxu0 0.0
    %2709 = vmatprep.subr.mxu0 0.0
    %2710 = vmatpush1.msra.mxu0 0.0
    %2711 = vmatprep.subr.mxu0 0.0
    %2712 = vmatpush1.msra.mxu0 0.0
    %2713 = vmatprep.subr.mxu0 0.0
    %2714 = vmatpush1.msra.mxu0 0.0
    %2715 = vmatprep.subr.mxu0 0.0
    %2716 = vmatpush1.msra.mxu0 0.0
    %2717 = vmatprep.subr.mxu0 0.0
    %2718 = vmatpush1.msra.mxu0 0.0
    %2719 = vmatprep.subr.mxu0 0.0
    %2720 = vmatpush1.msra.mxu0 0.0
    %2721 = vmatprep.subr.mxu0 0.0
    %2722 = vmatpush1.msra.mxu0 0.0
    %2723 = vmatprep.subr.mxu0 0.0
    %2724 = vmatpush1.msra.mxu0 0.0
    %2725 = vmatprep.subr.mxu0 0.0
    %2726 = vmatpush1.msra.mxu0 0.0
    %2727 = vmatprep.subr.mxu0 0.0
    %2728 = vmatpush1.msra.mxu0 0.0
    %2729 = vmatprep.subr.mxu0 0.0
    %2730 = vmatpush1.msra.mxu0 0.0
    %2731 = vmatprep.subr.mxu0 0.0
    %2732 = vmatpush1.msra.mxu0 0.0
    %2733 = vmatprep.subr.mxu0 0.0
    %2734 = vmatpush1.msra.mxu0 0.0
    %2735 = vmatprep.subr.mxu0 0.0
    %2736 = vmatpush1.msra.mxu0 %v2657
    %2737 = vmatprep.subr.mxu0 0.0
    %2738 = vmatpush1.msra.mxu0 %v2656
    %2739 = vmatprep.subr.mxu0 0.0
    %2740 = vmatpush2.msra.mxu0 0.0
    %2741 = vmatprep.subr.mxu0 0.0
    %2742 = vmatpush2.msra.mxu0 0.0
    %2743 = vmatprep.subr.mxu0 0.0
    %2744 = vmatpush2.msra.mxu0 0.0
    %2745 = vmatprep.subr.mxu0 0.0
    %2746 = vmatpush2.msra.mxu0 0.0
    %2747 = vmatprep.subr.mxu0 0.0
    %2748 = vmatpush2.msra.mxu0 0.0
    %2749 = vmatprep.subr.mxu0 0.0
    %2750 = vmatpush2.msra.mxu0 0.0
    %2751 = vmatprep.subr.mxu0 0.0
    %2752 = vmatpush2.msra.mxu0 0.0
    %2753 = vmatprep.subr.mxu0 0.0
    %2754 = vmatpush2.msra.mxu0 0.0
    %2755 = vmatprep.subr.mxu0 0.0
    %2756 = vmatpush2.msra.mxu0 0.0
    %2757 = vmatprep.subr.mxu0 0.0
    %2758 = vmatpush2.msra.mxu0 0.0
    %2759 = vmatprep.subr.mxu0 0.0
    %2760 = vmatpush2.msra.mxu0 0.0
    %2761 = vmatprep.subr.mxu0 0.0
    %2762 = vmatpush2.msra.mxu0 0.0
    %2763 = vmatprep.subr.mxu0 0.0
    %2764 = vmatpush2.msra.mxu0 0.0
    %2765 = vmatprep.subr.mxu0 0.0
    %2766 = vmatpush2.msra.mxu0 0.0
    %2767 = vmatprep.subr.mxu0 0.0
    %2768 = vmatpush2.msra.mxu0 0.0
    %2769 = vmatprep.subr.mxu0 0.0
    %2770 = vmatpush2.msra.mxu0 0.0
    %2771 = vmatprep.mubr.f32.mxu0 0.0
    %2772 = vmatmul.mubr.f32.gmra.mxu0 %v2660
    %v2773 = vpop.f32.mrf.mxu0
    %v2774 = vadd.f32 0.0, %v2773
    %v2775 = vpop.f32.mrf.mxu0
    %2776 = vmatprep.mubr.f32.mxu0 0.0
    %2777 = vmatmul.mubr.f32.gmra.mxu0 %v2663
    %v2778 = vpop.f32.mrf.mxu0
    %v2779 = vadd.f32 0.0, %v2778
    %v2780 = vpop.f32.mrf.mxu0
    %2781 = vmatprep.mubr.f32.mxu0 0.0
    %2782 = vmatmul.mubr.f32.gmra.mxu0 %v2666
    %v2783 = vpop.f32.mrf.mxu0
    %v2784 = vadd.f32 0.0, %v2783
    %v2785 = vpop.f32.mrf.mxu0
    %2786 = vmatprep.mubr.f32.mxu0 0.0
    %2787 = vmatmul.mubr.f32.gmra.mxu0 %v2669
    %v2788 = vpop.f32.mrf.mxu0
    %v2789 = vadd.f32 0.0, %v2788
    %v2790 = vpop.f32.mrf.mxu0
    %2791 = vmatprep.mubr.f32.mxu0 0.0
    %2792 = vmatmul.mubr.f32.gmra.mxu0 %v2672
    %v2793 = vpop.f32.mrf.mxu0
    %v2794 = vadd.f32 0.0, %v2793
    %v2795 = vpop.f32.mrf.mxu0
    %2796 = vmatprep.mubr.f32.mxu0 0.0
    %2797 = vmatmul.mubr.f32.gmra.mxu0 %v2675
    %v2798 = vpop.f32.mrf.mxu0
    %v2799 = vadd.f32 0.0, %v2798
    %v2800 = vpop.f32.mrf.mxu0
    %2801 = vmatprep.mubr.f32.mxu0 0.0
    %2802 = vmatmul.mubr.f32.gmra.mxu0 %v2678
    %v2803 = vpop.f32.mrf.mxu0
    %v2804 = vadd.f32 0.0, %v2803
    %v2805 = vpop.f32.mrf.mxu0
    %2806 = vmatprep.mubr.f32.mxu0 0.0
    %2807 = vmatmul.mubr.f32.gmra.mxu0 %v2681
    %v2808 = vpop.f32.mrf.mxu0
    %v2809 = vadd.f32 0.0, %v2808
    %v2810 = vpop.f32.mrf.mxu0
    %2811 = vmatprep.mubr.f32.mxu0 0.0
    %2812 = vmatmul.mubr.f32.gmra.mxu0 %v2684
    %v2813 = vpop.f32.mrf.mxu0
    %v2814 = vadd.f32 0.0, %v2813
    %v2815 = vpop.f32.mrf.mxu0
    %2816 = vmatprep.mubr.f32.mxu0 0.0
    %2817 = vmatmul.mubr.f32.gmra.mxu0 %v2687
    %v2818 = vpop.f32.mrf.mxu0
    %v2819 = vadd.f32 0.0, %v2818
    %v2820 = vpop.f32.mrf.mxu0
    %2821 = vmatprep.mubr.f32.mxu0 0.0
    %2822 = vmatmul.mubr.f32.gmra.mxu0 %v2690
    %v2823 = vpop.f32.mrf.mxu0
    %v2824 = vadd.f32 0.0, %v2823
    %v2825 = vpop.f32.mrf.mxu0
    %2826 = vmatprep.mubr.f32.mxu0 0.0
    %2827 = vmatmul.mubr.f32.gmra.mxu0 %v2693
    %v2828 = vpop.f32.mrf.mxu0
    %v2829 = vadd.f32 0.0, %v2828
    %v2830 = vpop.f32.mrf.mxu0
    %2831 = vmatprep.mubr.f32.mxu0 0.0
    %2832 = vmatmul.mubr.f32.gmra.mxu0 %v2696
    %v2833 = vpop.f32.mrf.mxu0
    %v2834 = vadd.f32 0.0, %v2833
    %v2835 = vpop.f32.mrf.mxu0
    %2836 = vmatprep.mubr.f32.mxu0 0.0
    %2837 = vmatmul.mubr.f32.gmra.mxu0 %v2699
    %v2838 = vpop.f32.mrf.mxu0
    %v2839 = vadd.f32 0.0, %v2838
    %v2840 = vpop.f32.mrf.mxu0
    %2841 = vmatprep.mubr.f32.mxu0 0.0
    %2842 = vmatmul.mubr.f32.gmra.mxu0 %v2702
    %v2843 = vpop.f32.mrf.mxu0
    %v2844 = vadd.f32 0.0, %v2843
    %v2845 = vpop.f32.mrf.mxu0
    %2846 = vmatprep.mubr.f32.mxu0 0.0
    %2847 = vmatmul.mubr.f32.gmra.mxu0 %v2705
    %v2848 = vpop.f32.mrf.mxu0
    %v2849 = vadd.f32 0.0, %v2848
    %v2850 = vpop.f32.mrf.mxu0
    %2851 = vdwg.mxu0
    %v2852 = vadd.f32 %v1541, %v2774
    %v2853 = vadd.f32 %v1614, %v2779
    %v2854 = vadd.f32 %v1687, %v2784
    %v2855 = vadd.f32 %v1760, %v2789
    %v2856 = vadd.f32 %v1833, %v2794
    %v2857 = vadd.f32 %v1906, %v2799
    %v2858 = vadd.f32 %v1979, %v2804
    %v2859 = vadd.f32 %v2052, %v2809
    %v2860 = vadd.f32 %v2125, %v2814
    %v2861 = vadd.f32 %v2198, %v2819
    %v2862 = vadd.f32 %v2271, %v2824
    %v2863 = vadd.f32 %v2344, %v2829
    %v2864 = vadd.f32 %v2417, %v2834
    %v2865 = vadd.f32 %v2490, %v2839
    %v2866 = vadd.f32 %v2563, %v2844
    %v2867 = vadd.f32 %v2636, %v2849
    %v2869 = vlaneseq
    %v2870 = vshrl.u32 %v2869, 7
    %v2871 = vsub.s32 0, %v2870
    %v2872 = vrot.slane %v2658, %v2871
    %v2874 = vadd.f32 %v2852, %v2872
    %v2875 = vadd.f32 %v2853, %v2872
    %v2876 = vadd.f32 %v2854, %v2872
    %v2877 = vadd.f32 %v2855, %v2872
    %v2878 = vadd.f32 %v2856, %v2872
    %v2879 = vadd.f32 %v2857, %v2872
    %v2880 = vadd.f32 %v2858, %v2872
    %v2881 = vadd.f32 %v2859, %v2872
    %v2882 = vadd.f32 %v2860, %v2872
    %v2883 = vadd.f32 %v2861, %v2872
    %v2884 = vadd.f32 %v2862, %v2872
    %v2885 = vadd.f32 %v2863, %v2872
    %v2886 = vadd.f32 %v2864, %v2872
    %v2887 = vadd.f32 %v2865, %v2872
    %v2888 = vadd.f32 %v2866, %v2872
    %v2889 = vadd.f32 %v2867, %v2872
    %v2890 = vxor.u32 %v2874, 2147483648
    %v2891 = vxor.u32 %v2875, 2147483648
    %v2892 = vxor.u32 %v2876, 2147483648
    %v2893 = vxor.u32 %v2877, 2147483648
    %v2894 = vxor.u32 %v2878, 2147483648
    %v2895 = vxor.u32 %v2879, 2147483648
    %v2896 = vxor.u32 %v2880, 2147483648
    %v2897 = vxor.u32 %v2881, 2147483648
    %v2898 = vxor.u32 %v2882, 2147483648
    %v2899 = vxor.u32 %v2883, 2147483648
    %v2900 = vxor.u32 %v2884, 2147483648
    %v2901 = vxor.u32 %v2885, 2147483648
    %v2902 = vxor.u32 %v2886, 2147483648
    %v2903 = vxor.u32 %v2887, 2147483648
    %v2904 = vxor.u32 %v2888, 2147483648
    %v2905 = vxor.u32 %v2889, 2147483648
    %v2906 = vmul.f32 %v2890, 1.442695
    %v2907 = vpow.pop %v2906
    %v2908 = vmul.f32 %v2891, 1.442695
    %v2909 = vpow.pop %v2908
    %v2910 = vmul.f32 %v2892, 1.442695
    %v2911 = vpow.pop %v2910
    %v2912 = vmul.f32 %v2893, 1.442695
    %v2913 = vpow.pop %v2912
    %v2914 = vmul.f32 %v2894, 1.442695
    %v2915 = vpow.pop %v2914
    %v2916 = vmul.f32 %v2895, 1.442695
    %v2917 = vpow.pop %v2916
    %v2918 = vmul.f32 %v2896, 1.442695
    %v2919 = vpow.pop %v2918
    %v2920 = vmul.f32 %v2897, 1.442695
    %v2921 = vpow.pop %v2920
    %v2922 = vmul.f32 %v2898, 1.442695
    %v2923 = vpow.pop %v2922
    %v2924 = vmul.f32 %v2899, 1.442695
    %v2925 = vpow.pop %v2924
    %v2926 = vmul.f32 %v2900, 1.442695
    %v2927 = vpow.pop %v2926
    %v2928 = vmul.f32 %v2901, 1.442695
    %v2929 = vpow.pop %v2928
    %v2930 = vmul.f32 %v2902, 1.442695
    %v2931 = vpow.pop %v2930
    %v2932 = vmul.f32 %v2903, 1.442695
    %v2933 = vpow.pop %v2932
    %v2934 = vmul.f32 %v2904, 1.442695
    %v2935 = vpow.pop %v2934
    %v2936 = vmul.f32 %v2905, 1.442695
    %v2937 = vpow.pop %v2936
    %v2938 = vadd.f32 %v2907, 1.0
    %v2939 = vadd.f32 %v2909, 1.0
    %v2940 = vadd.f32 %v2911, 1.0
    %v2941 = vadd.f32 %v2913, 1.0
    %v2942 = vadd.f32 %v2915, 1.0
    %v2943 = vadd.f32 %v2917, 1.0
    %v2944 = vadd.f32 %v2919, 1.0
    %v2945 = vadd.f32 %v2921, 1.0
    %v2946 = vadd.f32 %v2923, 1.0
    %v2947 = vadd.f32 %v2925, 1.0
    %v2948 = vadd.f32 %v2927, 1.0
    %v2949 = vadd.f32 %v2929, 1.0
    %v2950 = vadd.f32 %v2931, 1.0
    %v2951 = vadd.f32 %v2933, 1.0
    %v2952 = vadd.f32 %v2935, 1.0
    %v2953 = vadd.f32 %v2937, 1.0
    %v2954 = vrcp.pop %v2938
    %v2955 = vmul.f32 1.0, %v2954
    %v2956 = vrcp.pop %v2939
    %v2957 = vmul.f32 1.0, %v2956
    %v2958 = vrcp.pop %v2940
    %v2959 = vmul.f32 1.0, %v2958
    %v2960 = vrcp.pop %v2941
    %v2961 = vmul.f32 1.0, %v2960
    %v2962 = vrcp.pop %v2942
    %v2963 = vmul.f32 1.0, %v2962
    %v2964 = vrcp.pop %v2943
    %v2965 = vmul.f32 1.0, %v2964
    %v2966 = vrcp.pop %v2944
    %v2967 = vmul.f32 1.0, %v2966
    %v2968 = vrcp.pop %v2945
    %v2969 = vmul.f32 1.0, %v2968
    %v2970 = vrcp.pop %v2946
    %v2971 = vmul.f32 1.0, %v2970
    %v2972 = vrcp.pop %v2947
    %v2973 = vmul.f32 1.0, %v2972
    %v2974 = vrcp.pop %v2948
    %v2975 = vmul.f32 1.0, %v2974
    %v2976 = vrcp.pop %v2949
    %v2977 = vmul.f32 1.0, %v2976
    %v2978 = vrcp.pop %v2950
    %v2979 = vmul.f32 1.0, %v2978
    %v2980 = vrcp.pop %v2951
    %v2981 = vmul.f32 1.0, %v2980
    %v2982 = vrcp.pop %v2952
    %v2983 = vmul.f32 1.0, %v2982
    %v2984 = vrcp.pop %v2953
    %v2985 = vmul.f32 1.0, %v2984
    %2986 = vrot.lane.b32.xlu0 %v2639, 16
    %v2987 = vpop.permute.xlu0 %2986
    %2988 = vrot.lane.b32.xlu0 %v2640, 16
    %v2989 = vpop.permute.xlu0 %2988
    %2990 = vrot.lane.b32.xlu0 %v2641, 16
    %v2991 = vpop.permute.xlu0 %2990
    %2992 = vrot.lane.b32.xlu0 %v2642, 16
    %v2993 = vpop.permute.xlu0 %2992
    %2994 = vrot.lane.b32.xlu0 %v2643, 16
    %v2995 = vpop.permute.xlu0 %2994
    %2996 = vrot.lane.b32.xlu0 %v2644, 16
    %v2997 = vpop.permute.xlu0 %2996
    %2998 = vrot.lane.b32.xlu0 %v2645, 16
    %v2999 = vpop.permute.xlu0 %2998
    %3000 = vrot.lane.b32.xlu0 %v2646, 16
    %v3001 = vpop.permute.xlu0 %3000
    %3002 = vrot.lane.b32.xlu0 %v2647, 16
    %v3003 = vpop.permute.xlu0 %3002
    %3004 = vrot.lane.b32.xlu0 %v2648, 16
    %v3005 = vpop.permute.xlu0 %3004
    %3006 = vrot.lane.b32.xlu0 %v2649, 16
    %v3007 = vpop.permute.xlu0 %3006
    %3008 = vrot.lane.b32.xlu0 %v2650, 16
    %v3009 = vpop.permute.xlu0 %3008
    %3010 = vrot.lane.b32.xlu0 %v2651, 16
    %v3011 = vpop.permute.xlu0 %3010
    %3012 = vrot.lane.b32.xlu0 %v2652, 16
    %v3013 = vpop.permute.xlu0 %3012
    %3014 = vrot.lane.b32.xlu0 %v2653, 16
    %v3015 = vpop.permute.xlu0 %3014
    %3016 = vrot.lane.b32.xlu0 %v2654, 16
    %v3017 = vpop.permute.xlu0 %3016
    %v3034 = vmul.f32 %v2955, %v2987
    %v3035 = vmul.f32 %v2957, %v2989
    %v3036 = vmul.f32 %v2959, %v2991
    %v3037 = vmul.f32 %v2961, %v2993
    %v3038 = vmul.f32 %v2963, %v2995
    %v3039 = vmul.f32 %v2965, %v2997
    %v3040 = vmul.f32 %v2967, %v2999
    %v3041 = vmul.f32 %v2969, %v3001
    %v3042 = vmul.f32 %v2971, %v3003
    %v3043 = vmul.f32 %v2973, %v3005
    %v3044 = vmul.f32 %v2975, %v3007
    %v3045 = vmul.f32 %v2977, %v3009
    %v3046 = vmul.f32 %v2979, %v3011
    %v3047 = vmul.f32 %v2981, %v3013
    %v3048 = vmul.f32 %v2983, %v3015
    %v3049 = vmul.f32 %v2985, %v3017
    %3066 = vrot.lane.b32.xlu0 %v3034, 112
    %v3067 = vpop.permute.xlu0 %3066
    %3068 = vrot.lane.b32.xlu0 %v3035, 112
    %v3069 = vpop.permute.xlu0 %3068
    %3070 = vrot.lane.b32.xlu0 %v3036, 112
    %v3071 = vpop.permute.xlu0 %3070
    %3072 = vrot.lane.b32.xlu0 %v3037, 112
    %v3073 = vpop.permute.xlu0 %3072
    %3074 = vrot.lane.b32.xlu0 %v3038, 112
    %v3075 = vpop.permute.xlu0 %3074
    %3076 = vrot.lane.b32.xlu0 %v3039, 112
    %v3077 = vpop.permute.xlu0 %3076
    %3078 = vrot.lane.b32.xlu0 %v3040, 112
    %v3079 = vpop.permute.xlu0 %3078
    %3080 = vrot.lane.b32.xlu0 %v3041, 112
    %v3081 = vpop.permute.xlu0 %3080
    %3082 = vrot.lane.b32.xlu0 %v3042, 112
    %v3083 = vpop.permute.xlu0 %3082
    %3084 = vrot.lane.b32.xlu0 %v3043, 112
    %v3085 = vpop.permute.xlu0 %3084
    %3086 = vrot.lane.b32.xlu0 %v3044, 112
    %v3087 = vpop.permute.xlu0 %3086
    %3088 = vrot.lane.b32.xlu0 %v3045, 112
    %v3089 = vpop.permute.xlu0 %3088
    %3090 = vrot.lane.b32.xlu0 %v3046, 112
    %v3091 = vpop.permute.xlu0 %3090
    %3092 = vrot.lane.b32.xlu0 %v3047, 112
    %v3093 = vpop.permute.xlu0 %3092
    %3094 = vrot.lane.b32.xlu0 %v3048, 112
    %v3095 = vpop.permute.xlu0 %3094
    %3096 = vrot.lane.b32.xlu0 %v3049, 112
    %v3097 = vpop.permute.xlu0 %3096
    %3100 = vrot.lane.b32.xlu0 %v2656, 96
    %v3101 = vpop.permute.xlu0 %3100
    %3102 = vrot.lane.b32.xlu0 %v2657, 96
    %v3103 = vpop.permute.xlu0 %3102
    %v3106 = vsel %vm280, %v3067, 0
    %v3108 = vsel %vm280, %v3069, 0
    %v3110 = vsel %vm280, %v3071, 0
    %v3112 = vsel %vm280, %v3073, 0
    %v3114 = vsel %vm280, %v3075, 0
    %v3116 = vsel %vm280, %v3077, 0
    %v3118 = vsel %vm280, %v3079, 0
    %v3120 = vsel %vm280, %v3081, 0
    %v3122 = vsel %vm280, %v3083, 0
    %v3124 = vsel %vm280, %v3085, 0
    %v3126 = vsel %vm280, %v3087, 0
    %v3128 = vsel %vm280, %v3089, 0
    %v3130 = vsel %vm280, %v3091, 0
    %v3132 = vsel %vm280, %v3093, 0
    %v3134 = vsel %vm280, %v3095, 0
    %v3136 = vsel %vm280, %v3097, 0
    %3138 = vmatprep.subr.mxu0 0.0
    %3139 = vmatpush1.msra.mxu0 0.0
    %3140 = vmatprep.subr.mxu0 0.0
    %3141 = vmatpush1.msra.mxu0 0.0
    %3142 = vmatprep.subr.mxu0 0.0
    %3143 = vmatpush1.msra.mxu0 0.0
    %3144 = vmatprep.subr.mxu0 0.0
    %3145 = vmatpush1.msra.mxu0 0.0
    %3146 = vmatprep.subr.mxu0 0.0
    %3147 = vmatpush1.msra.mxu0 0.0
    %3148 = vmatprep.subr.mxu0 0.0
    %3149 = vmatpush1.msra.mxu0 0.0
    %3150 = vmatprep.subr.mxu0 0.0
    %3151 = vmatpush1.msra.mxu0 0.0
    %3152 = vmatprep.subr.mxu0 0.0
    %3153 = vmatpush1.msra.mxu0 0.0
    %3154 = vmatprep.subr.mxu0 0.0
    %3155 = vmatpush1.msra.mxu0 0.0
    %3156 = vmatprep.subr.mxu0 0.0
    %3157 = vmatpush1.msra.mxu0 0.0
    %3158 = vmatprep.subr.mxu0 0.0
    %3159 = vmatpush1.msra.mxu0 0.0
    %3160 = vmatprep.subr.mxu0 0.0
    %3161 = vmatpush1.msra.mxu0 0.0
    %3162 = vmatprep.subr.mxu0 0.0
    %3163 = vmatpush1.msra.mxu0 0.0
    %3164 = vmatprep.subr.mxu0 0.0
    %3165 = vmatpush1.msra.mxu0 0.0
    %3166 = vmatprep.subr.mxu0 0.0
    %3167 = vmatpush1.msra.mxu0 %v3103
    %3168 = vmatprep.subr.mxu0 0.0
    %3169 = vmatpush1.msra.mxu0 %v3101
    %3170 = vmatprep.subr.mxu0 0.0
    %3171 = vmatpush2.msra.mxu0 0.0
    %3172 = vmatprep.subr.mxu0 0.0
    %3173 = vmatpush2.msra.mxu0 0.0
    %3174 = vmatprep.subr.mxu0 0.0
    %3175 = vmatpush2.msra.mxu0 0.0
    %3176 = vmatprep.subr.mxu0 0.0
    %3177 = vmatpush2.msra.mxu0 0.0
    %3178 = vmatprep.subr.mxu0 0.0
    %3179 = vmatpush2.msra.mxu0 0.0
    %3180 = vmatprep.subr.mxu0 0.0
    %3181 = vmatpush2.msra.mxu0 0.0
    %3182 = vmatprep.subr.mxu0 0.0
    %3183 = vmatpush2.msra.mxu0 0.0
    %3184 = vmatprep.subr.mxu0 0.0
    %3185 = vmatpush2.msra.mxu0 0.0
    %3186 = vmatprep.subr.mxu0 0.0
    %3187 = vmatpush2.msra.mxu0 0.0
    %3188 = vmatprep.subr.mxu0 0.0
    %3189 = vmatpush2.msra.mxu0 0.0
    %3190 = vmatprep.subr.mxu0 0.0
    %3191 = vmatpush2.msra.mxu0 0.0
    %3192 = vmatprep.subr.mxu0 0.0
    %3193 = vmatpush2.msra.mxu0 0.0
    %3194 = vmatprep.subr.mxu0 0.0
    %3195 = vmatpush2.msra.mxu0 0.0
    %3196 = vmatprep.subr.mxu0 0.0
    %3197 = vmatpush2.msra.mxu0 0.0
    %3198 = vmatprep.subr.mxu0 0.0
    %3199 = vmatpush2.msra.mxu0 0.0
    %3200 = vmatprep.subr.mxu0 0.0
    %3201 = vmatpush2.msra.mxu0 0.0
    %3202 = vmatprep.mubr.f32.mxu0 0.0
    %3203 = vmatmul.mubr.f32.gmra.mxu0 %v3106
    %v3204 = vpop.f32.mrf.mxu0
    %v3205 = vadd.f32 0.0, %v3204
    %v3206 = vpop.f32.mrf.mxu0
    %3207 = vmatprep.mubr.f32.mxu0 0.0
    %3208 = vmatmul.mubr.f32.gmra.mxu0 %v3108
    %v3209 = vpop.f32.mrf.mxu0
    %v3210 = vadd.f32 0.0, %v3209
    %v3211 = vpop.f32.mrf.mxu0
    %3212 = vmatprep.mubr.f32.mxu0 0.0
    %3213 = vmatmul.mubr.f32.gmra.mxu0 %v3110
    %v3214 = vpop.f32.mrf.mxu0
    %v3215 = vadd.f32 0.0, %v3214
    %v3216 = vpop.f32.mrf.mxu0
    %3217 = vmatprep.mubr.f32.mxu0 0.0
    %3218 = vmatmul.mubr.f32.gmra.mxu0 %v3112
    %v3219 = vpop.f32.mrf.mxu0
    %v3220 = vadd.f32 0.0, %v3219
    %v3221 = vpop.f32.mrf.mxu0
    %3222 = vmatprep.mubr.f32.mxu0 0.0
    %3223 = vmatmul.mubr.f32.gmra.mxu0 %v3114
    %v3224 = vpop.f32.mrf.mxu0
    %v3225 = vadd.f32 0.0, %v3224
    %v3226 = vpop.f32.mrf.mxu0
    %3227 = vmatprep.mubr.f32.mxu0 0.0
    %3228 = vmatmul.mubr.f32.gmra.mxu0 %v3116
    %v3229 = vpop.f32.mrf.mxu0
    %v3230 = vadd.f32 0.0, %v3229
    %v3231 = vpop.f32.mrf.mxu0
    %3232 = vmatprep.mubr.f32.mxu0 0.0
    %3233 = vmatmul.mubr.f32.gmra.mxu0 %v3118
    %v3234 = vpop.f32.mrf.mxu0
    %v3235 = vadd.f32 0.0, %v3234
    %v3236 = vpop.f32.mrf.mxu0
    %3237 = vmatprep.mubr.f32.mxu0 0.0
    %3238 = vmatmul.mubr.f32.gmra.mxu0 %v3120
    %v3239 = vpop.f32.mrf.mxu0
    %v3240 = vadd.f32 0.0, %v3239
    %v3241 = vpop.f32.mrf.mxu0
    %3242 = vmatprep.mubr.f32.mxu0 0.0
    %3243 = vmatmul.mubr.f32.gmra.mxu0 %v3122
    %v3244 = vpop.f32.mrf.mxu0
    %v3245 = vadd.f32 0.0, %v3244
    %v3246 = vpop.f32.mrf.mxu0
    %3247 = vmatprep.mubr.f32.mxu0 0.0
    %3248 = vmatmul.mubr.f32.gmra.mxu0 %v3124
    %v3249 = vpop.f32.mrf.mxu0
    %v3250 = vadd.f32 0.0, %v3249
    %v3251 = vpop.f32.mrf.mxu0
    %3252 = vmatprep.mubr.f32.mxu0 0.0
    %3253 = vmatmul.mubr.f32.gmra.mxu0 %v3126
    %v3254 = vpop.f32.mrf.mxu0
    %v3255 = vadd.f32 0.0, %v3254
    %v3256 = vpop.f32.mrf.mxu0
    %3257 = vmatprep.mubr.f32.mxu0 0.0
    %3258 = vmatmul.mubr.f32.gmra.mxu0 %v3128
    %v3259 = vpop.f32.mrf.mxu0
    %v3260 = vadd.f32 0.0, %v3259
    %v3261 = vpop.f32.mrf.mxu0
    %3262 = vmatprep.mubr.f32.mxu0 0.0
    %3263 = vmatmul.mubr.f32.gmra.mxu0 %v3130
    %v3264 = vpop.f32.mrf.mxu0
    %v3265 = vadd.f32 0.0, %v3264
    %v3266 = vpop.f32.mrf.mxu0
    %3267 = vmatprep.mubr.f32.mxu0 0.0
    %3268 = vmatmul.mubr.f32.gmra.mxu0 %v3132
    %v3269 = vpop.f32.mrf.mxu0
    %v3270 = vadd.f32 0.0, %v3269
    %v3271 = vpop.f32.mrf.mxu0
    %3272 = vmatprep.mubr.f32.mxu0 0.0
    %3273 = vmatmul.mubr.f32.gmra.mxu0 %v3134
    %v3274 = vpop.f32.mrf.mxu0
    %v3275 = vadd.f32 0.0, %v3274
    %v3276 = vpop.f32.mrf.mxu0
    %3277 = vmatprep.mubr.f32.mxu0 0.0
    %3278 = vmatmul.mubr.f32.gmra.mxu0 %v3136
    %v3279 = vpop.f32.mrf.mxu0
    %v3280 = vadd.f32 0.0, %v3279
    %v3281 = vpop.f32.mrf.mxu0
    %3282 = vdwg.mxu0
    %3299 = vrot.lane.b32.xlu0 %v3205, 32
    %v3300 = vpop.permute.xlu0 %3299
    %3301 = vrot.lane.b32.xlu0 %v3210, 32
    %v3302 = vpop.permute.xlu0 %3301
    %3303 = vrot.lane.b32.xlu0 %v3215, 32
    %v3304 = vpop.permute.xlu0 %3303
    %3305 = vrot.lane.b32.xlu0 %v3220, 32
    %v3306 = vpop.permute.xlu0 %3305
    %3307 = vrot.lane.b32.xlu0 %v3225, 32
    %v3308 = vpop.permute.xlu0 %3307
    %3309 = vrot.lane.b32.xlu0 %v3230, 32
    %v3310 = vpop.permute.xlu0 %3309
    %3311 = vrot.lane.b32.xlu0 %v3235, 32
    %v3312 = vpop.permute.xlu0 %3311
    %3313 = vrot.lane.b32.xlu0 %v3240, 32
    %v3314 = vpop.permute.xlu0 %3313
    %3315 = vrot.lane.b32.xlu0 %v3245, 32
    %v3316 = vpop.permute.xlu0 %3315
    %3317 = vrot.lane.b32.xlu0 %v3250, 32
    %v3318 = vpop.permute.xlu0 %3317
    %3319 = vrot.lane.b32.xlu0 %v3255, 32
    %v3320 = vpop.permute.xlu0 %3319
    %3321 = vrot.lane.b32.xlu0 %v3260, 32
    %v3322 = vpop.permute.xlu0 %3321
    %3323 = vrot.lane.b32.xlu0 %v3265, 32
    %v3324 = vpop.permute.xlu0 %3323
    %3325 = vrot.lane.b32.xlu0 %v3270, 32
    %v3326 = vpop.permute.xlu0 %3325
    %3327 = vrot.lane.b32.xlu0 %v3275, 32
    %v3328 = vpop.permute.xlu0 %3327
    %3329 = vrot.lane.b32.xlu0 %v3280, 32
    %v3330 = vpop.permute.xlu0 %3329
    %v3347 = vadd.f32 %v1541, %v3300
    %v3348 = vadd.f32 %v1614, %v3302
    %v3349 = vadd.f32 %v1687, %v3304
    %v3350 = vadd.f32 %v1760, %v3306
    %v3351 = vadd.f32 %v1833, %v3308
    %v3352 = vadd.f32 %v1906, %v3310
    %v3353 = vadd.f32 %v1979, %v3312
    %v3354 = vadd.f32 %v2052, %v3314
    %v3355 = vadd.f32 %v2125, %v3316
    %v3356 = vadd.f32 %v2198, %v3318
    %v3357 = vadd.f32 %v2271, %v3320
    %v3358 = vadd.f32 %v2344, %v3322
    %v3359 = vadd.f32 %v2417, %v3324
    %v3360 = vadd.f32 %v2490, %v3326
    %v3361 = vadd.f32 %v2563, %v3328
    %v3362 = vadd.f32 %v2636, %v3330
    %v3363 = vadd.f32 %v3347, %v2872
    %v3364 = vadd.f32 %v3348, %v2872
    %v3365 = vadd.f32 %v3349, %v2872
    %v3366 = vadd.f32 %v3350, %v2872
    %v3367 = vadd.f32 %v3351, %v2872
    %v3368 = vadd.f32 %v3352, %v2872
    %v3369 = vadd.f32 %v3353, %v2872
    %v3370 = vadd.f32 %v3354, %v2872
    %v3371 = vadd.f32 %v3355, %v2872
    %v3372 = vadd.f32 %v3356, %v2872
    %v3373 = vadd.f32 %v3357, %v2872
    %v3374 = vadd.f32 %v3358, %v2872
    %v3375 = vadd.f32 %v3359, %v2872
    %v3376 = vadd.f32 %v3360, %v2872
    %v3377 = vadd.f32 %v3361, %v2872
    %v3378 = vadd.f32 %v3362, %v2872
    %v3379 = vtanh.pop %v3363
    %v3380 = vtanh.pop %v3364
    %v3381 = vtanh.pop %v3365
    %v3382 = vtanh.pop %v3366
    %v3383 = vtanh.pop %v3367
    %v3384 = vtanh.pop %v3368
    %v3385 = vtanh.pop %v3369
    %v3386 = vtanh.pop %v3370
    %v3387 = vtanh.pop %v3371
    %v3388 = vtanh.pop %v3372
    %v3389 = vtanh.pop %v3373
    %v3390 = vtanh.pop %v3374
    %v3391 = vtanh.pop %v3375
    %v3392 = vtanh.pop %v3376
    %v3393 = vtanh.pop %v3377
    %v3394 = vtanh.pop %v3378
    %v3395 = vsub.f32 1.0, %v2955
    %v3396 = vsub.f32 1.0, %v2957
    %v3397 = vsub.f32 1.0, %v2959
    %v3398 = vsub.f32 1.0, %v2961
    %v3399 = vsub.f32 1.0, %v2963
    %v3400 = vsub.f32 1.0, %v2965
    %v3401 = vsub.f32 1.0, %v2967
    %v3402 = vsub.f32 1.0, %v2969
    %v3403 = vsub.f32 1.0, %v2971
    %v3404 = vsub.f32 1.0, %v2973
    %v3405 = vsub.f32 1.0, %v2975
    %v3406 = vsub.f32 1.0, %v2977
    %v3407 = vsub.f32 1.0, %v2979
    %v3408 = vsub.f32 1.0, %v2981
    %v3409 = vsub.f32 1.0, %v2983
    %v3410 = vsub.f32 1.0, %v2985
    %v3411 = vmul.f32 %v3395, %v2639
    %v3412 = vmul.f32 %v3396, %v2640
    %v3413 = vmul.f32 %v3397, %v2641
    %v3414 = vmul.f32 %v3398, %v2642
    %v3415 = vmul.f32 %v3399, %v2643
    %v3416 = vmul.f32 %v3400, %v2644
    %v3417 = vmul.f32 %v3401, %v2645
    %v3418 = vmul.f32 %v3402, %v2646
    %v3419 = vmul.f32 %v3403, %v2647
    %v3420 = vmul.f32 %v3404, %v2648
    %v3421 = vmul.f32 %v3405, %v2649
    %v3422 = vmul.f32 %v3406, %v2650
    %v3423 = vmul.f32 %v3407, %v2651
    %v3424 = vmul.f32 %v3408, %v2652
    %v3425 = vmul.f32 %v3409, %v2653
    %v3426 = vmul.f32 %v3410, %v2654
    %3443 = vrot.lane.b32.xlu0 %v3379, 96
    %v3444 = vpop.permute.xlu0 %3443
    %3445 = vrot.lane.b32.xlu0 %v3380, 96
    %v3446 = vpop.permute.xlu0 %3445
    %3447 = vrot.lane.b32.xlu0 %v3381, 96
    %v3448 = vpop.permute.xlu0 %3447
    %3449 = vrot.lane.b32.xlu0 %v3382, 96
    %v3450 = vpop.permute.xlu0 %3449
    %3451 = vrot.lane.b32.xlu0 %v3383, 96
    %v3452 = vpop.permute.xlu0 %3451
    %3453 = vrot.lane.b32.xlu0 %v3384, 96
    %v3454 = vpop.permute.xlu0 %3453
    %3455 = vrot.lane.b32.xlu0 %v3385, 96
    %v3456 = vpop.permute.xlu0 %3455
    %3457 = vrot.lane.b32.xlu0 %v3386, 96
    %v3458 = vpop.permute.xlu0 %3457
    %3459 = vrot.lane.b32.xlu0 %v3387, 96
    %v3460 = vpop.permute.xlu0 %3459
    %3461 = vrot.lane.b32.xlu0 %v3388, 96
    %v3462 = vpop.permute.xlu0 %3461
    %3463 = vrot.lane.b32.xlu0 %v3389, 96
    %v3464 = vpop.permute.xlu0 %3463
    %3465 = vrot.lane.b32.xlu0 %v3390, 96
    %v3466 = vpop.permute.xlu0 %3465
    %3467 = vrot.lane.b32.xlu0 %v3391, 96
    %v3468 = vpop.permute.xlu0 %3467
    %3469 = vrot.lane.b32.xlu0 %v3392, 96
    %v3470 = vpop.permute.xlu0 %3469
    %3471 = vrot.lane.b32.xlu0 %v3393, 96
    %v3472 = vpop.permute.xlu0 %3471
    %3473 = vrot.lane.b32.xlu0 %v3394, 96
    %v3474 = vpop.permute.xlu0 %3473
    %v3491 = vmul.f32 %v2955, %v3444
    %v3492 = vmul.f32 %v2957, %v3446
    %v3493 = vmul.f32 %v2959, %v3448
    %v3494 = vmul.f32 %v2961, %v3450
    %v3495 = vmul.f32 %v2963, %v3452
    %v3496 = vmul.f32 %v2965, %v3454
    %v3497 = vmul.f32 %v2967, %v3456
    %v3498 = vmul.f32 %v2969, %v3458
    %v3499 = vmul.f32 %v2971, %v3460
    %v3500 = vmul.f32 %v2973, %v3462
    %v3501 = vmul.f32 %v2975, %v3464
    %v3502 = vmul.f32 %v2977, %v3466
    %v3503 = vmul.f32 %v2979, %v3468
    %v3504 = vmul.f32 %v2981, %v3470
    %v3505 = vmul.f32 %v2983, %v3472
    %v3506 = vmul.f32 %v2985, %v3474
    %v3507 = vadd.f32 %v3411, %v3491
    %v3508 = vadd.f32 %v3412, %v3492
    %v3509 = vadd.f32 %v3413, %v3493
    %v3510 = vadd.f32 %v3414, %v3494
    %v3511 = vadd.f32 %v3415, %v3495
    %v3512 = vadd.f32 %v3416, %v3496
    %v3513 = vadd.f32 %v3417, %v3497
    %v3514 = vadd.f32 %v3418, %v3498
    %v3515 = vadd.f32 %v3419, %v3499
    %v3516 = vadd.f32 %v3420, %v3500
    %v3517 = vadd.f32 %v3421, %v3501
    %v3518 = vadd.f32 %v3422, %v3502
    %v3519 = vadd.f32 %v3423, %v3503
    %v3520 = vadd.f32 %v3424, %v3504
    %v3521 = vadd.f32 %v3425, %v3505
    %v3522 = vadd.f32 %v3426, %v3506
    %3523 = vst.msk [vmem:[#allocation2] sm:$0xff] %vm280, %v3507
    %3524 = vst.msk [vmem:[#allocation2 + $0x8] sm:$0xff] %vm280, %v3508
    %3525 = vst.msk [vmem:[#allocation2 + $0x10] sm:$0xff] %vm280, %v3509
    %3526 = vst.msk [vmem:[#allocation2 + $0x18] sm:$0xff] %vm280, %v3510
    %3527 = vst.msk [vmem:[#allocation2 + $0x20] sm:$0xff] %vm280, %v3511
    %3528 = vst.msk [vmem:[#allocation2 + $0x28] sm:$0xff] %vm280, %v3512
    %3529 = vst.msk [vmem:[#allocation2 + $0x30] sm:$0xff] %vm280, %v3513
    %3530 = vst.msk [vmem:[#allocation2 + $0x38] sm:$0xff] %vm280, %v3514
    %3531 = vst.msk [vmem:[#allocation2 + $0x40] sm:$0xff] %vm280, %v3515
    %3532 = vst.msk [vmem:[#allocation2 + $0x48] sm:$0xff] %vm280, %v3516
    %3533 = vst.msk [vmem:[#allocation2 + $0x50] sm:$0xff] %vm280, %v3517
    %3534 = vst.msk [vmem:[#allocation2 + $0x58] sm:$0xff] %vm280, %v3518
    %3535 = vst.msk [vmem:[#allocation2 + $0x60] sm:$0xff] %vm280, %v3519
    %3536 = vst.msk [vmem:[#allocation2 + $0x68] sm:$0xff] %vm280, %v3520
    %3537 = vst.msk [vmem:[#allocation2 + $0x70] sm:$0xff] %vm280, %v3521
    %3538 = vst.msk [vmem:[#allocation2 + $0x78] sm:$0xff] %vm280, %v3522
    // Predicated region
    $region22: #{tpu_custom_call.1} parent=1 // pred_check
      _
    $region23: #{tpu_custom_call.1} parent=1 // pred_check_branch
      %3540 = sbr.rel (0) target = $region25
    $region24: #{tpu_custom_call.1} parent=1 // pred_region
      %s3542 = ssub.s32 2048, 2048
      %3543 = vsyncadd [#allocation3], %s3542
      %s3544 = sshll.u32 [#allocation2], 4
      %s3545 = int_to_ptr.vmem [resolvable:$true] %s3544
      %3550 = dma.vmem_to_hbm [thread:$0]  %s3545, 2048, %s5, [#allocation3], 128, 128, 8
    $region25: #{tpu_custom_call.1} parent=1 // pred_fallthru
      _
    // Predicated region
    $region26: #{tpu_custom_call.1} parent=1 // pred_check
      _
    $region27: #{tpu_custom_call.1} parent=1 // pred_check_branch
      %3552 = sbr.rel (0) target = $region29
    $region28: #{tpu_custom_call.1} parent=1 // pred_region
      %3553 = dma.done [#allocation3], 2048
    $region29: #{tpu_custom_call.1} parent=1 // pred_fallthru
      _
    %3554 = vsyncpa [#allocation3], 1

</llo_original>
